<compile_context>
chip_gen: v7x
topology: tpu7x:2x2x1
jax: 0.10.0
libtpu: 0.0.40
codegen_flags: <defaults>
</compile_context>

<pallas_src>
import jax
import jax.numpy as jnp
from jax.experimental import pallas as pl
from jax.experimental.pallas import tpu as pltpu


def attention_kernel(p_ref, af_ref, h_ref,
                     wp_ref, bp_ref, wh_ref, bh_ref, wa_ref, ba_ref,
                     out_ref):
    """One grid step = Bt batch elements.

    p_ref  : (Bt, S, H)  bf16   p_att_feats tile
    af_ref : (Bt, S, Df) bf16   att_feats tile (cast to f32 in-kernel)
    h_ref  : (Bt, H)     bf16   hidden states
    wp_ref : (H, H) bf16 / bp_ref : (1, H) f32    self.project
    wh_ref : (H, H) bf16 / bh_ref : (1, H) f32    self.h2att
    wa_ref : (1, H) f32  / ba_ref : (1, 1) f32    self.alpha_net (weight as row)
    out_ref: (Bt, Df)    f32
    """
    Bt, S, H = p_ref.shape

    # project(p_att_feats): one (Bt*S, H) @ (H, H) bf16 MXU matmul, f32 accum.
    # NOTE: the (Bt, S, H) -> (Bt*S, H) reshape is free when S % 8 == 0.
    p2 = p_ref[...].reshape(Bt * S, H)
    proj = jnp.dot(p2, wp_ref[...], preferred_element_type=jnp.float32)
    proj = proj + bp_ref[...]                                       # (Bt*S, H) f32

    # h2att(h): one (Bt, H) @ (H, H) bf16 matmul for the whole batch tile.
    att_h = jnp.dot(h_ref[...], wh_ref[...],
                    preferred_element_type=jnp.float32) + bh_ref[...]  # (Bt, H) f32

    # tanh in bf16 (native EUP bf16 on v6e/v7x) -- largest non-MXU op.
    pre = proj.reshape(Bt, S, H) + att_h[:, None, :]                # f32 add
    dot = jnp.tanh(pre.astype(jnp.bfloat16))                        # (Bt, S, H) bf16

    # alpha_net (out_features = 1): bf16 VPU multiply + f32 lane reduction.
    wa = wa_ref[...].astype(jnp.bfloat16).reshape(1, 1, H)
    alpha = jnp.sum((dot * wa).astype(jnp.float32), axis=-1) + ba_ref[0, 0]  # (Bt, S)

    # softmax over att_size (lane axis), f32, EUP approx reciprocal.
    m = jnp.max(alpha, axis=-1, keepdims=True)
    e = jnp.exp(alpha - m)
    denom = jnp.sum(e, axis=-1, keepdims=True)
    w = e * pl.reciprocal(denom, approx=True)                       # (Bt, S)
    # TODO(synk): att_masks hook goes here (w *= mask; w /= w.sum(-1, keepdims=True)).

    # bmm(weight.unsqueeze(1), att_feats): weighted sum over S -> (Bt, Df).
    af = af_ref[...].astype(jnp.float32)                            # cheap VPU cast
    att_res = jnp.sum(w[:, :, None] * af, axis=1)                   # (Bt, Df) f32
    out_ref[...] = att_res.astype(out_ref.dtype)


def _vmem_bytes_per_step(bt, S, Df, H):
    """Conservative per-grid-step VMEM estimate (double-buffered inputs/outputs
    plus the f32/bf16 intermediates the body materializes)."""
    bf16, f32 = 2, 4
    p_tile = bt * S * H * bf16
    af_tile = bt * S * Df * bf16
    h_tile = bt * H * bf16
    out_tile = bt * Df * f32
    weights = 2 * H * H * bf16 + 3 * H * f32 + f32
    dbuf = 2 * (p_tile + af_tile + h_tile + out_tile + weights)
    interm = bt * S * H * (2 * f32 + 2 * bf16)          # proj/pre f32 + tanh/prod bf16
    return dbuf + interm


def _plan_tiling(B, S, Df, H):
    """Generation-aware tile plan -> (Bt, Bpad, vmem_limit_bytes).

    Bt is always a multiple of 8 (block rule on the 2-D operands), never the
    whole large batch, capped by a per-generation VMEM budget, and chosen so
    the grid has >= 2 steps when B >= 16 (v7x megacore)."""
    try:
        vmem_cap = pltpu.get_tpu_info().vmem_capacity_bytes
    except Exception:  # no TPU info available -> assume the smallest (v7x) VMEM
        vmem_cap = 64 << 20
    if vmem_cap >= (96 << 20):          # v5e / v6e: 128 MiB VMEM
        row_target, vmem_limit = 2048, 64 << 20
    else:                               # v7x: 64 MiB VMEM
        row_target, vmem_limit = 1024, 36 << 20
    budget = int(0.7 * vmem_limit)

    bt = max(8, (row_target // max(S, 1)) // 8 * 8)      # ~row_target rows per step
    bt = min(bt, max(8, -(-B // 8) * 8))                 # don't over-pad small batches
    if B >= 16:                                          # keep >= 2 grid steps
        bt = min(bt, max(8, (B // 2) // 8 * 8))
    while bt > 8 and _vmem_bytes_per_step(bt, S, Df, H) > budget:
        bt -= 8
    bpad = -(-B // bt) * bt
    return bt, bpad, vmem_limit


def make_attention(att_feats, att_feats_p, params):
    """One-time setup for a decode loop.

    Casts the timestep-invariant tensors (att_feats, p_att_feats) and weights
    ONCE, pads the batch to the tile size, builds the pallas_call, and returns
    a jitted per-timestep closure  step(h) -> (B, Df).
    """
    B, S, Df = att_feats.shape
    H = att_feats_p.shape[-1]
    out_dtype = att_feats.dtype
    Bt, Bpad, vmem_limit = _plan_tiling(B, S, Df, H)

    def pad_b(x):
        if Bpad == B:
            return x
        return jnp.pad(x, [(0, Bpad - B)] + [(0, 0)] * (x.ndim - 1))

    # One-time HBM-side conversions: bf16 MXU feeds + bf16 att_feats DMA stream.
    p_bf = pad_b(att_feats_p.astype(jnp.bfloat16))       # (Bpad, S, H)
    af_bf = pad_b(att_feats.astype(jnp.bfloat16))        # (Bpad, S, Df)
    wp_bf = params["wp"].astype(jnp.bfloat16)
    wh_bf = params["wh"].astype(jnp.bfloat16)
    bp = params["bp"].astype(jnp.float32).reshape(1, H)
    bh = params["bh"].astype(jnp.float32).reshape(1, H)
    wa = params["wa"].astype(jnp.float32).reshape(1, H)  # (H,1) -> (1,H) row
    ba = params["ba"].astype(jnp.float32).reshape(1, 1)

    # TODO(synk): when the decoder loop structure allows, precompute
    # proj = p_att_feats @ wp + bp here (timestep-invariant) and feed it to a
    # matmul-free kernel variant; this removes the dominant MXU matmul + wp DMA
    # from every decode step.

    call = pl.pallas_call(
        attention_kernel,
        out_shape=jax.ShapeDtypeStruct((Bpad, Df), jnp.float32),
        grid_spec=pltpu.PrefetchScalarGridSpec(
            num_scalar_prefetch=0,
            grid=(Bpad // Bt,),
            in_specs=[
                pl.BlockSpec((Bt, S, H), lambda b: (b, 0, 0)),     # p_att_feats (bf16)
                pl.BlockSpec((Bt, S, Df), lambda b: (b, 0, 0)),    # att_feats (bf16)
                pl.BlockSpec((Bt, H), lambda b: (b, 0)),           # h (bf16)
                pl.BlockSpec((H, H), lambda b: (0, 0)),            # wp (bf16)
                pl.BlockSpec((1, H), lambda b: (0, 0)),            # bp
                pl.BlockSpec((H, H), lambda b: (0, 0)),            # wh (bf16)
                pl.BlockSpec((1, H), lambda b: (0, 0)),            # bh
                pl.BlockSpec((1, H), lambda b: (0, 0)),            # wa row
                pl.BlockSpec((1, 1), lambda b: (0, 0)),            # ba
            ],
            out_specs=pl.BlockSpec((Bt, Df), lambda b: (b, 0)),    # lane-dense output
        ),
        compiler_params=pltpu.CompilerParams(
            dimension_semantics=("parallel",),
            vmem_limit_bytes=vmem_limit),
    )

    @jax.jit
    def _step(h, p_bf, af_bf, wp_bf, bp, wh_bf, bh, wa, ba):
        h_bf = pad_b(h.astype(jnp.bfloat16))             # only per-step conversion
        out = call(p_bf, af_bf, h_bf, wp_bf, bp, wh_bf, bh, wa, ba)
        return out[:B].astype(out_dtype)

    def step(h):
        return _step(h, p_bf, af_bf, wp_bf, bp, wh_bf, bh, wa, ba)

    return step


def attention_forward(h, att_feats, p_att_feats, params):
    """One-shot convenience wrapper (prefer make_attention inside a decode loop)."""
    return make_attention(att_feats, p_att_feats, params)(h)


def attention_ref(h, att_feats, p_att_feats, params):
    """Pure-JAX f32 reference mirroring the PyTorch forward (att_masks=None)."""
    proj = p_att_feats @ params["wp"] + params["bp"]               # (B, S, H)
    att_h = h @ params["wh"] + params["bh"]                        # (B, H)
    dot = jnp.tanh(proj + att_h[:, None, :])                       # (B, S, H)
    logits = (dot @ params["wa"])[..., 0] + params["ba"][0, 0]     # (B, S)
    weight = jax.nn.softmax(logits, axis=1)                        # (B, S)
    return jnp.einsum("bs,bsd->bd", weight, att_feats)             # (B, Df)


if __name__ == "__main__":
    # Module constants: rnn_size = att_hid_size = 512
    H = 512       # att_hid_size / rnn_size
    B = 2         # batch
    S = 16        # att_size (spatial locations)
    Df = 128      # att_feats feature dim

    key = jax.random.PRNGKey(0)
    ks = jax.random.split(key, 9)
    scale = 1.0 / jnp.sqrt(jnp.float32(H))

    # Deterministic parameter init (shapes from nn.Linear defs in __init__).
    params = {
        "wp": jax.random.normal(ks[0], (H, H), jnp.float32) * scale,  # project.weight^T
        "bp": jax.random.normal(ks[1], (1, H), jnp.float32) * scale,  # project.bias
        "wh": jax.random.normal(ks[2], (H, H), jnp.float32) * scale,  # h2att.weight^T
        "bh": jax.random.normal(ks[3], (1, H), jnp.float32) * scale,  # h2att.bias
        "wa": jax.random.normal(ks[4], (H, 1), jnp.float32) * scale,  # alpha_net.weight^T
        "ba": jax.random.normal(ks[5], (1, 1), jnp.float32) * scale,  # alpha_net.bias
    }

    h = jax.random.normal(ks[6], (B, H), jnp.float32)
    att_feats = jax.random.normal(ks[7], (B, S, Df), jnp.float32)
    p_att_feats = jax.random.normal(ks[8], (B, S, H), jnp.float32)

    # TODO(synk): att_masks path (renormalized masked softmax) not implemented;
    # the module's default att_masks=None path is reproduced exactly.

    # One-time setup (casts/pads timestep-invariant tensors), then a per-step call.
    step = make_attention(att_feats, p_att_feats, params)
    out = jax.block_until_ready(step(h))

    ref = attention_ref(h, att_feats, p_att_feats, params)
    assert out.shape == (B, Df)
    # bf16 MXU / tanh / att_feats with f32 accumulation -> loosened tolerance.
    max_diff = float(jnp.max(jnp.abs(out - ref)))
    assert jnp.allclose(out, ref, atol=5e-2, rtol=5e-2), f"max diff {max_diff}"

    print("KERNEL_OK")
</pallas_src>

<mosaic_0001>
module attributes {stable_mosaic.version = 11 : i64} {
  func.func @attention_kernel(%arg0: i32, %arg1: memref<8x16x512xbf16, #tpu.memory_space<vmem>>, %arg2: memref<8x16x128xbf16, #tpu.memory_space<vmem>>, %arg3: memref<8x512xbf16, #tpu.memory_space<vmem>>, %arg4: memref<512x512xbf16, #tpu.memory_space<vmem>>, %arg5: memref<1x512xf32, #tpu.memory_space<vmem>>, %arg6: memref<512x512xbf16, #tpu.memory_space<vmem>>, %arg7: memref<1x512xf32, #tpu.memory_space<vmem>>, %arg8: memref<1x512xf32, #tpu.memory_space<vmem>>, %arg9: memref<1x1xf32, #tpu.memory_space<vmem>>, %arg10: memref<8x128xf32, #tpu.memory_space<vmem>>) attributes {dimension_semantics = [#tpu.dimension_semantics<parallel>], iteration_bounds = array<i64: 1>, scalar_prefetch = 0 : i64, scratch_operands = 0 : i64, tpu.core_type = #tpu.core_type<tc>, window_params = [{transform_indices = @transform_0, window_bounds = array<i64: 8, 16, 512>}, {transform_indices = @transform_1, window_bounds = array<i64: 8, 16, 128>}, {transform_indices = @transform_2, window_bounds = array<i64: 8, 512>}, {pipeline_mode = #tpu.pipeline_mode<synchronous>, transform_indices = @transform_3, window_bounds = array<i64: 512, 512>}, {pipeline_mode = #tpu.pipeline_mode<synchronous>, transform_indices = @transform_4, window_bounds = array<i64: 1, 512>}, {pipeline_mode = #tpu.pipeline_mode<synchronous>, transform_indices = @transform_5, window_bounds = array<i64: 512, 512>}, {pipeline_mode = #tpu.pipeline_mode<synchronous>, transform_indices = @transform_6, window_bounds = array<i64: 1, 512>}, {pipeline_mode = #tpu.pipeline_mode<synchronous>, transform_indices = @transform_7, window_bounds = array<i64: 1, 512>}, {pipeline_mode = #tpu.pipeline_mode<synchronous>, transform_indices = @transform_8, window_bounds = array<i64: 1, 1>}, {transform_indices = @transform_9, window_bounds = array<i64: 8, 128>}]} {
    %c0 = arith.constant 0 : index
    %c0_0 = arith.constant 0 : index
    %c0_1 = arith.constant 0 : index
    %0 = vector.load %arg1[%c0, %c0_0, %c0_1] : memref<8x16x512xbf16, #tpu.memory_space<vmem>>, vector<8x16x512xbf16>
    %1 = vector.shape_cast %0 : vector<8x16x512xbf16> to vector<128x512xbf16>
    %c0_2 = arith.constant 0 : index
    %c0_3 = arith.constant 0 : index
    %2 = vector.load %arg4[%c0_2, %c0_3] : memref<512x512xbf16, #tpu.memory_space<vmem>>, vector<512x512xbf16>
    %cst = arith.constant dense<0.000000e+00> : vector<128x512xf32>
    %3 = tpu.matmul %1, %2, %cst {dimension_numbers = #tpu.dot_dimension_numbers<[1], [0], [0], [1], [0, 0, 1, 1], [], []>} : vector<128x512xbf16>, vector<512x512xbf16>, vector<128x512xf32> -> vector<128x512xf32>
    %c0_4 = arith.constant 0 : index
    %c0_5 = arith.constant 0 : index
    %4 = vector.load %arg5[%c0_4, %c0_5] : memref<1x512xf32, #tpu.memory_space<vmem>>, vector<1x512xf32>
    %5 = vector.broadcast %4 : vector<1x512xf32> to vector<128x512xf32>
    %6 = arith.addf %3, %5 : vector<128x512xf32>
    %c0_6 = arith.constant 0 : index
    %c0_7 = arith.constant 0 : index
    %7 = vector.load %arg3[%c0_6, %c0_7] : memref<8x512xbf16, #tpu.memory_space<vmem>>, vector<8x512xbf16>
    %c0_8 = arith.constant 0 : index
    %c0_9 = arith.constant 0 : index
    %8 = vector.load %arg6[%c0_8, %c0_9] : memref<512x512xbf16, #tpu.memory_space<vmem>>, vector<512x512xbf16>
    %cst_10 = arith.constant dense<0.000000e+00> : vector<8x512xf32>
    %9 = tpu.matmul %7, %8, %cst_10 {dimension_numbers = #tpu.dot_dimension_numbers<[1], [0], [0], [1], [0, 0, 1, 1], [], []>} : vector<8x512xbf16>, vector<512x512xbf16>, vector<8x512xf32> -> vector<8x512xf32>
    %c0_11 = arith.constant 0 : index
    %c0_12 = arith.constant 0 : index
    %10 = vector.load %arg7[%c0_11, %c0_12] : memref<1x512xf32, #tpu.memory_space<vmem>>, vector<1x512xf32>
    %11 = vector.broadcast %10 : vector<1x512xf32> to vector<8x512xf32>
    %12 = arith.addf %9, %11 : vector<8x512xf32>
    %13 = vector.shape_cast %6 : vector<128x512xf32> to vector<8x16x512xf32>
    %14 = vector.shape_cast %12 : vector<8x512xf32> to vector<8x1x512xf32>
    %15 = vector.broadcast %14 : vector<8x1x512xf32> to vector<8x16x512xf32>
    %16 = arith.addf %13, %15 : vector<8x16x512xf32>
    %17 = arith.truncf %16 : vector<8x16x512xf32> to vector<8x16x512xbf16>
    %18 = math.tanh %17 : vector<8x16x512xbf16>
    %c0_13 = arith.constant 0 : index
    %c0_14 = arith.constant 0 : index
    %19 = vector.load %arg8[%c0_13, %c0_14] : memref<1x512xf32, #tpu.memory_space<vmem>>, vector<1x512xf32>
    %20 = arith.truncf %19 : vector<1x512xf32> to vector<1x512xbf16>
    %21 = vector.shape_cast %20 : vector<1x512xbf16> to vector<1x1x512xbf16>
    %22 = vector.broadcast %21 : vector<1x1x512xbf16> to vector<8x16x512xbf16>
    %23 = arith.mulf %18, %22 : vector<8x16x512xbf16>
    %24 = arith.extf %23 : vector<8x16x512xbf16> to vector<8x16x512xf32>
    %cst_15 = arith.constant dense<0.000000e+00> : vector<8x16xf32>
    %25 = vector.multi_reduction <add>, %24, %cst_15 [2] : vector<8x16x512xf32> to vector<8x16xf32>
    %c0_16 = arith.constant 0 : index
    %c0_17 = arith.constant 0 : index
    %26 = vector.load %arg9[%c0_16, %c0_17] : memref<1x1xf32, #tpu.memory_space<vmem>>, vector<1x1xf32>
    %27 = vector.extract %26[0, 0] : f32 from vector<1x1xf32>
    %28 = vector.broadcast %27 : f32 to vector<8x16xf32>
    %29 = arith.addf %25, %28 : vector<8x16xf32>
    %cst_18 = arith.constant dense<0xFF800000> : vector<8xf32>
    %30 = vector.multi_reduction <maximumf>, %29, %cst_18 [1] : vector<8x16xf32> to vector<8xf32>
    %31 = vector.shape_cast %30 : vector<8xf32> to vector<8x1xf32>
    %32 = vector.broadcast %31 : vector<8x1xf32> to vector<8x16xf32>
    %33 = arith.subf %29, %32 : vector<8x16xf32>
    %34 = math.exp %33 : vector<8x16xf32>
    %cst_19 = arith.constant dense<0.000000e+00> : vector<8xf32>
    %35 = vector.multi_reduction <add>, %34, %cst_19 [1] : vector<8x16xf32> to vector<8xf32>
    %36 = vector.shape_cast %35 : vector<8xf32> to vector<8x1xf32>
    %37 = tpu.reciprocal %36 {approx = true} : vector<8x1xf32> -> vector<8x1xf32>
    %38 = vector.broadcast %37 : vector<8x1xf32> to vector<8x16xf32>
    %39 = arith.mulf %34, %38 : vector<8x16xf32>
    %c0_20 = arith.constant 0 : index
    %c0_21 = arith.constant 0 : index
    %c0_22 = arith.constant 0 : index
    %40 = vector.load %arg2[%c0_20, %c0_21, %c0_22] : memref<8x16x128xbf16, #tpu.memory_space<vmem>>, vector<8x16x128xbf16>
    %41 = arith.extf %40 : vector<8x16x128xbf16> to vector<8x16x128xf32>
    %42 = vector.shape_cast %39 : vector<8x16xf32> to vector<8x16x1xf32>
    %43 = vector.broadcast %42 : vector<8x16x1xf32> to vector<8x16x128xf32>
    %44 = arith.mulf %43, %41 : vector<8x16x128xf32>
    %cst_23 = arith.constant dense<0.000000e+00> : vector<8x128xf32>
    %45 = vector.multi_reduction <add>, %44, %cst_23 [1] : vector<8x16x128xf32> to vector<8x128xf32>
    %c0_24 = arith.constant 0 : index
    %c0_25 = arith.constant 0 : index
    %46 = vector.load %arg10[%c0_24, %c0_25] : memref<8x128xf32, #tpu.memory_space<vmem>>, vector<8x128xf32>
    tpu.vector_store %arg10[%c0_24, %c0_25], %45 {strides = array<i32>} : memref<8x128xf32, #tpu.memory_space<vmem>>, vector<8x128xf32>,
    return
  }
  func.func @transform_0(%arg0: i32) -> (i32, i32, i32) {
    %c0_i32 = arith.constant 0 : i32
    %c0_i32_0 = arith.constant 0 : i32
    %c0_i32_1 = arith.constant 0 : i32
    return %arg0, %c0_i32, %c0_i32_0 : i32, i32, i32
  }
  func.func @transform_1(%arg0: i32) -> (i32, i32, i32) {
    %c0_i32 = arith.constant 0 : i32
    %c0_i32_0 = arith.constant 0 : i32
    %c0_i32_1 = arith.constant 0 : i32
    return %arg0, %c0_i32, %c0_i32_0 : i32, i32, i32
  }
  func.func @transform_2(%arg0: i32) -> (i32, i32) {
    %c0_i32 = arith.constant 0 : i32
    %c0_i32_0 = arith.constant 0 : i32
    return %arg0, %c0_i32 : i32, i32
  }
  func.func @transform_3(%arg0: i32) -> (i32, i32) {
    %c0_i32 = arith.constant 0 : i32
    %c0_i32_0 = arith.constant 0 : i32
    %c0_i32_1 = arith.constant 0 : i32
    return %c0_i32, %c0_i32_0 : i32, i32
  }
  func.func @transform_4(%arg0: i32) -> (i32, i32) {
    %c0_i32 = arith.constant 0 : i32
    %c0_i32_0 = arith.constant 0 : i32
    %c0_i32_1 = arith.constant 0 : i32
    return %c0_i32, %c0_i32_0 : i32, i32
  }
  func.func @transform_5(%arg0: i32) -> (i32, i32) {
    %c0_i32 = arith.constant 0 : i32
    %c0_i32_0 = arith.constant 0 : i32
    %c0_i32_1 = arith.constant 0 : i32
    return %c0_i32, %c0_i32_0 : i32, i32
  }
  func.func @transform_6(%arg0: i32) -> (i32, i32) {
    %c0_i32 = arith.constant 0 : i32
    %c0_i32_0 = arith.constant 0 : i32
    %c0_i32_1 = arith.constant 0 : i32
    return %c0_i32, %c0_i32_0 : i32, i32
  }
  func.func @transform_7(%arg0: i32) -> (i32, i32) {
    %c0_i32 = arith.constant 0 : i32
    %c0_i32_0 = arith.constant 0 : i32
    %c0_i32_1 = arith.constant 0 : i32
    return %c0_i32, %c0_i32_0 : i32, i32
  }
  func.func @transform_8(%arg0: i32) -> (i32, i32) {
    %c0_i32 = arith.constant 0 : i32
    %c0_i32_0 = arith.constant 0 : i32
    %c0_i32_1 = arith.constant 0 : i32
    return %c0_i32, %c0_i32_0 : i32, i32
  }
  func.func @transform_9(%arg0: i32) -> (i32, i32) {
    %c0_i32 = arith.constant 0 : i32
    %c0_i32_0 = arith.constant 0 : i32
    return %arg0, %c0_i32 : i32, i32
  }
}

</mosaic_0001>

<llo_original>
// kernel: _step.1
$region0: #{_step.1}
  #allocation0 [shape = 'u32[]', space=smem, size = 0x4, offset = 0x4, fixed_abs, tag = 'smem constant byte address 0x4 - core index']
  #allocation1 [shape = 'u32[144,128]{1,0:T(1,128)}', space=vmem, size = 0x12000, scoped, tag = 'internal scratch']
  #allocation2 [shape = 'f32[1,1]{1,0:T(1,128)S(1)}', space=vmem, size = 0x200, scoped, tag = 'scoped memory for _step.1']
  %s0 = inlined_call_operand.hbm [shape: bf16[8,16,512], index: 0, kind: input, shape index: {}]
  %s1 = inlined_call_operand.hbm [shape: bf16[8,16,128], index: 1, kind: input, shape index: {}]
  %s2 = inlined_call_operand.vmem [shape: bf16[8,512], index: 2, kind: input, shape index: {}]
  %s3 = inlined_call_operand.hbm [shape: bf16[512,512], index: 3, kind: input, shape index: {}]
  %s4 = inlined_call_operand.vmem [shape: f32[1,512], index: 4, kind: input, shape index: {}]
  %s5 = inlined_call_operand.hbm [shape: bf16[512,512], index: 5, kind: input, shape index: {}]
  %s6 = inlined_call_operand.vmem [shape: f32[1,512], index: 6, kind: input, shape index: {}]
  %s7 = inlined_call_operand.vmem [shape: f32[1,512], index: 7, kind: input, shape index: {}]
  %s8 = inlined_call_operand.<no memory space> [shape: f32[1,1], index: 8, kind: input, shape index: {}]
  %s9 = inlined_call_operand.vmem [shape: f32[8,128], index: 9, kind: output, shape index: {}]
  %s10 = sld [smem:[#allocation0]]
  $region62: #{_step.1} parent=0
    _
  %s12 = ssub.s32 1, %s10
  %s13 = scalar_select 0, %s12, %s10
  %v14 = vstv %s8
  %15 = vst [vmem:[#allocation2] sm:$0x1] %v14
  $region1: #{_step.1} parent=0
    #allocation3 [shape = 'u8[131072]{0}', space=vmem, size = 0x20000, scoped, tag = 'input window, operand 0, single buffered']
    #allocation4 [shape = 's32[1]{0}', space=sflag, size = 0x4, scoped, tag = 'scoped memory for _step.1']
    #allocation5 [shape = 'u8[32768]{0}', space=vmem, size = 0x8000, scoped, tag = 'input window, operand 1, single buffered']
    #allocation6 [shape = 's32[1]{0}', space=sflag, size = 0x4, scoped, tag = 'scoped memory for _step.1']
    #allocation7 [shape = 'u8[524288]{0}', space=vmem, size = 0x80000, scoped, tag = 'input window, operand 3, single buffered']
    #allocation8 [shape = 'u8[524288]{0}', space=vmem, size = 0x80000, scoped, tag = 'input window, operand 5, single buffered']
    #allocation9 [shape = 's32[1]{0}', space=sflag, size = 0x4, scoped, tag = 'scoped memory for _step.1']
    %16 = vsyncpa [#allocation4], 0
    %17 = vsyncpa [#allocation6], 0
    %18 = vsyncpa [#allocation9], 0
    // Predicated region
    $region2: #{_step.1} parent=1 // pred_check
      _
    $region3: #{_step.1} parent=1 // pred_check_branch
      %20 = sbr.rel (0) target = $region5
    $region4: #{_step.1} parent=1 // pred_region
      %s22 = ssub.s32 4096, 4096
      %23 = vsyncadd [#allocation4], %s22
      %s24 = sshll.u32 [#allocation3], 4
      %s25 = int_to_ptr.vmem [resolvable:$true] %s24
      %30 = dma.hbm_to_vmem [thread:$0]  %s0, 4096, %s25, [#allocation4], 256, 256, 16
    $region5: #{_step.1} parent=1 // pred_fallthru
      _
    // Predicated region
    $region6: #{_step.1} parent=1 // pred_check
      _
    $region7: #{_step.1} parent=1 // pred_check_branch
      %32 = sbr.rel (0) target = $region9
    $region8: #{_step.1} parent=1 // pred_region
      %s34 = ssub.s32 1024, 1024
      %35 = vsyncadd [#allocation6], %s34
      %s36 = sshll.u32 [#allocation5], 4
      %s37 = int_to_ptr.vmem [resolvable:$true] %s36
      %42 = dma.hbm_to_vmem [thread:$0]  %s1, 1024, %s37, [#allocation6], 64, 64, 4
    $region9: #{_step.1} parent=1 // pred_fallthru
      _
    // Predicated region
    $region10: #{_step.1} parent=1 // pred_check
      _
    $region11: #{_step.1} parent=1 // pred_check_branch
      %44 = sbr.rel (0) target = $region13
    $region12: #{_step.1} parent=1 // pred_region
      _
    $region13: #{_step.1} parent=1 // pred_fallthru
      _
    // Predicated region
    $region14: #{_step.1} parent=1 // pred_check
      _
    $region15: #{_step.1} parent=1 // pred_check_branch
      %46 = sbr.rel (0) target = $region17
    $region16: #{_step.1} parent=1 // pred_region
      %s48 = ssub.s32 16384, 16384
      %49 = vsyncadd [#allocation6], %s48
      %s50 = sshll.u32 [#allocation7], 4
      %s51 = int_to_ptr.vmem [resolvable:$true] %s50
      %56 = dma.hbm_to_vmem [thread:$0]  %s3, 16384, %s51, [#allocation6], 256, 256, 16
    $region17: #{_step.1} parent=1 // pred_fallthru
      _
    // Predicated region
    $region18: #{_step.1} parent=1 // pred_check
      _
    $region19: #{_step.1} parent=1 // pred_check_branch
      %58 = sbr.rel (0) target = $region21
    $region20: #{_step.1} parent=1 // pred_region
      _
    $region21: #{_step.1} parent=1 // pred_fallthru
      _
    // Predicated region
    $region22: #{_step.1} parent=1 // pred_check
      _
    $region23: #{_step.1} parent=1 // pred_check_branch
      %60 = sbr.rel (0) target = $region25
    $region24: #{_step.1} parent=1 // pred_region
      %s62 = ssub.s32 16384, 16384
      %63 = vsyncadd [#allocation9], %s62
      %s64 = sshll.u32 [#allocation8], 4
      %s65 = int_to_ptr.vmem [resolvable:$true] %s64
      %70 = dma.hbm_to_vmem [thread:$0]  %s5, 16384, %s65, [#allocation9], 256, 256, 16
    $region25: #{_step.1} parent=1 // pred_fallthru
      _
    // Predicated region
    $region26: #{_step.1} parent=1 // pred_check
      _
    $region27: #{_step.1} parent=1 // pred_check_branch
      %72 = sbr.rel (0) target = $region29
    $region28: #{_step.1} parent=1 // pred_region
      _
    $region29: #{_step.1} parent=1 // pred_fallthru
      _
    // Predicated region
    $region30: #{_step.1} parent=1 // pred_check
      _
    $region31: #{_step.1} parent=1 // pred_check_branch
      %74 = sbr.rel (0) target = $region33
    $region32: #{_step.1} parent=1 // pred_region
      _
    $region33: #{_step.1} parent=1 // pred_fallthru
      _
    // Predicated region
    $region34: #{_step.1} parent=1 // pred_check
      _
    $region35: #{_step.1} parent=1 // pred_check_branch
      %76 = sbr.rel (0) target = $region37
    $region36: #{_step.1} parent=1 // pred_region
      _
    $region37: #{_step.1} parent=1 // pred_fallthru
      _
    // Predicated region
    $region38: #{_step.1} parent=1 // pred_check
      _
    $region39: #{_step.1} parent=1 // pred_check_branch
      %78 = sbr.rel (0) target = $region41
    $region40: #{_step.1} parent=1 // pred_region
      %79 = dma.done [#allocation4], 4096
    $region41: #{_step.1} parent=1 // pred_fallthru
      _
    // Predicated region
    $region42: #{_step.1} parent=1 // pred_check
      _
    $region43: #{_step.1} parent=1 // pred_check_branch
      %81 = sbr.rel (0) target = $region45
    $region44: #{_step.1} parent=1 // pred_region
      %82 = dma.done [#allocation6], 1024
    $region45: #{_step.1} parent=1 // pred_fallthru
      _
    // Predicated region
    $region46: #{_step.1} parent=1 // pred_check
      _
    $region47: #{_step.1} parent=1 // pred_check_branch
      %84 = sbr.rel (0) target = $region49
    $region48: #{_step.1} parent=1 // pred_region
      %85 = dma.done [#allocation6], 16384
    $region49: #{_step.1} parent=1 // pred_fallthru
      _
    // Predicated region
    $region50: #{_step.1} parent=1 // pred_check
      _
    $region51: #{_step.1} parent=1 // pred_check_branch
      %87 = sbr.rel (0) target = $region53
    $region52: #{_step.1} parent=1 // pred_region
      %88 = dma.done [#allocation9], 16384
    $region53: #{_step.1} parent=1 // pred_fallthru
      _
    %v89 = vld [vmem:[#allocation3] sm:$0xff]
    %v90 = vld [vmem:[#allocation3 + $0x8] sm:$0xff]
    %v91 = vld [vmem:[#allocation3 + $0x10] sm:$0xff]
    %v92 = vld [vmem:[#allocation3 + $0x18] sm:$0xff]
    %v93 = vld [vmem:[#allocation3 + $0x20] sm:$0xff]
    %v94 = vld [vmem:[#allocation3 + $0x28] sm:$0xff]
    %v95 = vld [vmem:[#allocation3 + $0x30] sm:$0xff]
    %v96 = vld [vmem:[#allocation3 + $0x38] sm:$0xff]
    %v97 = vld [vmem:[#allocation3 + $0x40] sm:$0xff]
    %v98 = vld [vmem:[#allocation3 + $0x48] sm:$0xff]
    %v99 = vld [vmem:[#allocation3 + $0x50] sm:$0xff]
    %v100 = vld [vmem:[#allocation3 + $0x58] sm:$0xff]
    %v101 = vld [vmem:[#allocation3 + $0x60] sm:$0xff]
    %v102 = vld [vmem:[#allocation3 + $0x68] sm:$0xff]
    %v103 = vld [vmem:[#allocation3 + $0x70] sm:$0xff]
    %v104 = vld [vmem:[#allocation3 + $0x78] sm:$0xff]
    %v105 = vld [vmem:[#allocation3 + $0x80] sm:$0xff]
    %v106 = vld [vmem:[#allocation3 + $0x88] sm:$0xff]
    %v107 = vld [vmem:[#allocation3 + $0x90] sm:$0xff]
    %v108 = vld [vmem:[#allocation3 + $0x98] sm:$0xff]
    %v109 = vld [vmem:[#allocation3 + $0xa0] sm:$0xff]
    %v110 = vld [vmem:[#allocation3 + $0xa8] sm:$0xff]
    %v111 = vld [vmem:[#allocation3 + $0xb0] sm:$0xff]
    %v112 = vld [vmem:[#allocation3 + $0xb8] sm:$0xff]
    %v113 = vld [vmem:[#allocation3 + $0xc0] sm:$0xff]
    %v114 = vld [vmem:[#allocation3 + $0xc8] sm:$0xff]
    %v115 = vld [vmem:[#allocation3 + $0xd0] sm:$0xff]
    %v116 = vld [vmem:[#allocation3 + $0xd8] sm:$0xff]
    %v117 = vld [vmem:[#allocation3 + $0xe0] sm:$0xff]
    %v118 = vld [vmem:[#allocation3 + $0xe8] sm:$0xff]
    %v119 = vld [vmem:[#allocation3 + $0xf0] sm:$0xff]
    %v120 = vld [vmem:[#allocation3 + $0xf8] sm:$0xff]
    %v121 = vld [vmem:[#allocation7] sm:$0xff]
    %v122 = vld [vmem:[#allocation7 + $0x8] sm:$0xff]
    %v123 = vld [vmem:[#allocation7 + $0x10] sm:$0xff]
    %v124 = vld [vmem:[#allocation7 + $0x18] sm:$0xff]
    %v125 = vld [vmem:[#allocation7 + $0x20] sm:$0xff]
    %v126 = vld [vmem:[#allocation7 + $0x28] sm:$0xff]
    %v127 = vld [vmem:[#allocation7 + $0x30] sm:$0xff]
    %v128 = vld [vmem:[#allocation7 + $0x38] sm:$0xff]
    %v129 = vld [vmem:[#allocation7 + $0x40] sm:$0xff]
    %v130 = vld [vmem:[#allocation7 + $0x48] sm:$0xff]
    %v131 = vld [vmem:[#allocation7 + $0x50] sm:$0xff]
    %v132 = vld [vmem:[#allocation7 + $0x58] sm:$0xff]
    %v133 = vld [vmem:[#allocation7 + $0x60] sm:$0xff]
    %v134 = vld [vmem:[#allocation7 + $0x68] sm:$0xff]
    %v135 = vld [vmem:[#allocation7 + $0x70] sm:$0xff]
    %v136 = vld [vmem:[#allocation7 + $0x78] sm:$0xff]
    %v137 = vld [vmem:[#allocation7 + $0x80] sm:$0xff]
    %v138 = vld [vmem:[#allocation7 + $0x88] sm:$0xff]
    %v139 = vld [vmem:[#allocation7 + $0x90] sm:$0xff]
    %v140 = vld [vmem:[#allocation7 + $0x98] sm:$0xff]
    %v141 = vld [vmem:[#allocation7 + $0xa0] sm:$0xff]
    %v142 = vld [vmem:[#allocation7 + $0xa8] sm:$0xff]
    %v143 = vld [vmem:[#allocation7 + $0xb0] sm:$0xff]
    %v144 = vld [vmem:[#allocation7 + $0xb8] sm:$0xff]
    %v145 = vld [vmem:[#allocation7 + $0xc0] sm:$0xff]
    %v146 = vld [vmem:[#allocation7 + $0xc8] sm:$0xff]
    %v147 = vld [vmem:[#allocation7 + $0xd0] sm:$0xff]
    %v148 = vld [vmem:[#allocation7 + $0xd8] sm:$0xff]
    %v149 = vld [vmem:[#allocation7 + $0xe0] sm:$0xff]
    %v150 = vld [vmem:[#allocation7 + $0xe8] sm:$0xff]
    %v151 = vld [vmem:[#allocation7 + $0xf0] sm:$0xff]
    %v152 = vld [vmem:[#allocation7 + $0xf8] sm:$0xff]
    %v153 = vld [vmem:[#allocation7 + $0x100] sm:$0xff]
    %v154 = vld [vmem:[#allocation7 + $0x108] sm:$0xff]
    %v155 = vld [vmem:[#allocation7 + $0x110] sm:$0xff]
    %v156 = vld [vmem:[#allocation7 + $0x118] sm:$0xff]
    %v157 = vld [vmem:[#allocation7 + $0x120] sm:$0xff]
    %v158 = vld [vmem:[#allocation7 + $0x128] sm:$0xff]
    %v159 = vld [vmem:[#allocation7 + $0x130] sm:$0xff]
    %v160 = vld [vmem:[#allocation7 + $0x138] sm:$0xff]
    %v161 = vld [vmem:[#allocation7 + $0x140] sm:$0xff]
    %v162 = vld [vmem:[#allocation7 + $0x148] sm:$0xff]
    %v163 = vld [vmem:[#allocation7 + $0x150] sm:$0xff]
    %v164 = vld [vmem:[#allocation7 + $0x158] sm:$0xff]
    %v165 = vld [vmem:[#allocation7 + $0x160] sm:$0xff]
    %v166 = vld [vmem:[#allocation7 + $0x168] sm:$0xff]
    %v167 = vld [vmem:[#allocation7 + $0x170] sm:$0xff]
    %v168 = vld [vmem:[#allocation7 + $0x178] sm:$0xff]
    %v169 = vld [vmem:[#allocation7 + $0x180] sm:$0xff]
    %v170 = vld [vmem:[#allocation7 + $0x188] sm:$0xff]
    %v171 = vld [vmem:[#allocation7 + $0x190] sm:$0xff]
    %v172 = vld [vmem:[#allocation7 + $0x198] sm:$0xff]
    %v173 = vld [vmem:[#allocation7 + $0x1a0] sm:$0xff]
    %v174 = vld [vmem:[#allocation7 + $0x1a8] sm:$0xff]
    %v175 = vld [vmem:[#allocation7 + $0x1b0] sm:$0xff]
    %v176 = vld [vmem:[#allocation7 + $0x1b8] sm:$0xff]
    %v177 = vld [vmem:[#allocation7 + $0x1c0] sm:$0xff]
    %v178 = vld [vmem:[#allocation7 + $0x1c8] sm:$0xff]
    %v179 = vld [vmem:[#allocation7 + $0x1d0] sm:$0xff]
    %v180 = vld [vmem:[#allocation7 + $0x1d8] sm:$0xff]
    %v181 = vld [vmem:[#allocation7 + $0x1e0] sm:$0xff]
    %v182 = vld [vmem:[#allocation7 + $0x1e8] sm:$0xff]
    %v183 = vld [vmem:[#allocation7 + $0x1f0] sm:$0xff]
    %v184 = vld [vmem:[#allocation7 + $0x1f8] sm:$0xff]
    %v185 = vld [vmem:[#allocation7 + $0x200] sm:$0xff]
    %v186 = vld [vmem:[#allocation7 + $0x208] sm:$0xff]
    %v187 = vld [vmem:[#allocation7 + $0x210] sm:$0xff]
    %v188 = vld [vmem:[#allocation7 + $0x218] sm:$0xff]
    %v189 = vld [vmem:[#allocation7 + $0x220] sm:$0xff]
    %v190 = vld [vmem:[#allocation7 + $0x228] sm:$0xff]
    %v191 = vld [vmem:[#allocation7 + $0x230] sm:$0xff]
    %v192 = vld [vmem:[#allocation7 + $0x238] sm:$0xff]
    %v193 = vld [vmem:[#allocation7 + $0x240] sm:$0xff]
    %v194 = vld [vmem:[#allocation7 + $0x248] sm:$0xff]
    %v195 = vld [vmem:[#allocation7 + $0x250] sm:$0xff]
    %v196 = vld [vmem:[#allocation7 + $0x258] sm:$0xff]
    %v197 = vld [vmem:[#allocation7 + $0x260] sm:$0xff]
    %v198 = vld [vmem:[#allocation7 + $0x268] sm:$0xff]
    %v199 = vld [vmem:[#allocation7 + $0x270] sm:$0xff]
    %v200 = vld [vmem:[#allocation7 + $0x278] sm:$0xff]
    %v201 = vld [vmem:[#allocation7 + $0x280] sm:$0xff]
    %v202 = vld [vmem:[#allocation7 + $0x288] sm:$0xff]
    %v203 = vld [vmem:[#allocation7 + $0x290] sm:$0xff]
    %v204 = vld [vmem:[#allocation7 + $0x298] sm:$0xff]
    %v205 = vld [vmem:[#allocation7 + $0x2a0] sm:$0xff]
    %v206 = vld [vmem:[#allocation7 + $0x2a8] sm:$0xff]
    %v207 = vld [vmem:[#allocation7 + $0x2b0] sm:$0xff]
    %v208 = vld [vmem:[#allocation7 + $0x2b8] sm:$0xff]
    %v209 = vld [vmem:[#allocation7 + $0x2c0] sm:$0xff]
    %v210 = vld [vmem:[#allocation7 + $0x2c8] sm:$0xff]
    %v211 = vld [vmem:[#allocation7 + $0x2d0] sm:$0xff]
    %v212 = vld [vmem:[#allocation7 + $0x2d8] sm:$0xff]
    %v213 = vld [vmem:[#allocation7 + $0x2e0] sm:$0xff]
    %v214 = vld [vmem:[#allocation7 + $0x2e8] sm:$0xff]
    %v215 = vld [vmem:[#allocation7 + $0x2f0] sm:$0xff]
    %v216 = vld [vmem:[#allocation7 + $0x2f8] sm:$0xff]
    %v217 = vld [vmem:[#allocation7 + $0x300] sm:$0xff]
    %v218 = vld [vmem:[#allocation7 + $0x308] sm:$0xff]
    %v219 = vld [vmem:[#allocation7 + $0x310] sm:$0xff]
    %v220 = vld [vmem:[#allocation7 + $0x318] sm:$0xff]
    %v221 = vld [vmem:[#allocation7 + $0x320] sm:$0xff]
    %v222 = vld [vmem:[#allocation7 + $0x328] sm:$0xff]
    %v223 = vld [vmem:[#allocation7 + $0x330] sm:$0xff]
    %v224 = vld [vmem:[#allocation7 + $0x338] sm:$0xff]
    %v225 = vld [vmem:[#allocation7 + $0x340] sm:$0xff]
    %v226 = vld [vmem:[#allocation7 + $0x348] sm:$0xff]
    %v227 = vld [vmem:[#allocation7 + $0x350] sm:$0xff]
    %v228 = vld [vmem:[#allocation7 + $0x358] sm:$0xff]
    %v229 = vld [vmem:[#allocation7 + $0x360] sm:$0xff]
    %v230 = vld [vmem:[#allocation7 + $0x368] sm:$0xff]
    %v231 = vld [vmem:[#allocation7 + $0x370] sm:$0xff]
    %v232 = vld [vmem:[#allocation7 + $0x378] sm:$0xff]
    %v233 = vld [vmem:[#allocation7 + $0x380] sm:$0xff]
    %v234 = vld [vmem:[#allocation7 + $0x388] sm:$0xff]
    %v235 = vld [vmem:[#allocation7 + $0x390] sm:$0xff]
    %v236 = vld [vmem:[#allocation7 + $0x398] sm:$0xff]
    %v237 = vld [vmem:[#allocation7 + $0x3a0] sm:$0xff]
    %v238 = vld [vmem:[#allocation7 + $0x3a8] sm:$0xff]
    %v239 = vld [vmem:[#allocation7 + $0x3b0] sm:$0xff]
    %v240 = vld [vmem:[#allocation7 + $0x3b8] sm:$0xff]
    %v241 = vld [vmem:[#allocation7 + $0x3c0] sm:$0xff]
    %v242 = vld [vmem:[#allocation7 + $0x3c8] sm:$0xff]
    %v243 = vld [vmem:[#allocation7 + $0x3d0] sm:$0xff]
    %v244 = vld [vmem:[#allocation7 + $0x3d8] sm:$0xff]
    %v245 = vld [vmem:[#allocation7 + $0x3e0] sm:$0xff]
    %v246 = vld [vmem:[#allocation7 + $0x3e8] sm:$0xff]
    %v247 = vld [vmem:[#allocation7 + $0x3f0] sm:$0xff]
    %v248 = vld [vmem:[#allocation7 + $0x3f8] sm:$0xff]
    %v249 = vld [vmem:[%s4] sm:$0xf]
    %v251 = vlaneseq
    %v252 = vshrl.u32 %v251, 7
    %v253 = vsub.s32 0, %v252
    %v254 = vrot.slane %v249, %v253
    %v255 = vlaneseq
    %v256 = vshrl.u32 %v255, 7
    %v257 = vsub.s32 1, %v256
    %v258 = vrot.slane %v249, %v257
    %v259 = vlaneseq
    %v260 = vshrl.u32 %v259, 7
    %v261 = vsub.s32 2, %v260
    %v262 = vrot.slane %v249, %v261
    %v263 = vlaneseq
    %v264 = vshrl.u32 %v263, 7
    %v265 = vsub.s32 3, %v264
    %v266 = vrot.slane %v249, %v265
    %v303 = vunpack.c.l.b16 %v89
    %v304 = vunpack.c.h.b16 %v89
    %v305 = vunpack.c.l.b16 %v90
    %v306 = vunpack.c.h.b16 %v90
    %v307 = vunpack.c.l.b16 %v91
    %v308 = vunpack.c.h.b16 %v91
    %v309 = vunpack.c.l.b16 %v92
    %v310 = vunpack.c.h.b16 %v92
    %v311 = vunpack.c.l.b16 %v93
    %v312 = vunpack.c.h.b16 %v93
    %v313 = vunpack.c.l.b16 %v94
    %v314 = vunpack.c.h.b16 %v94
    %v315 = vunpack.c.l.b16 %v95
    %v316 = vunpack.c.h.b16 %v95
    %v317 = vunpack.c.l.b16 %v96
    %v318 = vunpack.c.h.b16 %v96
    %v319 = vunpack.c.l.b16 %v97
    %v320 = vunpack.c.h.b16 %v97
    %v321 = vunpack.c.l.b16 %v98
    %v322 = vunpack.c.h.b16 %v98
    %v323 = vunpack.c.l.b16 %v99
    %v324 = vunpack.c.h.b16 %v99
    %v325 = vunpack.c.l.b16 %v100
    %v326 = vunpack.c.h.b16 %v100
    %v327 = vunpack.c.l.b16 %v101
    %v328 = vunpack.c.h.b16 %v101
    %v329 = vunpack.c.l.b16 %v102
    %v330 = vunpack.c.h.b16 %v102
    %v331 = vunpack.c.l.b16 %v103
    %v332 = vunpack.c.h.b16 %v103
    %v333 = vunpack.c.l.b16 %v104
    %v334 = vunpack.c.h.b16 %v104
    %v335 = vunpack.c.l.b16 %v105
    %v336 = vunpack.c.h.b16 %v105
    %v337 = vunpack.c.l.b16 %v106
    %v338 = vunpack.c.h.b16 %v106
    %v339 = vunpack.c.l.b16 %v107
    %v340 = vunpack.c.h.b16 %v107
    %v341 = vunpack.c.l.b16 %v108
    %v342 = vunpack.c.h.b16 %v108
    %v343 = vunpack.c.l.b16 %v109
    %v344 = vunpack.c.h.b16 %v109
    %v345 = vunpack.c.l.b16 %v110
    %v346 = vunpack.c.h.b16 %v110
    %v347 = vunpack.c.l.b16 %v111
    %v348 = vunpack.c.h.b16 %v111
    %v349 = vunpack.c.l.b16 %v112
    %v350 = vunpack.c.h.b16 %v112
    %v351 = vunpack.c.l.b16 %v113
    %v352 = vunpack.c.h.b16 %v113
    %v353 = vunpack.c.l.b16 %v114
    %v354 = vunpack.c.h.b16 %v114
    %v355 = vunpack.c.l.b16 %v115
    %v356 = vunpack.c.h.b16 %v115
    %v357 = vunpack.c.l.b16 %v116
    %v358 = vunpack.c.h.b16 %v116
    %v359 = vunpack.c.l.b16 %v117
    %v360 = vunpack.c.h.b16 %v117
    %v361 = vunpack.c.l.b16 %v118
    %v362 = vunpack.c.h.b16 %v118
    %v363 = vunpack.c.l.b16 %v119
    %v364 = vunpack.c.h.b16 %v119
    %v365 = vunpack.c.l.b16 %v120
    %v366 = vunpack.c.h.b16 %v120
    %v367 = vpack.c.b16 %v307, %v303
    %v368 = vpack.c.b16 %v308, %v304
    %v369 = vpack.c.b16 %v309, %v305
    %v370 = vpack.c.b16 %v310, %v306
    %v371 = vpack.c.b16 %v315, %v311
    %v372 = vpack.c.b16 %v316, %v312
    %v373 = vpack.c.b16 %v317, %v313
    %v374 = vpack.c.b16 %v318, %v314
    %v375 = vpack.c.b16 %v323, %v319
    %v376 = vpack.c.b16 %v324, %v320
    %v377 = vpack.c.b16 %v325, %v321
    %v378 = vpack.c.b16 %v326, %v322
    %v379 = vpack.c.b16 %v331, %v327
    %v380 = vpack.c.b16 %v332, %v328
    %v381 = vpack.c.b16 %v333, %v329
    %v382 = vpack.c.b16 %v334, %v330
    %v383 = vpack.c.b16 %v339, %v335
    %v384 = vpack.c.b16 %v340, %v336
    %v385 = vpack.c.b16 %v341, %v337
    %v386 = vpack.c.b16 %v342, %v338
    %v387 = vpack.c.b16 %v347, %v343
    %v388 = vpack.c.b16 %v348, %v344
    %v389 = vpack.c.b16 %v349, %v345
    %v390 = vpack.c.b16 %v350, %v346
    %v391 = vpack.c.b16 %v355, %v351
    %v392 = vpack.c.b16 %v356, %v352
    %v393 = vpack.c.b16 %v357, %v353
    %v394 = vpack.c.b16 %v358, %v354
    %v395 = vpack.c.b16 %v363, %v359
    %v396 = vpack.c.b16 %v364, %v360
    %v397 = vpack.c.b16 %v365, %v361
    %v398 = vpack.c.b16 %v366, %v362
    %v559 = vunpack.c.l.b16 %v121
    %v560 = vunpack.c.h.b16 %v121
    %v561 = vunpack.c.l.b16 %v122
    %v562 = vunpack.c.h.b16 %v122
    %v563 = vunpack.c.l.b16 %v123
    %v564 = vunpack.c.h.b16 %v123
    %v565 = vunpack.c.l.b16 %v124
    %v566 = vunpack.c.h.b16 %v124
    %v567 = vunpack.c.l.b16 %v125
    %v568 = vunpack.c.h.b16 %v125
    %v569 = vunpack.c.l.b16 %v126
    %v570 = vunpack.c.h.b16 %v126
    %v571 = vunpack.c.l.b16 %v127
    %v572 = vunpack.c.h.b16 %v127
    %v573 = vunpack.c.l.b16 %v128
    %v574 = vunpack.c.h.b16 %v128
    %v575 = vunpack.c.l.b16 %v129
    %v576 = vunpack.c.h.b16 %v129
    %v577 = vunpack.c.l.b16 %v130
    %v578 = vunpack.c.h.b16 %v130
    %v579 = vunpack.c.l.b16 %v131
    %v580 = vunpack.c.h.b16 %v131
    %v581 = vunpack.c.l.b16 %v132
    %v582 = vunpack.c.h.b16 %v132
    %v583 = vunpack.c.l.b16 %v133
    %v584 = vunpack.c.h.b16 %v133
    %v585 = vunpack.c.l.b16 %v134
    %v586 = vunpack.c.h.b16 %v134
    %v587 = vunpack.c.l.b16 %v135
    %v588 = vunpack.c.h.b16 %v135
    %v589 = vunpack.c.l.b16 %v136
    %v590 = vunpack.c.h.b16 %v136
    %v591 = vunpack.c.l.b16 %v137
    %v592 = vunpack.c.h.b16 %v137
    %v593 = vunpack.c.l.b16 %v138
    %v594 = vunpack.c.h.b16 %v138
    %v595 = vunpack.c.l.b16 %v139
    %v596 = vunpack.c.h.b16 %v139
    %v597 = vunpack.c.l.b16 %v140
    %v598 = vunpack.c.h.b16 %v140
    %v599 = vunpack.c.l.b16 %v141
    %v600 = vunpack.c.h.b16 %v141
    %v601 = vunpack.c.l.b16 %v142
    %v602 = vunpack.c.h.b16 %v142
    %v603 = vunpack.c.l.b16 %v143
    %v604 = vunpack.c.h.b16 %v143
    %v605 = vunpack.c.l.b16 %v144
    %v606 = vunpack.c.h.b16 %v144
    %v607 = vunpack.c.l.b16 %v145
    %v608 = vunpack.c.h.b16 %v145
    %v609 = vunpack.c.l.b16 %v146
    %v610 = vunpack.c.h.b16 %v146
    %v611 = vunpack.c.l.b16 %v147
    %v612 = vunpack.c.h.b16 %v147
    %v613 = vunpack.c.l.b16 %v148
    %v614 = vunpack.c.h.b16 %v148
    %v615 = vunpack.c.l.b16 %v149
    %v616 = vunpack.c.h.b16 %v149
    %v617 = vunpack.c.l.b16 %v150
    %v618 = vunpack.c.h.b16 %v150
    %v619 = vunpack.c.l.b16 %v151
    %v620 = vunpack.c.h.b16 %v151
    %v621 = vunpack.c.l.b16 %v152
    %v622 = vunpack.c.h.b16 %v152
    %v623 = vunpack.c.l.b16 %v153
    %v624 = vunpack.c.h.b16 %v153
    %v625 = vunpack.c.l.b16 %v154
    %v626 = vunpack.c.h.b16 %v154
    %v627 = vunpack.c.l.b16 %v155
    %v628 = vunpack.c.h.b16 %v155
    %v629 = vunpack.c.l.b16 %v156
    %v630 = vunpack.c.h.b16 %v156
    %v631 = vunpack.c.l.b16 %v157
    %v632 = vunpack.c.h.b16 %v157
    %v633 = vunpack.c.l.b16 %v158
    %v634 = vunpack.c.h.b16 %v158
    %v635 = vunpack.c.l.b16 %v159
    %v636 = vunpack.c.h.b16 %v159
    %v637 = vunpack.c.l.b16 %v160
    %v638 = vunpack.c.h.b16 %v160
    %v639 = vunpack.c.l.b16 %v161
    %v640 = vunpack.c.h.b16 %v161
    %v641 = vunpack.c.l.b16 %v162
    %v642 = vunpack.c.h.b16 %v162
    %v643 = vunpack.c.l.b16 %v163
    %v644 = vunpack.c.h.b16 %v163
    %v645 = vunpack.c.l.b16 %v164
    %v646 = vunpack.c.h.b16 %v164
    %v647 = vunpack.c.l.b16 %v165
    %v648 = vunpack.c.h.b16 %v165
    %v649 = vunpack.c.l.b16 %v166
    %v650 = vunpack.c.h.b16 %v166
    %v651 = vunpack.c.l.b16 %v167
    %v652 = vunpack.c.h.b16 %v167
    %v653 = vunpack.c.l.b16 %v168
    %v654 = vunpack.c.h.b16 %v168
    %v655 = vunpack.c.l.b16 %v169
    %v656 = vunpack.c.h.b16 %v169
    %v657 = vunpack.c.l.b16 %v170
    %v658 = vunpack.c.h.b16 %v170
    %v659 = vunpack.c.l.b16 %v171
    %v660 = vunpack.c.h.b16 %v171
    %v661 = vunpack.c.l.b16 %v172
    %v662 = vunpack.c.h.b16 %v172
    %v663 = vunpack.c.l.b16 %v173
    %v664 = vunpack.c.h.b16 %v173
    %v665 = vunpack.c.l.b16 %v174
    %v666 = vunpack.c.h.b16 %v174
    %v667 = vunpack.c.l.b16 %v175
    %v668 = vunpack.c.h.b16 %v175
    %v669 = vunpack.c.l.b16 %v176
    %v670 = vunpack.c.h.b16 %v176
    %v671 = vunpack.c.l.b16 %v177
    %v672 = vunpack.c.h.b16 %v177
    %v673 = vunpack.c.l.b16 %v178
    %v674 = vunpack.c.h.b16 %v178
    %v675 = vunpack.c.l.b16 %v179
    %v676 = vunpack.c.h.b16 %v179
    %v677 = vunpack.c.l.b16 %v180
    %v678 = vunpack.c.h.b16 %v180
    %v679 = vunpack.c.l.b16 %v181
    %v680 = vunpack.c.h.b16 %v181
    %v681 = vunpack.c.l.b16 %v182
    %v682 = vunpack.c.h.b16 %v182
    %v683 = vunpack.c.l.b16 %v183
    %v684 = vunpack.c.h.b16 %v183
    %v685 = vunpack.c.l.b16 %v184
    %v686 = vunpack.c.h.b16 %v184
    %v687 = vunpack.c.l.b16 %v185
    %v688 = vunpack.c.h.b16 %v185
    %v689 = vunpack.c.l.b16 %v186
    %v690 = vunpack.c.h.b16 %v186
    %v691 = vunpack.c.l.b16 %v187
    %v692 = vunpack.c.h.b16 %v187
    %v693 = vunpack.c.l.b16 %v188
    %v694 = vunpack.c.h.b16 %v188
    %v695 = vunpack.c.l.b16 %v189
    %v696 = vunpack.c.h.b16 %v189
    %v697 = vunpack.c.l.b16 %v190
    %v698 = vunpack.c.h.b16 %v190
    %v699 = vunpack.c.l.b16 %v191
    %v700 = vunpack.c.h.b16 %v191
    %v701 = vunpack.c.l.b16 %v192
    %v702 = vunpack.c.h.b16 %v192
    %v703 = vunpack.c.l.b16 %v193
    %v704 = vunpack.c.h.b16 %v193
    %v705 = vunpack.c.l.b16 %v194
    %v706 = vunpack.c.h.b16 %v194
    %v707 = vunpack.c.l.b16 %v195
    %v708 = vunpack.c.h.b16 %v195
    %v709 = vunpack.c.l.b16 %v196
    %v710 = vunpack.c.h.b16 %v196
    %v711 = vunpack.c.l.b16 %v197
    %v712 = vunpack.c.h.b16 %v197
    %v713 = vunpack.c.l.b16 %v198
    %v714 = vunpack.c.h.b16 %v198
    %v715 = vunpack.c.l.b16 %v199
    %v716 = vunpack.c.h.b16 %v199
    %v717 = vunpack.c.l.b16 %v200
    %v718 = vunpack.c.h.b16 %v200
    %v719 = vunpack.c.l.b16 %v201
    %v720 = vunpack.c.h.b16 %v201
    %v721 = vunpack.c.l.b16 %v202
    %v722 = vunpack.c.h.b16 %v202
    %v723 = vunpack.c.l.b16 %v203
    %v724 = vunpack.c.h.b16 %v203
    %v725 = vunpack.c.l.b16 %v204
    %v726 = vunpack.c.h.b16 %v204
    %v727 = vunpack.c.l.b16 %v205
    %v728 = vunpack.c.h.b16 %v205
    %v729 = vunpack.c.l.b16 %v206
    %v730 = vunpack.c.h.b16 %v206
    %v731 = vunpack.c.l.b16 %v207
    %v732 = vunpack.c.h.b16 %v207
    %v733 = vunpack.c.l.b16 %v208
    %v734 = vunpack.c.h.b16 %v208
    %v735 = vunpack.c.l.b16 %v209
    %v736 = vunpack.c.h.b16 %v209
    %v737 = vunpack.c.l.b16 %v210
    %v738 = vunpack.c.h.b16 %v210
    %v739 = vunpack.c.l.b16 %v211
    %v740 = vunpack.c.h.b16 %v211
    %v741 = vunpack.c.l.b16 %v212
    %v742 = vunpack.c.h.b16 %v212
    %v743 = vunpack.c.l.b16 %v213
    %v744 = vunpack.c.h.b16 %v213
    %v745 = vunpack.c.l.b16 %v214
    %v746 = vunpack.c.h.b16 %v214
    %v747 = vunpack.c.l.b16 %v215
    %v748 = vunpack.c.h.b16 %v215
    %v749 = vunpack.c.l.b16 %v216
    %v750 = vunpack.c.h.b16 %v216
    %v751 = vunpack.c.l.b16 %v217
    %v752 = vunpack.c.h.b16 %v217
    %v753 = vunpack.c.l.b16 %v218
    %v754 = vunpack.c.h.b16 %v218
    %v755 = vunpack.c.l.b16 %v219
    %v756 = vunpack.c.h.b16 %v219
    %v757 = vunpack.c.l.b16 %v220
    %v758 = vunpack.c.h.b16 %v220
    %v759 = vunpack.c.l.b16 %v221
    %v760 = vunpack.c.h.b16 %v221
    %v761 = vunpack.c.l.b16 %v222
    %v762 = vunpack.c.h.b16 %v222
    %v763 = vunpack.c.l.b16 %v223
    %v764 = vunpack.c.h.b16 %v223
    %v765 = vunpack.c.l.b16 %v224
    %v766 = vunpack.c.h.b16 %v224
    %v767 = vunpack.c.l.b16 %v225
    %v768 = vunpack.c.h.b16 %v225
    %v769 = vunpack.c.l.b16 %v226
    %v770 = vunpack.c.h.b16 %v226
    %v771 = vunpack.c.l.b16 %v227
    %v772 = vunpack.c.h.b16 %v227
    %v773 = vunpack.c.l.b16 %v228
    %v774 = vunpack.c.h.b16 %v228
    %v775 = vunpack.c.l.b16 %v229
    %v776 = vunpack.c.h.b16 %v229
    %v777 = vunpack.c.l.b16 %v230
    %v778 = vunpack.c.h.b16 %v230
    %v779 = vunpack.c.l.b16 %v231
    %v780 = vunpack.c.h.b16 %v231
    %v781 = vunpack.c.l.b16 %v232
    %v782 = vunpack.c.h.b16 %v232
    %v783 = vunpack.c.l.b16 %v233
    %v784 = vunpack.c.h.b16 %v233
    %v785 = vunpack.c.l.b16 %v234
    %v786 = vunpack.c.h.b16 %v234
    %v787 = vunpack.c.l.b16 %v235
    %v788 = vunpack.c.h.b16 %v235
    %v789 = vunpack.c.l.b16 %v236
    %v790 = vunpack.c.h.b16 %v236
    %v791 = vunpack.c.l.b16 %v237
    %v792 = vunpack.c.h.b16 %v237
    %v793 = vunpack.c.l.b16 %v238
    %v794 = vunpack.c.h.b16 %v238
    %v795 = vunpack.c.l.b16 %v239
    %v796 = vunpack.c.h.b16 %v239
    %v797 = vunpack.c.l.b16 %v240
    %v798 = vunpack.c.h.b16 %v240
    %v799 = vunpack.c.l.b16 %v241
    %v800 = vunpack.c.h.b16 %v241
    %v801 = vunpack.c.l.b16 %v242
    %v802 = vunpack.c.h.b16 %v242
    %v803 = vunpack.c.l.b16 %v243
    %v804 = vunpack.c.h.b16 %v243
    %v805 = vunpack.c.l.b16 %v244
    %v806 = vunpack.c.h.b16 %v244
    %v807 = vunpack.c.l.b16 %v245
    %v808 = vunpack.c.h.b16 %v245
    %v809 = vunpack.c.l.b16 %v246
    %v810 = vunpack.c.h.b16 %v246
    %v811 = vunpack.c.l.b16 %v247
    %v812 = vunpack.c.h.b16 %v247
    %v813 = vunpack.c.l.b16 %v248
    %v814 = vunpack.c.h.b16 %v248
    %v815 = vpack.c.b16 %v563, %v559
    %v816 = vpack.c.b16 %v564, %v560
    %v817 = vpack.c.b16 %v565, %v561
    %v818 = vpack.c.b16 %v566, %v562
    %v819 = vpack.c.b16 %v571, %v567
    %v820 = vpack.c.b16 %v572, %v568
    %v821 = vpack.c.b16 %v573, %v569
    %v822 = vpack.c.b16 %v574, %v570
    %v823 = vpack.c.b16 %v579, %v575
    %v824 = vpack.c.b16 %v580, %v576
    %v825 = vpack.c.b16 %v581, %v577
    %v826 = vpack.c.b16 %v582, %v578
    %v827 = vpack.c.b16 %v587, %v583
    %v828 = vpack.c.b16 %v588, %v584
    %v829 = vpack.c.b16 %v589, %v585
    %v830 = vpack.c.b16 %v590, %v586
    %v831 = vpack.c.b16 %v595, %v591
    %v832 = vpack.c.b16 %v596, %v592
    %v833 = vpack.c.b16 %v597, %v593
    %v834 = vpack.c.b16 %v598, %v594
    %v835 = vpack.c.b16 %v603, %v599
    %v836 = vpack.c.b16 %v604, %v600
    %v837 = vpack.c.b16 %v605, %v601
    %v838 = vpack.c.b16 %v606, %v602
    %v839 = vpack.c.b16 %v611, %v607
    %v840 = vpack.c.b16 %v612, %v608
    %v841 = vpack.c.b16 %v613, %v609
    %v842 = vpack.c.b16 %v614, %v610
    %v843 = vpack.c.b16 %v619, %v615
    %v844 = vpack.c.b16 %v620, %v616
    %v845 = vpack.c.b16 %v621, %v617
    %v846 = vpack.c.b16 %v622, %v618
    %v847 = vpack.c.b16 %v627, %v623
    %v848 = vpack.c.b16 %v628, %v624
    %v849 = vpack.c.b16 %v629, %v625
    %v850 = vpack.c.b16 %v630, %v626
    %v851 = vpack.c.b16 %v635, %v631
    %v852 = vpack.c.b16 %v636, %v632
    %v853 = vpack.c.b16 %v637, %v633
    %v854 = vpack.c.b16 %v638, %v634
    %v855 = vpack.c.b16 %v643, %v639
    %v856 = vpack.c.b16 %v644, %v640
    %v857 = vpack.c.b16 %v645, %v641
    %v858 = vpack.c.b16 %v646, %v642
    %v859 = vpack.c.b16 %v651, %v647
    %v860 = vpack.c.b16 %v652, %v648
    %v861 = vpack.c.b16 %v653, %v649
    %v862 = vpack.c.b16 %v654, %v650
    %v863 = vpack.c.b16 %v659, %v655
    %v864 = vpack.c.b16 %v660, %v656
    %v865 = vpack.c.b16 %v661, %v657
    %v866 = vpack.c.b16 %v662, %v658
    %v867 = vpack.c.b16 %v667, %v663
    %v868 = vpack.c.b16 %v668, %v664
    %v869 = vpack.c.b16 %v669, %v665
    %v870 = vpack.c.b16 %v670, %v666
    %v871 = vpack.c.b16 %v675, %v671
    %v872 = vpack.c.b16 %v676, %v672
    %v873 = vpack.c.b16 %v677, %v673
    %v874 = vpack.c.b16 %v678, %v674
    %v875 = vpack.c.b16 %v683, %v679
    %v876 = vpack.c.b16 %v684, %v680
    %v877 = vpack.c.b16 %v685, %v681
    %v878 = vpack.c.b16 %v686, %v682
    %v879 = vpack.c.b16 %v691, %v687
    %v880 = vpack.c.b16 %v692, %v688
    %v881 = vpack.c.b16 %v693, %v689
    %v882 = vpack.c.b16 %v694, %v690
    %v883 = vpack.c.b16 %v699, %v695
    %v884 = vpack.c.b16 %v700, %v696
    %v885 = vpack.c.b16 %v701, %v697
    %v886 = vpack.c.b16 %v702, %v698
    %v887 = vpack.c.b16 %v707, %v703
    %v888 = vpack.c.b16 %v708, %v704
    %v889 = vpack.c.b16 %v709, %v705
    %v890 = vpack.c.b16 %v710, %v706
    %v891 = vpack.c.b16 %v715, %v711
    %v892 = vpack.c.b16 %v716, %v712
    %v893 = vpack.c.b16 %v717, %v713
    %v894 = vpack.c.b16 %v718, %v714
    %v895 = vpack.c.b16 %v723, %v719
    %v896 = vpack.c.b16 %v724, %v720
    %v897 = vpack.c.b16 %v725, %v721
    %v898 = vpack.c.b16 %v726, %v722
    %v899 = vpack.c.b16 %v731, %v727
    %v900 = vpack.c.b16 %v732, %v728
    %v901 = vpack.c.b16 %v733, %v729
    %v902 = vpack.c.b16 %v734, %v730
    %v903 = vpack.c.b16 %v739, %v735
    %v904 = vpack.c.b16 %v740, %v736
    %v905 = vpack.c.b16 %v741, %v737
    %v906 = vpack.c.b16 %v742, %v738
    %v907 = vpack.c.b16 %v747, %v743
    %v908 = vpack.c.b16 %v748, %v744
    %v909 = vpack.c.b16 %v749, %v745
    %v910 = vpack.c.b16 %v750, %v746
    %v911 = vpack.c.b16 %v755, %v751
    %v912 = vpack.c.b16 %v756, %v752
    %v913 = vpack.c.b16 %v757, %v753
    %v914 = vpack.c.b16 %v758, %v754
    %v915 = vpack.c.b16 %v763, %v759
    %v916 = vpack.c.b16 %v764, %v760
    %v917 = vpack.c.b16 %v765, %v761
    %v918 = vpack.c.b16 %v766, %v762
    %v919 = vpack.c.b16 %v771, %v767
    %v920 = vpack.c.b16 %v772, %v768
    %v921 = vpack.c.b16 %v773, %v769
    %v922 = vpack.c.b16 %v774, %v770
    %v923 = vpack.c.b16 %v779, %v775
    %v924 = vpack.c.b16 %v780, %v776
    %v925 = vpack.c.b16 %v781, %v777
    %v926 = vpack.c.b16 %v782, %v778
    %v927 = vpack.c.b16 %v787, %v783
    %v928 = vpack.c.b16 %v788, %v784
    %v929 = vpack.c.b16 %v789, %v785
    %v930 = vpack.c.b16 %v790, %v786
    %v931 = vpack.c.b16 %v795, %v791
    %v932 = vpack.c.b16 %v796, %v792
    %v933 = vpack.c.b16 %v797, %v793
    %v934 = vpack.c.b16 %v798, %v794
    %v935 = vpack.c.b16 %v803, %v799
    %v936 = vpack.c.b16 %v804, %v800
    %v937 = vpack.c.b16 %v805, %v801
    %v938 = vpack.c.b16 %v806, %v802
    %v939 = vpack.c.b16 %v811, %v807
    %v940 = vpack.c.b16 %v812, %v808
    %v941 = vpack.c.b16 %v813, %v809
    %v942 = vpack.c.b16 %v814, %v810
    %1071 = vmatprep.subr.bf16.mxu0 %v816
    %1072 = vmatpush1.bf16.msra.mxu0 %v815
    %1073 = vmatprep.subr.bf16.mxu0 %v820
    %1074 = vmatpush1.bf16.msra.mxu0 %v819
    %1075 = vmatprep.subr.bf16.mxu0 %v824
    %1076 = vmatpush1.bf16.msra.mxu0 %v823
    %1077 = vmatprep.subr.bf16.mxu0 %v828
    %1078 = vmatpush1.bf16.msra.mxu0 %v827
    %1079 = vmatprep.subr.bf16.mxu0 %v832
    %1080 = vmatpush1.bf16.msra.mxu0 %v831
    %1081 = vmatprep.subr.bf16.mxu0 %v836
    %1082 = vmatpush1.bf16.msra.mxu0 %v835
    %1083 = vmatprep.subr.bf16.mxu0 %v840
    %1084 = vmatpush1.bf16.msra.mxu0 %v839
    %1085 = vmatprep.subr.bf16.mxu0 %v844
    %1086 = vmatpush1.bf16.msra.mxu0 %v843
    %1087 = vmatprep.subr.bf16.mxu0 %v848
    %1088 = vmatpush1.bf16.msra.mxu0 %v847
    %1089 = vmatprep.subr.bf16.mxu0 %v852
    %1090 = vmatpush1.bf16.msra.mxu0 %v851
    %1091 = vmatprep.subr.bf16.mxu0 %v856
    %1092 = vmatpush1.bf16.msra.mxu0 %v855
    %1093 = vmatprep.subr.bf16.mxu0 %v860
    %1094 = vmatpush1.bf16.msra.mxu0 %v859
    %1095 = vmatprep.subr.bf16.mxu0 %v864
    %1096 = vmatpush1.bf16.msra.mxu0 %v863
    %1097 = vmatprep.subr.bf16.mxu0 %v868
    %1098 = vmatpush1.bf16.msra.mxu0 %v867
    %1099 = vmatprep.subr.bf16.mxu0 %v872
    %1100 = vmatpush1.bf16.msra.mxu0 %v871
    %1101 = vmatprep.subr.bf16.mxu0 %v876
    %1102 = vmatpush1.bf16.msra.mxu0 %v875
    %1103 = vmatprep.mubr.bf16.mxu0 %v368
    %1104 = vmatmul.mubr.bf16.gmra.mrb[0].mxu0 %v367
    %v1105 = vpop.f32.mrb[0].mxu0
    %v1106 = vadd.f32 %v254, %v1105
    %v1107 = vpop.f32.mrb[0].mxu0
    %v1108 = vadd.f32 %v258, %v1107
    %v1109 = vpop.f32.mrb[0].mxu0
    %v1110 = vadd.f32 %v254, %v1109
    %v1111 = vpop.f32.mrb[0].mxu0
    %v1112 = vadd.f32 %v258, %v1111
    %1113 = vmatprep.mubr.bf16.mxu0 %v372
    %1114 = vmatmul.mubr.bf16.gmra.mrb[0].mxu0 %v371
    %v1115 = vpop.f32.mrb[0].mxu0
    %v1116 = vadd.f32 %v254, %v1115
    %v1117 = vpop.f32.mrb[0].mxu0
    %v1118 = vadd.f32 %v258, %v1117
    %v1119 = vpop.f32.mrb[0].mxu0
    %v1120 = vadd.f32 %v254, %v1119
    %v1121 = vpop.f32.mrb[0].mxu0
    %v1122 = vadd.f32 %v258, %v1121
    %1123 = vmatprep.mubr.bf16.mxu0 %v376
    %1124 = vmatmul.mubr.bf16.gmra.mrb[0].mxu0 %v375
    %v1125 = vpop.f32.mrb[0].mxu0
    %v1126 = vadd.f32 %v254, %v1125
    %v1127 = vpop.f32.mrb[0].mxu0
    %v1128 = vadd.f32 %v258, %v1127
    %v1129 = vpop.f32.mrb[0].mxu0
    %v1130 = vadd.f32 %v254, %v1129
    %v1131 = vpop.f32.mrb[0].mxu0
    %v1132 = vadd.f32 %v258, %v1131
    %1133 = vmatprep.mubr.bf16.mxu0 %v380
    %1134 = vmatmul.mubr.bf16.gmra.mrb[0].mxu0 %v379
    %v1135 = vpop.f32.mrb[0].mxu0
    %v1136 = vadd.f32 %v254, %v1135
    %v1137 = vpop.f32.mrb[0].mxu0
    %v1138 = vadd.f32 %v258, %v1137
    %v1139 = vpop.f32.mrb[0].mxu0
    %v1140 = vadd.f32 %v254, %v1139
    %v1141 = vpop.f32.mrb[0].mxu0
    %v1142 = vadd.f32 %v258, %v1141
    %1143 = vmatprep.mubr.bf16.mxu0 %v384
    %1144 = vmatmul.mubr.bf16.gmra.mrb[0].mxu0 %v383
    %v1145 = vpop.f32.mrb[0].mxu0
    %v1146 = vadd.f32 %v254, %v1145
    %v1147 = vpop.f32.mrb[0].mxu0
    %v1148 = vadd.f32 %v258, %v1147
    %v1149 = vpop.f32.mrb[0].mxu0
    %v1150 = vadd.f32 %v254, %v1149
    %v1151 = vpop.f32.mrb[0].mxu0
    %v1152 = vadd.f32 %v258, %v1151
    %1153 = vmatprep.mubr.bf16.mxu0 %v388
    %1154 = vmatmul.mubr.bf16.gmra.mrb[0].mxu0 %v387
    %v1155 = vpop.f32.mrb[0].mxu0
    %v1156 = vadd.f32 %v254, %v1155
    %v1157 = vpop.f32.mrb[0].mxu0
    %v1158 = vadd.f32 %v258, %v1157
    %v1159 = vpop.f32.mrb[0].mxu0
    %v1160 = vadd.f32 %v254, %v1159
    %v1161 = vpop.f32.mrb[0].mxu0
    %v1162 = vadd.f32 %v258, %v1161
    %1163 = vmatprep.mubr.bf16.mxu0 %v392
    %1164 = vmatmul.mubr.bf16.gmra.mrb[0].mxu0 %v391
    %v1165 = vpop.f32.mrb[0].mxu0
    %v1166 = vadd.f32 %v254, %v1165
    %v1167 = vpop.f32.mrb[0].mxu0
    %v1168 = vadd.f32 %v258, %v1167
    %v1169 = vpop.f32.mrb[0].mxu0
    %v1170 = vadd.f32 %v254, %v1169
    %v1171 = vpop.f32.mrb[0].mxu0
    %v1172 = vadd.f32 %v258, %v1171
    %1173 = vmatprep.mubr.bf16.mxu0 %v396
    %1174 = vmatmul.mubr.bf16.gmra.mrb[0].mxu0 %v395
    %v1175 = vpop.f32.mrb[0].mxu0
    %v1176 = vadd.f32 %v254, %v1175
    %v1177 = vpop.f32.mrb[0].mxu0
    %v1178 = vadd.f32 %v258, %v1177
    %v1179 = vpop.f32.mrb[0].mxu0
    %v1180 = vadd.f32 %v254, %v1179
    %v1181 = vpop.f32.mrb[0].mxu0
    %v1182 = vadd.f32 %v258, %v1181
    %1183 = vdwg.mxu0
    %1184 = vmatprep.subr.bf16.mxu0 %v880
    %1185 = vmatpush1.bf16.msra.mxu0 %v879
    %1186 = vmatprep.subr.bf16.mxu0 %v884
    %1187 = vmatpush1.bf16.msra.mxu0 %v883
    %1188 = vmatprep.subr.bf16.mxu0 %v888
    %1189 = vmatpush1.bf16.msra.mxu0 %v887
    %1190 = vmatprep.subr.bf16.mxu0 %v892
    %1191 = vmatpush1.bf16.msra.mxu0 %v891
    %1192 = vmatprep.subr.bf16.mxu0 %v896
    %1193 = vmatpush1.bf16.msra.mxu0 %v895
    %1194 = vmatprep.subr.bf16.mxu0 %v900
    %1195 = vmatpush1.bf16.msra.mxu0 %v899
    %1196 = vmatprep.subr.bf16.mxu0 %v904
    %1197 = vmatpush1.bf16.msra.mxu0 %v903
    %1198 = vmatprep.subr.bf16.mxu0 %v908
    %1199 = vmatpush1.bf16.msra.mxu0 %v907
    %1200 = vmatprep.subr.bf16.mxu0 %v912
    %1201 = vmatpush1.bf16.msra.mxu0 %v911
    %1202 = vmatprep.subr.bf16.mxu0 %v916
    %1203 = vmatpush1.bf16.msra.mxu0 %v915
    %1204 = vmatprep.subr.bf16.mxu0 %v920
    %1205 = vmatpush1.bf16.msra.mxu0 %v919
    %1206 = vmatprep.subr.bf16.mxu0 %v924
    %1207 = vmatpush1.bf16.msra.mxu0 %v923
    %1208 = vmatprep.subr.bf16.mxu0 %v928
    %1209 = vmatpush1.bf16.msra.mxu0 %v927
    %1210 = vmatprep.subr.bf16.mxu0 %v932
    %1211 = vmatpush1.bf16.msra.mxu0 %v931
    %1212 = vmatprep.subr.bf16.mxu0 %v936
    %1213 = vmatpush1.bf16.msra.mxu0 %v935
    %1214 = vmatprep.subr.bf16.mxu0 %v940
    %1215 = vmatpush1.bf16.msra.mxu0 %v939
    %1216 = vmatprep.mubr.bf16.mxu0 %v370
    %1217 = vmatmul.mubr.bf16.gmra.mrb[0].mxu0 %v369
    %v1218 = vpop.f32.mrb[0].mxu0
    %v1219 = vadd.f32 %v1106, %v1218
    %v1220 = vpop.f32.mrb[0].mxu0
    %v1221 = vadd.f32 %v1108, %v1220
    %v1222 = vpop.f32.mrb[0].mxu0
    %v1223 = vadd.f32 %v1110, %v1222
    %v1224 = vpop.f32.mrb[0].mxu0
    %v1225 = vadd.f32 %v1112, %v1224
    %1226 = vmatprep.mubr.bf16.mxu0 %v374
    %1227 = vmatmul.mubr.bf16.gmra.mrb[0].mxu0 %v373
    %v1228 = vpop.f32.mrb[0].mxu0
    %v1229 = vadd.f32 %v1116, %v1228
    %v1230 = vpop.f32.mrb[0].mxu0
    %v1231 = vadd.f32 %v1118, %v1230
    %v1232 = vpop.f32.mrb[0].mxu0
    %v1233 = vadd.f32 %v1120, %v1232
    %v1234 = vpop.f32.mrb[0].mxu0
    %v1235 = vadd.f32 %v1122, %v1234
    %1236 = vmatprep.mubr.bf16.mxu0 %v378
    %1237 = vmatmul.mubr.bf16.gmra.mrb[0].mxu0 %v377
    %v1238 = vpop.f32.mrb[0].mxu0
    %v1239 = vadd.f32 %v1126, %v1238
    %v1240 = vpop.f32.mrb[0].mxu0
    %v1241 = vadd.f32 %v1128, %v1240
    %v1242 = vpop.f32.mrb[0].mxu0
    %v1243 = vadd.f32 %v1130, %v1242
    %v1244 = vpop.f32.mrb[0].mxu0
    %v1245 = vadd.f32 %v1132, %v1244
    %1246 = vmatprep.mubr.bf16.mxu0 %v382
    %1247 = vmatmul.mubr.bf16.gmra.mrb[0].mxu0 %v381
    %v1248 = vpop.f32.mrb[0].mxu0
    %v1249 = vadd.f32 %v1136, %v1248
    %v1250 = vpop.f32.mrb[0].mxu0
    %v1251 = vadd.f32 %v1138, %v1250
    %v1252 = vpop.f32.mrb[0].mxu0
    %v1253 = vadd.f32 %v1140, %v1252
    %v1254 = vpop.f32.mrb[0].mxu0
    %v1255 = vadd.f32 %v1142, %v1254
    %1256 = vmatprep.mubr.bf16.mxu0 %v386
    %1257 = vmatmul.mubr.bf16.gmra.mrb[0].mxu0 %v385
    %v1258 = vpop.f32.mrb[0].mxu0
    %v1259 = vadd.f32 %v1146, %v1258
    %v1260 = vpop.f32.mrb[0].mxu0
    %v1261 = vadd.f32 %v1148, %v1260
    %v1262 = vpop.f32.mrb[0].mxu0
    %v1263 = vadd.f32 %v1150, %v1262
    %v1264 = vpop.f32.mrb[0].mxu0
    %v1265 = vadd.f32 %v1152, %v1264
    %1266 = vmatprep.mubr.bf16.mxu0 %v390
    %1267 = vmatmul.mubr.bf16.gmra.mrb[0].mxu0 %v389
    %v1268 = vpop.f32.mrb[0].mxu0
    %v1269 = vadd.f32 %v1156, %v1268
    %v1270 = vpop.f32.mrb[0].mxu0
    %v1271 = vadd.f32 %v1158, %v1270
    %v1272 = vpop.f32.mrb[0].mxu0
    %v1273 = vadd.f32 %v1160, %v1272
    %v1274 = vpop.f32.mrb[0].mxu0
    %v1275 = vadd.f32 %v1162, %v1274
    %1276 = vmatprep.mubr.bf16.mxu0 %v394
    %1277 = vmatmul.mubr.bf16.gmra.mrb[0].mxu0 %v393
    %v1278 = vpop.f32.mrb[0].mxu0
    %v1279 = vadd.f32 %v1166, %v1278
    %v1280 = vpop.f32.mrb[0].mxu0
    %v1281 = vadd.f32 %v1168, %v1280
    %v1282 = vpop.f32.mrb[0].mxu0
    %v1283 = vadd.f32 %v1170, %v1282
    %v1284 = vpop.f32.mrb[0].mxu0
    %v1285 = vadd.f32 %v1172, %v1284
    %1286 = vmatprep.mubr.bf16.mxu0 %v398
    %1287 = vmatmul.mubr.bf16.gmra.mrb[0].mxu0 %v397
    %v1288 = vpop.f32.mrb[0].mxu0
    %v1289 = vadd.f32 %v1176, %v1288
    %v1290 = vpop.f32.mrb[0].mxu0
    %v1291 = vadd.f32 %v1178, %v1290
    %v1292 = vpop.f32.mrb[0].mxu0
    %v1293 = vadd.f32 %v1180, %v1292
    %v1294 = vpop.f32.mrb[0].mxu0
    %v1295 = vadd.f32 %v1182, %v1294
    %1296 = vdwg.mxu0
    %1297 = vmatprep.subr.bf16.mxu0 %v818
    %1298 = vmatpush1.bf16.msra.mxu0 %v817
    %1299 = vmatprep.subr.bf16.mxu0 %v822
    %1300 = vmatpush1.bf16.msra.mxu0 %v821
    %1301 = vmatprep.subr.bf16.mxu0 %v826
    %1302 = vmatpush1.bf16.msra.mxu0 %v825
    %1303 = vmatprep.subr.bf16.mxu0 %v830
    %1304 = vmatpush1.bf16.msra.mxu0 %v829
    %1305 = vmatprep.subr.bf16.mxu0 %v834
    %1306 = vmatpush1.bf16.msra.mxu0 %v833
    %1307 = vmatprep.subr.bf16.mxu0 %v838
    %1308 = vmatpush1.bf16.msra.mxu0 %v837
    %1309 = vmatprep.subr.bf16.mxu0 %v842
    %1310 = vmatpush1.bf16.msra.mxu0 %v841
    %1311 = vmatprep.subr.bf16.mxu0 %v846
    %1312 = vmatpush1.bf16.msra.mxu0 %v845
    %1313 = vmatprep.subr.bf16.mxu0 %v850
    %1314 = vmatpush1.bf16.msra.mxu0 %v849
    %1315 = vmatprep.subr.bf16.mxu0 %v854
    %1316 = vmatpush1.bf16.msra.mxu0 %v853
    %1317 = vmatprep.subr.bf16.mxu0 %v858
    %1318 = vmatpush1.bf16.msra.mxu0 %v857
    %1319 = vmatprep.subr.bf16.mxu0 %v862
    %1320 = vmatpush1.bf16.msra.mxu0 %v861
    %1321 = vmatprep.subr.bf16.mxu0 %v866
    %1322 = vmatpush1.bf16.msra.mxu0 %v865
    %1323 = vmatprep.subr.bf16.mxu0 %v870
    %1324 = vmatpush1.bf16.msra.mxu0 %v869
    %1325 = vmatprep.subr.bf16.mxu0 %v874
    %1326 = vmatpush1.bf16.msra.mxu0 %v873
    %1327 = vmatprep.subr.bf16.mxu0 %v878
    %1328 = vmatpush1.bf16.msra.mxu0 %v877
    %1329 = vmatprep.mubr.bf16.mxu0 %v368
    %1330 = vmatmul.mubr.bf16.gmra.mrb[0].mxu0 %v367
    %v1331 = vpop.f32.mrb[0].mxu0
    %v1332 = vadd.f32 %v262, %v1331
    %v1333 = vpop.f32.mrb[0].mxu0
    %v1334 = vadd.f32 %v266, %v1333
    %v1335 = vpop.f32.mrb[0].mxu0
    %v1336 = vadd.f32 %v262, %v1335
    %v1337 = vpop.f32.mrb[0].mxu0
    %v1338 = vadd.f32 %v266, %v1337
    %1339 = vmatprep.mubr.bf16.mxu0 %v372
    %1340 = vmatmul.mubr.bf16.gmra.mrb[0].mxu0 %v371
    %v1341 = vpop.f32.mrb[0].mxu0
    %v1342 = vadd.f32 %v262, %v1341
    %v1343 = vpop.f32.mrb[0].mxu0
    %v1344 = vadd.f32 %v266, %v1343
    %v1345 = vpop.f32.mrb[0].mxu0
    %v1346 = vadd.f32 %v262, %v1345
    %v1347 = vpop.f32.mrb[0].mxu0
    %v1348 = vadd.f32 %v266, %v1347
    %1349 = vmatprep.mubr.bf16.mxu0 %v376
    %1350 = vmatmul.mubr.bf16.gmra.mrb[0].mxu0 %v375
    %v1351 = vpop.f32.mrb[0].mxu0
    %v1352 = vadd.f32 %v262, %v1351
    %v1353 = vpop.f32.mrb[0].mxu0
    %v1354 = vadd.f32 %v266, %v1353
    %v1355 = vpop.f32.mrb[0].mxu0
    %v1356 = vadd.f32 %v262, %v1355
    %v1357 = vpop.f32.mrb[0].mxu0
    %v1358 = vadd.f32 %v266, %v1357
    %1359 = vmatprep.mubr.bf16.mxu0 %v380
    %1360 = vmatmul.mubr.bf16.gmra.mrb[0].mxu0 %v379
    %v1361 = vpop.f32.mrb[0].mxu0
    %v1362 = vadd.f32 %v262, %v1361
    %v1363 = vpop.f32.mrb[0].mxu0
    %v1364 = vadd.f32 %v266, %v1363
    %v1365 = vpop.f32.mrb[0].mxu0
    %v1366 = vadd.f32 %v262, %v1365
    %v1367 = vpop.f32.mrb[0].mxu0
    %v1368 = vadd.f32 %v266, %v1367
    %1369 = vmatprep.mubr.bf16.mxu0 %v384
    %1370 = vmatmul.mubr.bf16.gmra.mrb[0].mxu0 %v383
    %v1371 = vpop.f32.mrb[0].mxu0
    %v1372 = vadd.f32 %v262, %v1371
    %v1373 = vpop.f32.mrb[0].mxu0
    %v1374 = vadd.f32 %v266, %v1373
    %v1375 = vpop.f32.mrb[0].mxu0
    %v1376 = vadd.f32 %v262, %v1375
    %v1377 = vpop.f32.mrb[0].mxu0
    %v1378 = vadd.f32 %v266, %v1377
    %1379 = vmatprep.mubr.bf16.mxu0 %v388
    %1380 = vmatmul.mubr.bf16.gmra.mrb[0].mxu0 %v387
    %v1381 = vpop.f32.mrb[0].mxu0
    %v1382 = vadd.f32 %v262, %v1381
    %v1383 = vpop.f32.mrb[0].mxu0
    %v1384 = vadd.f32 %v266, %v1383
    %v1385 = vpop.f32.mrb[0].mxu0
    %v1386 = vadd.f32 %v262, %v1385
    %v1387 = vpop.f32.mrb[0].mxu0
    %v1388 = vadd.f32 %v266, %v1387
    %1389 = vmatprep.mubr.bf16.mxu0 %v392
    %1390 = vmatmul.mubr.bf16.gmra.mrb[0].mxu0 %v391
    %v1391 = vpop.f32.mrb[0].mxu0
    %v1392 = vadd.f32 %v262, %v1391
    %v1393 = vpop.f32.mrb[0].mxu0
    %v1394 = vadd.f32 %v266, %v1393
    %v1395 = vpop.f32.mrb[0].mxu0
    %v1396 = vadd.f32 %v262, %v1395
    %v1397 = vpop.f32.mrb[0].mxu0
    %v1398 = vadd.f32 %v266, %v1397
    %1399 = vmatprep.mubr.bf16.mxu0 %v396
    %1400 = vmatmul.mubr.bf16.gmra.mrb[0].mxu0 %v395
    %v1401 = vpop.f32.mrb[0].mxu0
    %v1402 = vadd.f32 %v262, %v1401
    %v1403 = vpop.f32.mrb[0].mxu0
    %v1404 = vadd.f32 %v266, %v1403
    %v1405 = vpop.f32.mrb[0].mxu0
    %v1406 = vadd.f32 %v262, %v1405
    %v1407 = vpop.f32.mrb[0].mxu0
    %v1408 = vadd.f32 %v266, %v1407
    %1409 = vdwg.mxu0
    %1410 = vmatprep.subr.bf16.mxu0 %v882
    %1411 = vmatpush1.bf16.msra.mxu0 %v881
    %1412 = vmatprep.subr.bf16.mxu0 %v886
    %1413 = vmatpush1.bf16.msra.mxu0 %v885
    %1414 = vmatprep.subr.bf16.mxu0 %v890
    %1415 = vmatpush1.bf16.msra.mxu0 %v889
    %1416 = vmatprep.subr.bf16.mxu0 %v894
    %1417 = vmatpush1.bf16.msra.mxu0 %v893
    %1418 = vmatprep.subr.bf16.mxu0 %v898
    %1419 = vmatpush1.bf16.msra.mxu0 %v897
    %1420 = vmatprep.subr.bf16.mxu0 %v902
    %1421 = vmatpush1.bf16.msra.mxu0 %v901
    %1422 = vmatprep.subr.bf16.mxu0 %v906
    %1423 = vmatpush1.bf16.msra.mxu0 %v905
    %1424 = vmatprep.subr.bf16.mxu0 %v910
    %1425 = vmatpush1.bf16.msra.mxu0 %v909
    %1426 = vmatprep.subr.bf16.mxu0 %v914
    %1427 = vmatpush1.bf16.msra.mxu0 %v913
    %1428 = vmatprep.subr.bf16.mxu0 %v918
    %1429 = vmatpush1.bf16.msra.mxu0 %v917
    %1430 = vmatprep.subr.bf16.mxu0 %v922
    %1431 = vmatpush1.bf16.msra.mxu0 %v921
    %1432 = vmatprep.subr.bf16.mxu0 %v926
    %1433 = vmatpush1.bf16.msra.mxu0 %v925
    %1434 = vmatprep.subr.bf16.mxu0 %v930
    %1435 = vmatpush1.bf16.msra.mxu0 %v929
    %1436 = vmatprep.subr.bf16.mxu0 %v934
    %1437 = vmatpush1.bf16.msra.mxu0 %v933
    %1438 = vmatprep.subr.bf16.mxu0 %v938
    %1439 = vmatpush1.bf16.msra.mxu0 %v937
    %1440 = vmatprep.subr.bf16.mxu0 %v942
    %1441 = vmatpush1.bf16.msra.mxu0 %v941
    %1442 = vmatprep.mubr.bf16.mxu0 %v370
    %1443 = vmatmul.mubr.bf16.gmra.mrb[0].mxu0 %v369
    %v1444 = vpop.f32.mrb[0].mxu0
    %v1445 = vadd.f32 %v1332, %v1444
    %v1446 = vpop.f32.mrb[0].mxu0
    %v1447 = vadd.f32 %v1334, %v1446
    %v1448 = vpop.f32.mrb[0].mxu0
    %v1449 = vadd.f32 %v1336, %v1448
    %v1450 = vpop.f32.mrb[0].mxu0
    %v1451 = vadd.f32 %v1338, %v1450
    %1452 = vmatprep.mubr.bf16.mxu0 %v374
    %1453 = vmatmul.mubr.bf16.gmra.mrb[0].mxu0 %v373
    %v1454 = vpop.f32.mrb[0].mxu0
    %v1455 = vadd.f32 %v1342, %v1454
    %v1456 = vpop.f32.mrb[0].mxu0
    %v1457 = vadd.f32 %v1344, %v1456
    %v1458 = vpop.f32.mrb[0].mxu0
    %v1459 = vadd.f32 %v1346, %v1458
    %v1460 = vpop.f32.mrb[0].mxu0
    %v1461 = vadd.f32 %v1348, %v1460
    %1462 = vmatprep.mubr.bf16.mxu0 %v378
    %1463 = vmatmul.mubr.bf16.gmra.mrb[0].mxu0 %v377
    %v1464 = vpop.f32.mrb[0].mxu0
    %v1465 = vadd.f32 %v1352, %v1464
    %v1466 = vpop.f32.mrb[0].mxu0
    %v1467 = vadd.f32 %v1354, %v1466
    %v1468 = vpop.f32.mrb[0].mxu0
    %v1469 = vadd.f32 %v1356, %v1468
    %v1470 = vpop.f32.mrb[0].mxu0
    %v1471 = vadd.f32 %v1358, %v1470
    %1472 = vmatprep.mubr.bf16.mxu0 %v382
    %1473 = vmatmul.mubr.bf16.gmra.mrb[0].mxu0 %v381
    %v1474 = vpop.f32.mrb[0].mxu0
    %v1475 = vadd.f32 %v1362, %v1474
    %v1476 = vpop.f32.mrb[0].mxu0
    %v1477 = vadd.f32 %v1364, %v1476
    %v1478 = vpop.f32.mrb[0].mxu0
    %v1479 = vadd.f32 %v1366, %v1478
    %v1480 = vpop.f32.mrb[0].mxu0
    %v1481 = vadd.f32 %v1368, %v1480
    %1482 = vmatprep.mubr.bf16.mxu0 %v386
    %1483 = vmatmul.mubr.bf16.gmra.mrb[0].mxu0 %v385
    %v1484 = vpop.f32.mrb[0].mxu0
    %v1485 = vadd.f32 %v1372, %v1484
    %v1486 = vpop.f32.mrb[0].mxu0
    %v1487 = vadd.f32 %v1374, %v1486
    %v1488 = vpop.f32.mrb[0].mxu0
    %v1489 = vadd.f32 %v1376, %v1488
    %v1490 = vpop.f32.mrb[0].mxu0
    %v1491 = vadd.f32 %v1378, %v1490
    %1492 = vmatprep.mubr.bf16.mxu0 %v390
    %1493 = vmatmul.mubr.bf16.gmra.mrb[0].mxu0 %v389
    %v1494 = vpop.f32.mrb[0].mxu0
    %v1495 = vadd.f32 %v1382, %v1494
    %v1496 = vpop.f32.mrb[0].mxu0
    %v1497 = vadd.f32 %v1384, %v1496
    %v1498 = vpop.f32.mrb[0].mxu0
    %v1499 = vadd.f32 %v1386, %v1498
    %v1500 = vpop.f32.mrb[0].mxu0
    %v1501 = vadd.f32 %v1388, %v1500
    %1502 = vmatprep.mubr.bf16.mxu0 %v394
    %1503 = vmatmul.mubr.bf16.gmra.mrb[0].mxu0 %v393
    %v1504 = vpop.f32.mrb[0].mxu0
    %v1505 = vadd.f32 %v1392, %v1504
    %v1506 = vpop.f32.mrb[0].mxu0
    %v1507 = vadd.f32 %v1394, %v1506
    %v1508 = vpop.f32.mrb[0].mxu0
    %v1509 = vadd.f32 %v1396, %v1508
    %v1510 = vpop.f32.mrb[0].mxu0
    %v1511 = vadd.f32 %v1398, %v1510
    %1512 = vmatprep.mubr.bf16.mxu0 %v398
    %1513 = vmatmul.mubr.bf16.gmra.mrb[0].mxu0 %v397
    %v1514 = vpop.f32.mrb[0].mxu0
    %v1515 = vadd.f32 %v1402, %v1514
    %v1516 = vpop.f32.mrb[0].mxu0
    %v1517 = vadd.f32 %v1404, %v1516
    %v1518 = vpop.f32.mrb[0].mxu0
    %v1519 = vadd.f32 %v1406, %v1518
    %v1520 = vpop.f32.mrb[0].mxu0
    %v1521 = vadd.f32 %v1408, %v1520
    %1522 = vdwg.mxu0
    %v1523 = vld [vmem:[%s2] sm:$0xff]
    %v1524 = vld [vmem:[%s2 + $0x8] sm:$0xff]
    %v1525 = vld [vmem:[#allocation8] sm:$0xff]
    %v1526 = vld [vmem:[#allocation8 + $0x8] sm:$0xff]
    %v1527 = vld [vmem:[#allocation8 + $0x10] sm:$0xff]
    %v1528 = vld [vmem:[#allocation8 + $0x18] sm:$0xff]
    %v1529 = vld [vmem:[#allocation8 + $0x20] sm:$0xff]
    %v1530 = vld [vmem:[#allocation8 + $0x28] sm:$0xff]
    %v1531 = vld [vmem:[#allocation8 + $0x30] sm:$0xff]
    %v1532 = vld [vmem:[#allocation8 + $0x38] sm:$0xff]
    %v1533 = vld [vmem:[#allocation8 + $0x40] sm:$0xff]
    %v1534 = vld [vmem:[#allocation8 + $0x48] sm:$0xff]
    %v1535 = vld [vmem:[#allocation8 + $0x50] sm:$0xff]
    %v1536 = vld [vmem:[#allocation8 + $0x58] sm:$0xff]
    %v1537 = vld [vmem:[#allocation8 + $0x60] sm:$0xff]
    %v1538 = vld [vmem:[#allocation8 + $0x68] sm:$0xff]
    %v1539 = vld [vmem:[#allocation8 + $0x70] sm:$0xff]
    %v1540 = vld [vmem:[#allocation8 + $0x78] sm:$0xff]
    %v1541 = vld [vmem:[#allocation8 + $0x80] sm:$0xff]
    %v1542 = vld [vmem:[#allocation8 + $0x88] sm:$0xff]
    %v1543 = vld [vmem:[#allocation8 + $0x90] sm:$0xff]
    %v1544 = vld [vmem:[#allocation8 + $0x98] sm:$0xff]
    %v1545 = vld [vmem:[#allocation8 + $0xa0] sm:$0xff]
    %v1546 = vld [vmem:[#allocation8 + $0xa8] sm:$0xff]
    %v1547 = vld [vmem:[#allocation8 + $0xb0] sm:$0xff]
    %v1548 = vld [vmem:[#allocation8 + $0xb8] sm:$0xff]
    %v1549 = vld [vmem:[#allocation8 + $0xc0] sm:$0xff]
    %v1550 = vld [vmem:[#allocation8 + $0xc8] sm:$0xff]
    %v1551 = vld [vmem:[#allocation8 + $0xd0] sm:$0xff]
    %v1552 = vld [vmem:[#allocation8 + $0xd8] sm:$0xff]
    %v1553 = vld [vmem:[#allocation8 + $0xe0] sm:$0xff]
    %v1554 = vld [vmem:[#allocation8 + $0xe8] sm:$0xff]
    %v1555 = vld [vmem:[#allocation8 + $0xf0] sm:$0xff]
    %v1556 = vld [vmem:[#allocation8 + $0xf8] sm:$0xff]
    %v1557 = vld [vmem:[#allocation8 + $0x100] sm:$0xff]
    %v1558 = vld [vmem:[#allocation8 + $0x108] sm:$0xff]
    %v1559 = vld [vmem:[#allocation8 + $0x110] sm:$0xff]
    %v1560 = vld [vmem:[#allocation8 + $0x118] sm:$0xff]
    %v1561 = vld [vmem:[#allocation8 + $0x120] sm:$0xff]
    %v1562 = vld [vmem:[#allocation8 + $0x128] sm:$0xff]
    %v1563 = vld [vmem:[#allocation8 + $0x130] sm:$0xff]
    %v1564 = vld [vmem:[#allocation8 + $0x138] sm:$0xff]
    %v1565 = vld [vmem:[#allocation8 + $0x140] sm:$0xff]
    %v1566 = vld [vmem:[#allocation8 + $0x148] sm:$0xff]
    %v1567 = vld [vmem:[#allocation8 + $0x150] sm:$0xff]
    %v1568 = vld [vmem:[#allocation8 + $0x158] sm:$0xff]
    %v1569 = vld [vmem:[#allocation8 + $0x160] sm:$0xff]
    %v1570 = vld [vmem:[#allocation8 + $0x168] sm:$0xff]
    %v1571 = vld [vmem:[#allocation8 + $0x170] sm:$0xff]
    %v1572 = vld [vmem:[#allocation8 + $0x178] sm:$0xff]
    %v1573 = vld [vmem:[#allocation8 + $0x180] sm:$0xff]
    %v1574 = vld [vmem:[#allocation8 + $0x188] sm:$0xff]
    %v1575 = vld [vmem:[#allocation8 + $0x190] sm:$0xff]
    %v1576 = vld [vmem:[#allocation8 + $0x198] sm:$0xff]
    %v1577 = vld [vmem:[#allocation8 + $0x1a0] sm:$0xff]
    %v1578 = vld [vmem:[#allocation8 + $0x1a8] sm:$0xff]
    %v1579 = vld [vmem:[#allocation8 + $0x1b0] sm:$0xff]
    %v1580 = vld [vmem:[#allocation8 + $0x1b8] sm:$0xff]
    %v1581 = vld [vmem:[#allocation8 + $0x1c0] sm:$0xff]
    %v1582 = vld [vmem:[#allocation8 + $0x1c8] sm:$0xff]
    %v1583 = vld [vmem:[#allocation8 + $0x1d0] sm:$0xff]
    %v1584 = vld [vmem:[#allocation8 + $0x1d8] sm:$0xff]
    %v1585 = vld [vmem:[#allocation8 + $0x1e0] sm:$0xff]
    %v1586 = vld [vmem:[#allocation8 + $0x1e8] sm:$0xff]
    %v1587 = vld [vmem:[#allocation8 + $0x1f0] sm:$0xff]
    %v1588 = vld [vmem:[#allocation8 + $0x1f8] sm:$0xff]
    %v1589 = vld [vmem:[#allocation8 + $0x200] sm:$0xff]
    %v1590 = vld [vmem:[#allocation8 + $0x208] sm:$0xff]
    %v1591 = vld [vmem:[#allocation8 + $0x210] sm:$0xff]
    %v1592 = vld [vmem:[#allocation8 + $0x218] sm:$0xff]
    %v1593 = vld [vmem:[#allocation8 + $0x220] sm:$0xff]
    %v1594 = vld [vmem:[#allocation8 + $0x228] sm:$0xff]
    %v1595 = vld [vmem:[#allocation8 + $0x230] sm:$0xff]
    %v1596 = vld [vmem:[#allocation8 + $0x238] sm:$0xff]
    %v1597 = vld [vmem:[#allocation8 + $0x240] sm:$0xff]
    %v1598 = vld [vmem:[#allocation8 + $0x248] sm:$0xff]
    %v1599 = vld [vmem:[#allocation8 + $0x250] sm:$0xff]
    %v1600 = vld [vmem:[#allocation8 + $0x258] sm:$0xff]
    %v1601 = vld [vmem:[#allocation8 + $0x260] sm:$0xff]
    %v1602 = vld [vmem:[#allocation8 + $0x268] sm:$0xff]
    %v1603 = vld [vmem:[#allocation8 + $0x270] sm:$0xff]
    %v1604 = vld [vmem:[#allocation8 + $0x278] sm:$0xff]
    %v1605 = vld [vmem:[#allocation8 + $0x280] sm:$0xff]
    %v1606 = vld [vmem:[#allocation8 + $0x288] sm:$0xff]
    %v1607 = vld [vmem:[#allocation8 + $0x290] sm:$0xff]
    %v1608 = vld [vmem:[#allocation8 + $0x298] sm:$0xff]
    %v1609 = vld [vmem:[#allocation8 + $0x2a0] sm:$0xff]
    %v1610 = vld [vmem:[#allocation8 + $0x2a8] sm:$0xff]
    %v1611 = vld [vmem:[#allocation8 + $0x2b0] sm:$0xff]
    %v1612 = vld [vmem:[#allocation8 + $0x2b8] sm:$0xff]
    %v1613 = vld [vmem:[#allocation8 + $0x2c0] sm:$0xff]
    %v1614 = vld [vmem:[#allocation8 + $0x2c8] sm:$0xff]
    %v1615 = vld [vmem:[#allocation8 + $0x2d0] sm:$0xff]
    %v1616 = vld [vmem:[#allocation8 + $0x2d8] sm:$0xff]
    %v1617 = vld [vmem:[#allocation8 + $0x2e0] sm:$0xff]
    %v1618 = vld [vmem:[#allocation8 + $0x2e8] sm:$0xff]
    %v1619 = vld [vmem:[#allocation8 + $0x2f0] sm:$0xff]
    %v1620 = vld [vmem:[#allocation8 + $0x2f8] sm:$0xff]
    %v1621 = vld [vmem:[#allocation8 + $0x300] sm:$0xff]
    %v1622 = vld [vmem:[#allocation8 + $0x308] sm:$0xff]
    %v1623 = vld [vmem:[#allocation8 + $0x310] sm:$0xff]
    %v1624 = vld [vmem:[#allocation8 + $0x318] sm:$0xff]
    %v1625 = vld [vmem:[#allocation8 + $0x320] sm:$0xff]
    %v1626 = vld [vmem:[#allocation8 + $0x328] sm:$0xff]
    %v1627 = vld [vmem:[#allocation8 + $0x330] sm:$0xff]
    %v1628 = vld [vmem:[#allocation8 + $0x338] sm:$0xff]
    %v1629 = vld [vmem:[#allocation8 + $0x340] sm:$0xff]
    %v1630 = vld [vmem:[#allocation8 + $0x348] sm:$0xff]
    %v1631 = vld [vmem:[#allocation8 + $0x350] sm:$0xff]
    %v1632 = vld [vmem:[#allocation8 + $0x358] sm:$0xff]
    %v1633 = vld [vmem:[#allocation8 + $0x360] sm:$0xff]
    %v1634 = vld [vmem:[#allocation8 + $0x368] sm:$0xff]
    %v1635 = vld [vmem:[#allocation8 + $0x370] sm:$0xff]
    %v1636 = vld [vmem:[#allocation8 + $0x378] sm:$0xff]
    %v1637 = vld [vmem:[#allocation8 + $0x380] sm:$0xff]
    %v1638 = vld [vmem:[#allocation8 + $0x388] sm:$0xff]
    %v1639 = vld [vmem:[#allocation8 + $0x390] sm:$0xff]
    %v1640 = vld [vmem:[#allocation8 + $0x398] sm:$0xff]
    %v1641 = vld [vmem:[#allocation8 + $0x3a0] sm:$0xff]
    %v1642 = vld [vmem:[#allocation8 + $0x3a8] sm:$0xff]
    %v1643 = vld [vmem:[#allocation8 + $0x3b0] sm:$0xff]
    %v1644 = vld [vmem:[#allocation8 + $0x3b8] sm:$0xff]
    %v1645 = vld [vmem:[#allocation8 + $0x3c0] sm:$0xff]
    %v1646 = vld [vmem:[#allocation8 + $0x3c8] sm:$0xff]
    %v1647 = vld [vmem:[#allocation8 + $0x3d0] sm:$0xff]
    %v1648 = vld [vmem:[#allocation8 + $0x3d8] sm:$0xff]
    %v1649 = vld [vmem:[#allocation8 + $0x3e0] sm:$0xff]
    %v1650 = vld [vmem:[#allocation8 + $0x3e8] sm:$0xff]
    %v1651 = vld [vmem:[#allocation8 + $0x3f0] sm:$0xff]
    %v1652 = vld [vmem:[#allocation8 + $0x3f8] sm:$0xff]
    %v1653 = vld [vmem:[%s6] sm:$0xf]
    %v1655 = vlaneseq
    %v1656 = vshrl.u32 %v1655, 7
    %v1657 = vsub.s32 0, %v1656
    %v1658 = vrot.slane %v1653, %v1657
    %v1659 = vlaneseq
    %v1660 = vshrl.u32 %v1659, 7
    %v1661 = vsub.s32 1, %v1660
    %v1662 = vrot.slane %v1653, %v1661
    %v1663 = vlaneseq
    %v1664 = vshrl.u32 %v1663, 7
    %v1665 = vsub.s32 2, %v1664
    %v1666 = vrot.slane %v1653, %v1665
    %v1667 = vlaneseq
    %v1668 = vshrl.u32 %v1667, 7
    %v1669 = vsub.s32 3, %v1668
    %v1670 = vrot.slane %v1653, %v1669
    %v1677 = vunpack.c.l.b16 %v1523
    %v1678 = vunpack.c.h.b16 %v1523
    %v1679 = vunpack.c.l.b16 %v1524
    %v1680 = vunpack.c.h.b16 %v1524
    %v1681 = vpack.c.b16 %v1677, %v1677
    %v1682 = vpack.c.b16 %v1678, %v1678
    %v1683 = vpack.c.b16 %v1679, %v1679
    %v1684 = vpack.c.b16 %v1680, %v1680
    %v1817 = vunpack.c.l.b16 %v1525
    %v1818 = vunpack.c.h.b16 %v1525
    %v1819 = vunpack.c.l.b16 %v1526
    %v1820 = vunpack.c.h.b16 %v1526
    %v1821 = vunpack.c.l.b16 %v1527
    %v1822 = vunpack.c.h.b16 %v1527
    %v1823 = vunpack.c.l.b16 %v1528
    %v1824 = vunpack.c.h.b16 %v1528
    %v1825 = vunpack.c.l.b16 %v1529
    %v1826 = vunpack.c.h.b16 %v1529
    %v1827 = vunpack.c.l.b16 %v1530
    %v1828 = vunpack.c.h.b16 %v1530
    %v1829 = vunpack.c.l.b16 %v1531
    %v1830 = vunpack.c.h.b16 %v1531
    %v1831 = vunpack.c.l.b16 %v1532
    %v1832 = vunpack.c.h.b16 %v1532
    %v1833 = vunpack.c.l.b16 %v1533
    %v1834 = vunpack.c.h.b16 %v1533
    %v1835 = vunpack.c.l.b16 %v1534
    %v1836 = vunpack.c.h.b16 %v1534
    %v1837 = vunpack.c.l.b16 %v1535
    %v1838 = vunpack.c.h.b16 %v1535
    %v1839 = vunpack.c.l.b16 %v1536
    %v1840 = vunpack.c.h.b16 %v1536
    %v1841 = vunpack.c.l.b16 %v1537
    %v1842 = vunpack.c.h.b16 %v1537
    %v1843 = vunpack.c.l.b16 %v1538
    %v1844 = vunpack.c.h.b16 %v1538
    %v1845 = vunpack.c.l.b16 %v1539
    %v1846 = vunpack.c.h.b16 %v1539
    %v1847 = vunpack.c.l.b16 %v1540
    %v1848 = vunpack.c.h.b16 %v1540
    %v1849 = vunpack.c.l.b16 %v1541
    %v1850 = vunpack.c.h.b16 %v1541
    %v1851 = vunpack.c.l.b16 %v1542
    %v1852 = vunpack.c.h.b16 %v1542
    %v1853 = vunpack.c.l.b16 %v1543
    %v1854 = vunpack.c.h.b16 %v1543
    %v1855 = vunpack.c.l.b16 %v1544
    %v1856 = vunpack.c.h.b16 %v1544
    %v1857 = vunpack.c.l.b16 %v1545
    %v1858 = vunpack.c.h.b16 %v1545
    %v1859 = vunpack.c.l.b16 %v1546
    %v1860 = vunpack.c.h.b16 %v1546
    %v1861 = vunpack.c.l.b16 %v1547
    %v1862 = vunpack.c.h.b16 %v1547
    %v1863 = vunpack.c.l.b16 %v1548
    %v1864 = vunpack.c.h.b16 %v1548
    %v1865 = vunpack.c.l.b16 %v1549
    %v1866 = vunpack.c.h.b16 %v1549
    %v1867 = vunpack.c.l.b16 %v1550
    %v1868 = vunpack.c.h.b16 %v1550
    %v1869 = vunpack.c.l.b16 %v1551
    %v1870 = vunpack.c.h.b16 %v1551
    %v1871 = vunpack.c.l.b16 %v1552
    %v1872 = vunpack.c.h.b16 %v1552
    %v1873 = vunpack.c.l.b16 %v1553
    %v1874 = vunpack.c.h.b16 %v1553
    %v1875 = vunpack.c.l.b16 %v1554
    %v1876 = vunpack.c.h.b16 %v1554
    %v1877 = vunpack.c.l.b16 %v1555
    %v1878 = vunpack.c.h.b16 %v1555
    %v1879 = vunpack.c.l.b16 %v1556
    %v1880 = vunpack.c.h.b16 %v1556
    %v1881 = vunpack.c.l.b16 %v1557
    %v1882 = vunpack.c.h.b16 %v1557
    %v1883 = vunpack.c.l.b16 %v1558
    %v1884 = vunpack.c.h.b16 %v1558
    %v1885 = vunpack.c.l.b16 %v1559
    %v1886 = vunpack.c.h.b16 %v1559
    %v1887 = vunpack.c.l.b16 %v1560
    %v1888 = vunpack.c.h.b16 %v1560
    %v1889 = vunpack.c.l.b16 %v1561
    %v1890 = vunpack.c.h.b16 %v1561
    %v1891 = vunpack.c.l.b16 %v1562
    %v1892 = vunpack.c.h.b16 %v1562
    %v1893 = vunpack.c.l.b16 %v1563
    %v1894 = vunpack.c.h.b16 %v1563
    %v1895 = vunpack.c.l.b16 %v1564
    %v1896 = vunpack.c.h.b16 %v1564
    %v1897 = vunpack.c.l.b16 %v1565
    %v1898 = vunpack.c.h.b16 %v1565
    %v1899 = vunpack.c.l.b16 %v1566
    %v1900 = vunpack.c.h.b16 %v1566
    %v1901 = vunpack.c.l.b16 %v1567
    %v1902 = vunpack.c.h.b16 %v1567
    %v1903 = vunpack.c.l.b16 %v1568
    %v1904 = vunpack.c.h.b16 %v1568
    %v1905 = vunpack.c.l.b16 %v1569
    %v1906 = vunpack.c.h.b16 %v1569
    %v1907 = vunpack.c.l.b16 %v1570
    %v1908 = vunpack.c.h.b16 %v1570
    %v1909 = vunpack.c.l.b16 %v1571
    %v1910 = vunpack.c.h.b16 %v1571
    %v1911 = vunpack.c.l.b16 %v1572
    %v1912 = vunpack.c.h.b16 %v1572
    %v1913 = vunpack.c.l.b16 %v1573
    %v1914 = vunpack.c.h.b16 %v1573
    %v1915 = vunpack.c.l.b16 %v1574
    %v1916 = vunpack.c.h.b16 %v1574
    %v1917 = vunpack.c.l.b16 %v1575
    %v1918 = vunpack.c.h.b16 %v1575
    %v1919 = vunpack.c.l.b16 %v1576
    %v1920 = vunpack.c.h.b16 %v1576
    %v1921 = vunpack.c.l.b16 %v1577
    %v1922 = vunpack.c.h.b16 %v1577
    %v1923 = vunpack.c.l.b16 %v1578
    %v1924 = vunpack.c.h.b16 %v1578
    %v1925 = vunpack.c.l.b16 %v1579
    %v1926 = vunpack.c.h.b16 %v1579
    %v1927 = vunpack.c.l.b16 %v1580
    %v1928 = vunpack.c.h.b16 %v1580
    %v1929 = vunpack.c.l.b16 %v1581
    %v1930 = vunpack.c.h.b16 %v1581
    %v1931 = vunpack.c.l.b16 %v1582
    %v1932 = vunpack.c.h.b16 %v1582
    %v1933 = vunpack.c.l.b16 %v1583
    %v1934 = vunpack.c.h.b16 %v1583
    %v1935 = vunpack.c.l.b16 %v1584
    %v1936 = vunpack.c.h.b16 %v1584
    %v1937 = vunpack.c.l.b16 %v1585
    %v1938 = vunpack.c.h.b16 %v1585
    %v1939 = vunpack.c.l.b16 %v1586
    %v1940 = vunpack.c.h.b16 %v1586
    %v1941 = vunpack.c.l.b16 %v1587
    %v1942 = vunpack.c.h.b16 %v1587
    %v1943 = vunpack.c.l.b16 %v1588
    %v1944 = vunpack.c.h.b16 %v1588
    %v1945 = vunpack.c.l.b16 %v1589
    %v1946 = vunpack.c.h.b16 %v1589
    %v1947 = vunpack.c.l.b16 %v1590
    %v1948 = vunpack.c.h.b16 %v1590
    %v1949 = vunpack.c.l.b16 %v1591
    %v1950 = vunpack.c.h.b16 %v1591
    %v1951 = vunpack.c.l.b16 %v1592
    %v1952 = vunpack.c.h.b16 %v1592
    %v1953 = vunpack.c.l.b16 %v1593
    %v1954 = vunpack.c.h.b16 %v1593
    %v1955 = vunpack.c.l.b16 %v1594
    %v1956 = vunpack.c.h.b16 %v1594
    %v1957 = vunpack.c.l.b16 %v1595
    %v1958 = vunpack.c.h.b16 %v1595
    %v1959 = vunpack.c.l.b16 %v1596
    %v1960 = vunpack.c.h.b16 %v1596
    %v1961 = vunpack.c.l.b16 %v1597
    %v1962 = vunpack.c.h.b16 %v1597
    %v1963 = vunpack.c.l.b16 %v1598
    %v1964 = vunpack.c.h.b16 %v1598
    %v1965 = vunpack.c.l.b16 %v1599
    %v1966 = vunpack.c.h.b16 %v1599
    %v1967 = vunpack.c.l.b16 %v1600
    %v1968 = vunpack.c.h.b16 %v1600
    %v1969 = vunpack.c.l.b16 %v1601
    %v1970 = vunpack.c.h.b16 %v1601
    %v1971 = vunpack.c.l.b16 %v1602
    %v1972 = vunpack.c.h.b16 %v1602
    %v1973 = vunpack.c.l.b16 %v1603
    %v1974 = vunpack.c.h.b16 %v1603
    %v1975 = vunpack.c.l.b16 %v1604
    %v1976 = vunpack.c.h.b16 %v1604
    %v1977 = vunpack.c.l.b16 %v1605
    %v1978 = vunpack.c.h.b16 %v1605
    %v1979 = vunpack.c.l.b16 %v1606
    %v1980 = vunpack.c.h.b16 %v1606
    %v1981 = vunpack.c.l.b16 %v1607
    %v1982 = vunpack.c.h.b16 %v1607
    %v1983 = vunpack.c.l.b16 %v1608
    %v1984 = vunpack.c.h.b16 %v1608
    %v1985 = vunpack.c.l.b16 %v1609
    %v1986 = vunpack.c.h.b16 %v1609
    %v1987 = vunpack.c.l.b16 %v1610
    %v1988 = vunpack.c.h.b16 %v1610
    %v1989 = vunpack.c.l.b16 %v1611
    %v1990 = vunpack.c.h.b16 %v1611
    %v1991 = vunpack.c.l.b16 %v1612
    %v1992 = vunpack.c.h.b16 %v1612
    %v1993 = vunpack.c.l.b16 %v1613
    %v1994 = vunpack.c.h.b16 %v1613
    %v1995 = vunpack.c.l.b16 %v1614
    %v1996 = vunpack.c.h.b16 %v1614
    %v1997 = vunpack.c.l.b16 %v1615
    %v1998 = vunpack.c.h.b16 %v1615
    %v1999 = vunpack.c.l.b16 %v1616
    %v2000 = vunpack.c.h.b16 %v1616
    %v2001 = vunpack.c.l.b16 %v1617
    %v2002 = vunpack.c.h.b16 %v1617
    %v2003 = vunpack.c.l.b16 %v1618
    %v2004 = vunpack.c.h.b16 %v1618
    %v2005 = vunpack.c.l.b16 %v1619
    %v2006 = vunpack.c.h.b16 %v1619
    %v2007 = vunpack.c.l.b16 %v1620
    %v2008 = vunpack.c.h.b16 %v1620
    %v2009 = vunpack.c.l.b16 %v1621
    %v2010 = vunpack.c.h.b16 %v1621
    %v2011 = vunpack.c.l.b16 %v1622
    %v2012 = vunpack.c.h.b16 %v1622
    %v2013 = vunpack.c.l.b16 %v1623
    %v2014 = vunpack.c.h.b16 %v1623
    %v2015 = vunpack.c.l.b16 %v1624
    %v2016 = vunpack.c.h.b16 %v1624
    %v2017 = vunpack.c.l.b16 %v1625
    %v2018 = vunpack.c.h.b16 %v1625
    %v2019 = vunpack.c.l.b16 %v1626
    %v2020 = vunpack.c.h.b16 %v1626
    %v2021 = vunpack.c.l.b16 %v1627
    %v2022 = vunpack.c.h.b16 %v1627
    %v2023 = vunpack.c.l.b16 %v1628
    %v2024 = vunpack.c.h.b16 %v1628
    %v2025 = vunpack.c.l.b16 %v1629
    %v2026 = vunpack.c.h.b16 %v1629
    %v2027 = vunpack.c.l.b16 %v1630
    %v2028 = vunpack.c.h.b16 %v1630
    %v2029 = vunpack.c.l.b16 %v1631
    %v2030 = vunpack.c.h.b16 %v1631
    %v2031 = vunpack.c.l.b16 %v1632
    %v2032 = vunpack.c.h.b16 %v1632
    %v2033 = vunpack.c.l.b16 %v1633
    %v2034 = vunpack.c.h.b16 %v1633
    %v2035 = vunpack.c.l.b16 %v1634
    %v2036 = vunpack.c.h.b16 %v1634
    %v2037 = vunpack.c.l.b16 %v1635
    %v2038 = vunpack.c.h.b16 %v1635
    %v2039 = vunpack.c.l.b16 %v1636
    %v2040 = vunpack.c.h.b16 %v1636
    %v2041 = vunpack.c.l.b16 %v1637
    %v2042 = vunpack.c.h.b16 %v1637
    %v2043 = vunpack.c.l.b16 %v1638
    %v2044 = vunpack.c.h.b16 %v1638
    %v2045 = vunpack.c.l.b16 %v1639
    %v2046 = vunpack.c.h.b16 %v1639
    %v2047 = vunpack.c.l.b16 %v1640
    %v2048 = vunpack.c.h.b16 %v1640
    %v2049 = vunpack.c.l.b16 %v1641
    %v2050 = vunpack.c.h.b16 %v1641
    %v2051 = vunpack.c.l.b16 %v1642
    %v2052 = vunpack.c.h.b16 %v1642
    %v2053 = vunpack.c.l.b16 %v1643
    %v2054 = vunpack.c.h.b16 %v1643
    %v2055 = vunpack.c.l.b16 %v1644
    %v2056 = vunpack.c.h.b16 %v1644
    %v2057 = vunpack.c.l.b16 %v1645
    %v2058 = vunpack.c.h.b16 %v1645
    %v2059 = vunpack.c.l.b16 %v1646
    %v2060 = vunpack.c.h.b16 %v1646
    %v2061 = vunpack.c.l.b16 %v1647
    %v2062 = vunpack.c.h.b16 %v1647
    %v2063 = vunpack.c.l.b16 %v1648
    %v2064 = vunpack.c.h.b16 %v1648
    %v2065 = vunpack.c.l.b16 %v1649
    %v2066 = vunpack.c.h.b16 %v1649
    %v2067 = vunpack.c.l.b16 %v1650
    %v2068 = vunpack.c.h.b16 %v1650
    %v2069 = vunpack.c.l.b16 %v1651
    %v2070 = vunpack.c.h.b16 %v1651
    %v2071 = vunpack.c.l.b16 %v1652
    %v2072 = vunpack.c.h.b16 %v1652
    %v2073 = vpack.c.b16 %v1821, %v1817
    %v2074 = vpack.c.b16 %v1822, %v1818
    %v2075 = vpack.c.b16 %v1823, %v1819
    %v2076 = vpack.c.b16 %v1824, %v1820
    %v2077 = vpack.c.b16 %v1829, %v1825
    %v2078 = vpack.c.b16 %v1830, %v1826
    %v2079 = vpack.c.b16 %v1831, %v1827
    %v2080 = vpack.c.b16 %v1832, %v1828
    %v2081 = vpack.c.b16 %v1837, %v1833
    %v2082 = vpack.c.b16 %v1838, %v1834
    %v2083 = vpack.c.b16 %v1839, %v1835
    %v2084 = vpack.c.b16 %v1840, %v1836
    %v2085 = vpack.c.b16 %v1845, %v1841
    %v2086 = vpack.c.b16 %v1846, %v1842
    %v2087 = vpack.c.b16 %v1847, %v1843
    %v2088 = vpack.c.b16 %v1848, %v1844
    %v2089 = vpack.c.b16 %v1853, %v1849
    %v2090 = vpack.c.b16 %v1854, %v1850
    %v2091 = vpack.c.b16 %v1855, %v1851
    %v2092 = vpack.c.b16 %v1856, %v1852
    %v2093 = vpack.c.b16 %v1861, %v1857
    %v2094 = vpack.c.b16 %v1862, %v1858
    %v2095 = vpack.c.b16 %v1863, %v1859
    %v2096 = vpack.c.b16 %v1864, %v1860
    %v2097 = vpack.c.b16 %v1869, %v1865
    %v2098 = vpack.c.b16 %v1870, %v1866
    %v2099 = vpack.c.b16 %v1871, %v1867
    %v2100 = vpack.c.b16 %v1872, %v1868
    %v2101 = vpack.c.b16 %v1877, %v1873
    %v2102 = vpack.c.b16 %v1878, %v1874
    %v2103 = vpack.c.b16 %v1879, %v1875
    %v2104 = vpack.c.b16 %v1880, %v1876
    %v2105 = vpack.c.b16 %v1885, %v1881
    %v2106 = vpack.c.b16 %v1886, %v1882
    %v2107 = vpack.c.b16 %v1887, %v1883
    %v2108 = vpack.c.b16 %v1888, %v1884
    %v2109 = vpack.c.b16 %v1893, %v1889
    %v2110 = vpack.c.b16 %v1894, %v1890
    %v2111 = vpack.c.b16 %v1895, %v1891
    %v2112 = vpack.c.b16 %v1896, %v1892
    %v2113 = vpack.c.b16 %v1901, %v1897
    %v2114 = vpack.c.b16 %v1902, %v1898
    %v2115 = vpack.c.b16 %v1903, %v1899
    %v2116 = vpack.c.b16 %v1904, %v1900
    %v2117 = vpack.c.b16 %v1909, %v1905
    %v2118 = vpack.c.b16 %v1910, %v1906
    %v2119 = vpack.c.b16 %v1911, %v1907
    %v2120 = vpack.c.b16 %v1912, %v1908
    %v2121 = vpack.c.b16 %v1917, %v1913
    %v2122 = vpack.c.b16 %v1918, %v1914
    %v2123 = vpack.c.b16 %v1919, %v1915
    %v2124 = vpack.c.b16 %v1920, %v1916
    %v2125 = vpack.c.b16 %v1925, %v1921
    %v2126 = vpack.c.b16 %v1926, %v1922
    %v2127 = vpack.c.b16 %v1927, %v1923
    %v2128 = vpack.c.b16 %v1928, %v1924
    %v2129 = vpack.c.b16 %v1933, %v1929
    %v2130 = vpack.c.b16 %v1934, %v1930
    %v2131 = vpack.c.b16 %v1935, %v1931
    %v2132 = vpack.c.b16 %v1936, %v1932
    %v2133 = vpack.c.b16 %v1941, %v1937
    %v2134 = vpack.c.b16 %v1942, %v1938
    %v2135 = vpack.c.b16 %v1943, %v1939
    %v2136 = vpack.c.b16 %v1944, %v1940
    %v2137 = vpack.c.b16 %v1949, %v1945
    %v2138 = vpack.c.b16 %v1950, %v1946
    %v2139 = vpack.c.b16 %v1951, %v1947
    %v2140 = vpack.c.b16 %v1952, %v1948
    %v2141 = vpack.c.b16 %v1957, %v1953
    %v2142 = vpack.c.b16 %v1958, %v1954
    %v2143 = vpack.c.b16 %v1959, %v1955
    %v2144 = vpack.c.b16 %v1960, %v1956
    %v2145 = vpack.c.b16 %v1965, %v1961
    %v2146 = vpack.c.b16 %v1966, %v1962
    %v2147 = vpack.c.b16 %v1967, %v1963
    %v2148 = vpack.c.b16 %v1968, %v1964
    %v2149 = vpack.c.b16 %v1973, %v1969
    %v2150 = vpack.c.b16 %v1974, %v1970
    %v2151 = vpack.c.b16 %v1975, %v1971
    %v2152 = vpack.c.b16 %v1976, %v1972
    %v2153 = vpack.c.b16 %v1981, %v1977
    %v2154 = vpack.c.b16 %v1982, %v1978
    %v2155 = vpack.c.b16 %v1983, %v1979
    %v2156 = vpack.c.b16 %v1984, %v1980
    %v2157 = vpack.c.b16 %v1989, %v1985
    %v2158 = vpack.c.b16 %v1990, %v1986
    %v2159 = vpack.c.b16 %v1991, %v1987
    %v2160 = vpack.c.b16 %v1992, %v1988
    %v2161 = vpack.c.b16 %v1997, %v1993
    %v2162 = vpack.c.b16 %v1998, %v1994
    %v2163 = vpack.c.b16 %v1999, %v1995
    %v2164 = vpack.c.b16 %v2000, %v1996
    %v2165 = vpack.c.b16 %v2005, %v2001
    %v2166 = vpack.c.b16 %v2006, %v2002
    %v2167 = vpack.c.b16 %v2007, %v2003
    %v2168 = vpack.c.b16 %v2008, %v2004
    %v2169 = vpack.c.b16 %v2013, %v2009
    %v2170 = vpack.c.b16 %v2014, %v2010
    %v2171 = vpack.c.b16 %v2015, %v2011
    %v2172 = vpack.c.b16 %v2016, %v2012
    %v2173 = vpack.c.b16 %v2021, %v2017
    %v2174 = vpack.c.b16 %v2022, %v2018
    %v2175 = vpack.c.b16 %v2023, %v2019
    %v2176 = vpack.c.b16 %v2024, %v2020
    %v2177 = vpack.c.b16 %v2029, %v2025
    %v2178 = vpack.c.b16 %v2030, %v2026
    %v2179 = vpack.c.b16 %v2031, %v2027
    %v2180 = vpack.c.b16 %v2032, %v2028
    %v2181 = vpack.c.b16 %v2037, %v2033
    %v2182 = vpack.c.b16 %v2038, %v2034
    %v2183 = vpack.c.b16 %v2039, %v2035
    %v2184 = vpack.c.b16 %v2040, %v2036
    %v2185 = vpack.c.b16 %v2045, %v2041
    %v2186 = vpack.c.b16 %v2046, %v2042
    %v2187 = vpack.c.b16 %v2047, %v2043
    %v2188 = vpack.c.b16 %v2048, %v2044
    %v2189 = vpack.c.b16 %v2053, %v2049
    %v2190 = vpack.c.b16 %v2054, %v2050
    %v2191 = vpack.c.b16 %v2055, %v2051
    %v2192 = vpack.c.b16 %v2056, %v2052
    %v2193 = vpack.c.b16 %v2061, %v2057
    %v2194 = vpack.c.b16 %v2062, %v2058
    %v2195 = vpack.c.b16 %v2063, %v2059
    %v2196 = vpack.c.b16 %v2064, %v2060
    %v2197 = vpack.c.b16 %v2069, %v2065
    %v2198 = vpack.c.b16 %v2070, %v2066
    %v2199 = vpack.c.b16 %v2071, %v2067
    %v2200 = vpack.c.b16 %v2072, %v2068
    %2329 = vmatprep.subr.bf16.mxu0 %v2074
    %2330 = vmatpush1.bf16.msra.mxu0 %v2073
    %2331 = vmatprep.subr.bf16.mxu0 %v2078
    %2332 = vmatpush1.bf16.msra.mxu0 %v2077
    %2333 = vmatprep.subr.bf16.mxu0 %v2082
    %2334 = vmatpush1.bf16.msra.mxu0 %v2081
    %2335 = vmatprep.subr.bf16.mxu0 %v2086
    %2336 = vmatpush1.bf16.msra.mxu0 %v2085
    %2337 = vmatprep.subr.bf16.mxu0 %v2090
    %2338 = vmatpush1.bf16.msra.mxu0 %v2089
    %2339 = vmatprep.subr.bf16.mxu0 %v2094
    %2340 = vmatpush1.bf16.msra.mxu0 %v2093
    %2341 = vmatprep.subr.bf16.mxu0 %v2098
    %2342 = vmatpush1.bf16.msra.mxu0 %v2097
    %2343 = vmatprep.subr.bf16.mxu0 %v2102
    %2344 = vmatpush1.bf16.msra.mxu0 %v2101
    %2345 = vmatprep.subr.bf16.mxu0 %v2106
    %2346 = vmatpush1.bf16.msra.mxu0 %v2105
    %2347 = vmatprep.subr.bf16.mxu0 %v2110
    %2348 = vmatpush1.bf16.msra.mxu0 %v2109
    %2349 = vmatprep.subr.bf16.mxu0 %v2114
    %2350 = vmatpush1.bf16.msra.mxu0 %v2113
    %2351 = vmatprep.subr.bf16.mxu0 %v2118
    %2352 = vmatpush1.bf16.msra.mxu0 %v2117
    %2353 = vmatprep.subr.bf16.mxu0 %v2122
    %2354 = vmatpush1.bf16.msra.mxu0 %v2121
    %2355 = vmatprep.subr.bf16.mxu0 %v2126
    %2356 = vmatpush1.bf16.msra.mxu0 %v2125
    %2357 = vmatprep.subr.bf16.mxu0 %v2130
    %2358 = vmatpush1.bf16.msra.mxu0 %v2129
    %2359 = vmatprep.subr.bf16.mxu0 %v2134
    %2360 = vmatpush1.bf16.msra.mxu0 %v2133
    %2361 = vmatprep.mubr.bf16.mxu0 %v1682
    %2362 = vmatmul.mubr.bf16.gmra.mrb[0].mxu0 %v1681
    %v2363 = vpop.f32.mrb[0].mxu0
    %v2364 = vadd.f32 %v1658, %v2363
    %v2365 = vpop.f32.mrb[0].mxu0
    %v2366 = vadd.f32 %v1662, %v2365
    %v2367 = vpop.f32.mrb[0].mxu0
    %v2368 = vpop.f32.mrb[0].mxu0
    %2369 = vdwg.mxu0
    %2370 = vmatprep.subr.bf16.mxu0 %v2138
    %2371 = vmatpush1.bf16.msra.mxu0 %v2137
    %2372 = vmatprep.subr.bf16.mxu0 %v2142
    %2373 = vmatpush1.bf16.msra.mxu0 %v2141
    %2374 = vmatprep.subr.bf16.mxu0 %v2146
    %2375 = vmatpush1.bf16.msra.mxu0 %v2145
    %2376 = vmatprep.subr.bf16.mxu0 %v2150
    %2377 = vmatpush1.bf16.msra.mxu0 %v2149
    %2378 = vmatprep.subr.bf16.mxu0 %v2154
    %2379 = vmatpush1.bf16.msra.mxu0 %v2153
    %2380 = vmatprep.subr.bf16.mxu0 %v2158
    %2381 = vmatpush1.bf16.msra.mxu0 %v2157
    %2382 = vmatprep.subr.bf16.mxu0 %v2162
    %2383 = vmatpush1.bf16.msra.mxu0 %v2161
    %2384 = vmatprep.subr.bf16.mxu0 %v2166
    %2385 = vmatpush1.bf16.msra.mxu0 %v2165
    %2386 = vmatprep.subr.bf16.mxu0 %v2170
    %2387 = vmatpush1.bf16.msra.mxu0 %v2169
    %2388 = vmatprep.subr.bf16.mxu0 %v2174
    %2389 = vmatpush1.bf16.msra.mxu0 %v2173
    %2390 = vmatprep.subr.bf16.mxu0 %v2178
    %2391 = vmatpush1.bf16.msra.mxu0 %v2177
    %2392 = vmatprep.subr.bf16.mxu0 %v2182
    %2393 = vmatpush1.bf16.msra.mxu0 %v2181
    %2394 = vmatprep.subr.bf16.mxu0 %v2186
    %2395 = vmatpush1.bf16.msra.mxu0 %v2185
    %2396 = vmatprep.subr.bf16.mxu0 %v2190
    %2397 = vmatpush1.bf16.msra.mxu0 %v2189
    %2398 = vmatprep.subr.bf16.mxu0 %v2194
    %2399 = vmatpush1.bf16.msra.mxu0 %v2193
    %2400 = vmatprep.subr.bf16.mxu0 %v2198
    %2401 = vmatpush1.bf16.msra.mxu0 %v2197
    %2402 = vmatprep.mubr.bf16.mxu0 %v1684
    %2403 = vmatmul.mubr.bf16.gmra.mrb[0].mxu0 %v1683
    %v2404 = vpop.f32.mrb[0].mxu0
    %v2405 = vadd.f32 %v2364, %v2404
    %v2406 = vpop.f32.mrb[0].mxu0
    %v2407 = vadd.f32 %v2366, %v2406
    %v2408 = vpop.f32.mrb[0].mxu0
    %v2409 = vpop.f32.mrb[0].mxu0
    %2410 = vdwg.mxu0
    %2411 = vmatprep.subr.bf16.mxu0 %v2076
    %2412 = vmatpush1.bf16.msra.mxu0 %v2075
    %2413 = vmatprep.subr.bf16.mxu0 %v2080
    %2414 = vmatpush1.bf16.msra.mxu0 %v2079
    %2415 = vmatprep.subr.bf16.mxu0 %v2084
    %2416 = vmatpush1.bf16.msra.mxu0 %v2083
    %2417 = vmatprep.subr.bf16.mxu0 %v2088
    %2418 = vmatpush1.bf16.msra.mxu0 %v2087
    %2419 = vmatprep.subr.bf16.mxu0 %v2092
    %2420 = vmatpush1.bf16.msra.mxu0 %v2091
    %2421 = vmatprep.subr.bf16.mxu0 %v2096
    %2422 = vmatpush1.bf16.msra.mxu0 %v2095
    %2423 = vmatprep.subr.bf16.mxu0 %v2100
    %2424 = vmatpush1.bf16.msra.mxu0 %v2099
    %2425 = vmatprep.subr.bf16.mxu0 %v2104
    %2426 = vmatpush1.bf16.msra.mxu0 %v2103
    %2427 = vmatprep.subr.bf16.mxu0 %v2108
    %2428 = vmatpush1.bf16.msra.mxu0 %v2107
    %2429 = vmatprep.subr.bf16.mxu0 %v2112
    %2430 = vmatpush1.bf16.msra.mxu0 %v2111
    %2431 = vmatprep.subr.bf16.mxu0 %v2116
    %2432 = vmatpush1.bf16.msra.mxu0 %v2115
    %2433 = vmatprep.subr.bf16.mxu0 %v2120
    %2434 = vmatpush1.bf16.msra.mxu0 %v2119
    %2435 = vmatprep.subr.bf16.mxu0 %v2124
    %2436 = vmatpush1.bf16.msra.mxu0 %v2123
    %2437 = vmatprep.subr.bf16.mxu0 %v2128
    %2438 = vmatpush1.bf16.msra.mxu0 %v2127
    %2439 = vmatprep.subr.bf16.mxu0 %v2132
    %2440 = vmatpush1.bf16.msra.mxu0 %v2131
    %2441 = vmatprep.subr.bf16.mxu0 %v2136
    %2442 = vmatpush1.bf16.msra.mxu0 %v2135
    %2443 = vmatprep.mubr.bf16.mxu0 %v1682
    %2444 = vmatmul.mubr.bf16.gmra.mrb[0].mxu0 %v1681
    %v2445 = vpop.f32.mrb[0].mxu0
    %v2446 = vadd.f32 %v1666, %v2445
    %v2447 = vpop.f32.mrb[0].mxu0
    %v2448 = vadd.f32 %v1670, %v2447
    %v2449 = vpop.f32.mrb[0].mxu0
    %v2450 = vpop.f32.mrb[0].mxu0
    %2451 = vdwg.mxu0
    %2452 = vmatprep.subr.bf16.mxu0 %v2140
    %2453 = vmatpush1.bf16.msra.mxu0 %v2139
    %2454 = vmatprep.subr.bf16.mxu0 %v2144
    %2455 = vmatpush1.bf16.msra.mxu0 %v2143
    %2456 = vmatprep.subr.bf16.mxu0 %v2148
    %2457 = vmatpush1.bf16.msra.mxu0 %v2147
    %2458 = vmatprep.subr.bf16.mxu0 %v2152
    %2459 = vmatpush1.bf16.msra.mxu0 %v2151
    %2460 = vmatprep.subr.bf16.mxu0 %v2156
    %2461 = vmatpush1.bf16.msra.mxu0 %v2155
    %2462 = vmatprep.subr.bf16.mxu0 %v2160
    %2463 = vmatpush1.bf16.msra.mxu0 %v2159
    %2464 = vmatprep.subr.bf16.mxu0 %v2164
    %2465 = vmatpush1.bf16.msra.mxu0 %v2163
    %2466 = vmatprep.subr.bf16.mxu0 %v2168
    %2467 = vmatpush1.bf16.msra.mxu0 %v2167
    %2468 = vmatprep.subr.bf16.mxu0 %v2172
    %2469 = vmatpush1.bf16.msra.mxu0 %v2171
    %2470 = vmatprep.subr.bf16.mxu0 %v2176
    %2471 = vmatpush1.bf16.msra.mxu0 %v2175
    %2472 = vmatprep.subr.bf16.mxu0 %v2180
    %2473 = vmatpush1.bf16.msra.mxu0 %v2179
    %2474 = vmatprep.subr.bf16.mxu0 %v2184
    %2475 = vmatpush1.bf16.msra.mxu0 %v2183
    %2476 = vmatprep.subr.bf16.mxu0 %v2188
    %2477 = vmatpush1.bf16.msra.mxu0 %v2187
    %2478 = vmatprep.subr.bf16.mxu0 %v2192
    %2479 = vmatpush1.bf16.msra.mxu0 %v2191
    %2480 = vmatprep.subr.bf16.mxu0 %v2196
    %2481 = vmatpush1.bf16.msra.mxu0 %v2195
    %2482 = vmatprep.subr.bf16.mxu0 %v2200
    %2483 = vmatpush1.bf16.msra.mxu0 %v2199
    %2484 = vmatprep.mubr.bf16.mxu0 %v1684
    %2485 = vmatmul.mubr.bf16.gmra.mrb[0].mxu0 %v1683
    %v2486 = vpop.f32.mrb[0].mxu0
    %v2487 = vadd.f32 %v2446, %v2486
    %v2488 = vpop.f32.mrb[0].mxu0
    %v2489 = vadd.f32 %v2448, %v2488
    %v2490 = vpop.f32.mrb[0].mxu0
    %v2491 = vpop.f32.mrb[0].mxu0
    %2492 = vdwg.mxu0
    %v2497 = vcombine.low %v2405, %v2407
    %v2498 = vcombine.high %v2405, %v2407
    %v2499 = vcombine.low %v2487, %v2489
    %v2500 = vcombine.high %v2487, %v2489
    %v2502 = vunpack.c.l.s4 1966171168
    %v2503 = vunpack.c.0.s8 %v2502
    %v2504 = vlaneseq
    %v2505 = vshrl.u32 %v2504, 7
    %v2506 = vsub.s32 %v2503, %v2505
    %v2507 = vrot.slane %v2497, %v2506
    %v2509 = vunpack.c.l.s4 1966171168
    %v2510 = vunpack.c.0.s8 %v2509
    %v2511 = vlaneseq
    %v2512 = vshrl.u32 %v2511, 7
    %v2513 = vsub.s32 %v2510, %v2512
    %v2514 = vrot.slane %v2498, %v2513
    %v2516 = vunpack.c.l.s4 1966171168
    %v2517 = vunpack.c.0.s8 %v2516
    %v2518 = vlaneseq
    %v2519 = vshrl.u32 %v2518, 7
    %v2520 = vsub.s32 %v2517, %v2519
    %v2521 = vrot.slane %v2499, %v2520
    %v2523 = vunpack.c.l.s4 1966171168
    %v2524 = vunpack.c.0.s8 %v2523
    %v2525 = vlaneseq
    %v2526 = vshrl.u32 %v2525, 7
    %v2527 = vsub.s32 %v2524, %v2526
    %v2528 = vrot.slane %v2500, %v2527
    %v2529 = vcombine.low %v2507, %v2521
    %v2530 = vcombine.high %v2507, %v2521
    %v2531 = vcombine.low %v2514, %v2528
    %v2532 = vcombine.high %v2514, %v2528
    %v2534 = vunpack.c.l.s4 1966171168
    %v2535 = vunpack.c.0.s8 %v2534
    %v2536 = vlaneseq
    %v2537 = vshrl.u32 %v2536, 7
    %v2538 = vsub.s32 %v2535, %v2537
    %v2539 = vrot.slane %v2529, %v2538
    %v2541 = vunpack.c.l.s4 1966171168
    %v2542 = vunpack.c.0.s8 %v2541
    %v2543 = vlaneseq
    %v2544 = vshrl.u32 %v2543, 7
    %v2545 = vsub.s32 %v2542, %v2544
    %v2546 = vrot.slane %v2531, %v2545
    %v2548 = vunpack.c.l.s4 1966171168
    %v2549 = vunpack.c.0.s8 %v2548
    %v2550 = vlaneseq
    %v2551 = vshrl.u32 %v2550, 7
    %v2552 = vsub.s32 %v2549, %v2551
    %v2553 = vrot.slane %v2530, %v2552
    %v2555 = vunpack.c.l.s4 1966171168
    %v2556 = vunpack.c.0.s8 %v2555
    %v2557 = vlaneseq
    %v2558 = vshrl.u32 %v2557, 7
    %v2559 = vsub.s32 %v2556, %v2558
    %v2560 = vrot.slane %v2532, %v2559
    %v2561 = vcombine.high %v2539, %v2539
    %v2562 = vcombine.high %v2546, %v2546
    %v2563 = vcombine.high %v2553, %v2553
    %v2564 = vcombine.high %v2560, %v2560
    %v2565 = vlaneseq
    %v2566 = vshrl.u32 %v2565, 7
    %v2567 = vsub.s32 0, %v2566
    %v2568 = vrot.slane %v2539, %v2567
    %v2569 = vlaneseq
    %v2570 = vshrl.u32 %v2569, 7
    %v2571 = vsub.s32 1, %v2570
    %v2572 = vrot.slane %v2539, %v2571
    %v2573 = vlaneseq
    %v2574 = vshrl.u32 %v2573, 7
    %v2575 = vsub.s32 2, %v2574
    %v2576 = vrot.slane %v2539, %v2575
    %v2577 = vlaneseq
    %v2578 = vshrl.u32 %v2577, 7
    %v2579 = vsub.s32 3, %v2578
    %v2580 = vrot.slane %v2539, %v2579
    %v2581 = vlaneseq
    %v2582 = vshrl.u32 %v2581, 7
    %v2583 = vsub.s32 0, %v2582
    %v2584 = vrot.slane %v2553, %v2583
    %v2585 = vlaneseq
    %v2586 = vshrl.u32 %v2585, 7
    %v2587 = vsub.s32 1, %v2586
    %v2588 = vrot.slane %v2553, %v2587
    %v2589 = vlaneseq
    %v2590 = vshrl.u32 %v2589, 7
    %v2591 = vsub.s32 2, %v2590
    %v2592 = vrot.slane %v2553, %v2591
    %v2593 = vlaneseq
    %v2594 = vshrl.u32 %v2593, 7
    %v2595 = vsub.s32 3, %v2594
    %v2596 = vrot.slane %v2553, %v2595
    %v2597 = vlaneseq
    %v2598 = vshrl.u32 %v2597, 7
    %v2599 = vsub.s32 0, %v2598
    %v2600 = vrot.slane %v2561, %v2599
    %v2601 = vlaneseq
    %v2602 = vshrl.u32 %v2601, 7
    %v2603 = vsub.s32 1, %v2602
    %v2604 = vrot.slane %v2561, %v2603
    %v2605 = vlaneseq
    %v2606 = vshrl.u32 %v2605, 7
    %v2607 = vsub.s32 2, %v2606
    %v2608 = vrot.slane %v2561, %v2607
    %v2609 = vlaneseq
    %v2610 = vshrl.u32 %v2609, 7
    %v2611 = vsub.s32 3, %v2610
    %v2612 = vrot.slane %v2561, %v2611
    %v2613 = vlaneseq
    %v2614 = vshrl.u32 %v2613, 7
    %v2615 = vsub.s32 0, %v2614
    %v2616 = vrot.slane %v2563, %v2615
    %v2617 = vlaneseq
    %v2618 = vshrl.u32 %v2617, 7
    %v2619 = vsub.s32 1, %v2618
    %v2620 = vrot.slane %v2563, %v2619
    %v2621 = vlaneseq
    %v2622 = vshrl.u32 %v2621, 7
    %v2623 = vsub.s32 2, %v2622
    %v2624 = vrot.slane %v2563, %v2623
    %v2625 = vlaneseq
    %v2626 = vshrl.u32 %v2625, 7
    %v2627 = vsub.s32 3, %v2626
    %v2628 = vrot.slane %v2563, %v2627
    %v2629 = vlaneseq
    %v2630 = vshrl.u32 %v2629, 7
    %v2631 = vsub.s32 0, %v2630
    %v2632 = vrot.slane %v2546, %v2631
    %v2633 = vlaneseq
    %v2634 = vshrl.u32 %v2633, 7
    %v2635 = vsub.s32 1, %v2634
    %v2636 = vrot.slane %v2546, %v2635
    %v2637 = vlaneseq
    %v2638 = vshrl.u32 %v2637, 7
    %v2639 = vsub.s32 2, %v2638
    %v2640 = vrot.slane %v2546, %v2639
    %v2641 = vlaneseq
    %v2642 = vshrl.u32 %v2641, 7
    %v2643 = vsub.s32 3, %v2642
    %v2644 = vrot.slane %v2546, %v2643
    %v2645 = vlaneseq
    %v2646 = vshrl.u32 %v2645, 7
    %v2647 = vsub.s32 0, %v2646
    %v2648 = vrot.slane %v2560, %v2647
    %v2649 = vlaneseq
    %v2650 = vshrl.u32 %v2649, 7
    %v2651 = vsub.s32 1, %v2650
    %v2652 = vrot.slane %v2560, %v2651
    %v2653 = vlaneseq
    %v2654 = vshrl.u32 %v2653, 7
    %v2655 = vsub.s32 2, %v2654
    %v2656 = vrot.slane %v2560, %v2655
    %v2657 = vlaneseq
    %v2658 = vshrl.u32 %v2657, 7
    %v2659 = vsub.s32 3, %v2658
    %v2660 = vrot.slane %v2560, %v2659
    %v2661 = vlaneseq
    %v2662 = vshrl.u32 %v2661, 7
    %v2663 = vsub.s32 0, %v2662
    %v2664 = vrot.slane %v2562, %v2663
    %v2665 = vlaneseq
    %v2666 = vshrl.u32 %v2665, 7
    %v2667 = vsub.s32 1, %v2666
    %v2668 = vrot.slane %v2562, %v2667
    %v2669 = vlaneseq
    %v2670 = vshrl.u32 %v2669, 7
    %v2671 = vsub.s32 2, %v2670
    %v2672 = vrot.slane %v2562, %v2671
    %v2673 = vlaneseq
    %v2674 = vshrl.u32 %v2673, 7
    %v2675 = vsub.s32 3, %v2674
    %v2676 = vrot.slane %v2562, %v2675
    %v2677 = vlaneseq
    %v2678 = vshrl.u32 %v2677, 7
    %v2679 = vsub.s32 0, %v2678
    %v2680 = vrot.slane %v2564, %v2679
    %v2681 = vlaneseq
    %v2682 = vshrl.u32 %v2681, 7
    %v2683 = vsub.s32 1, %v2682
    %v2684 = vrot.slane %v2564, %v2683
    %v2685 = vlaneseq
    %v2686 = vshrl.u32 %v2685, 7
    %v2687 = vsub.s32 2, %v2686
    %v2688 = vrot.slane %v2564, %v2687
    %v2689 = vlaneseq
    %v2690 = vshrl.u32 %v2689, 7
    %v2691 = vsub.s32 3, %v2690
    %v2692 = vrot.slane %v2564, %v2691
    %v2725 = vadd.f32 %v1219, %v2568
    %v2726 = vadd.f32 %v1221, %v2572
    %v2727 = vadd.f32 %v1445, %v2576
    %v2728 = vadd.f32 %v1447, %v2580
    %v2729 = vadd.f32 %v1223, %v2568
    %v2730 = vadd.f32 %v1225, %v2572
    %v2731 = vadd.f32 %v1449, %v2576
    %v2732 = vadd.f32 %v1451, %v2580
    %v2733 = vadd.f32 %v1229, %v2584
    %v2734 = vadd.f32 %v1231, %v2588
    %v2735 = vadd.f32 %v1455, %v2592
    %v2736 = vadd.f32 %v1457, %v2596
    %v2737 = vadd.f32 %v1233, %v2584
    %v2738 = vadd.f32 %v1235, %v2588
    %v2739 = vadd.f32 %v1459, %v2592
    %v2740 = vadd.f32 %v1461, %v2596
    %v2741 = vadd.f32 %v1239, %v2600
    %v2742 = vadd.f32 %v1241, %v2604
    %v2743 = vadd.f32 %v1465, %v2608
    %v2744 = vadd.f32 %v1467, %v2612
    %v2745 = vadd.f32 %v1243, %v2600
    %v2746 = vadd.f32 %v1245, %v2604
    %v2747 = vadd.f32 %v1469, %v2608
    %v2748 = vadd.f32 %v1471, %v2612
    %v2749 = vadd.f32 %v1249, %v2616
    %v2750 = vadd.f32 %v1251, %v2620
    %v2751 = vadd.f32 %v1475, %v2624
    %v2752 = vadd.f32 %v1477, %v2628
    %v2753 = vadd.f32 %v1253, %v2616
    %v2754 = vadd.f32 %v1255, %v2620
    %v2755 = vadd.f32 %v1479, %v2624
    %v2756 = vadd.f32 %v1481, %v2628
    %v2757 = vadd.f32 %v1259, %v2632
    %v2758 = vadd.f32 %v1261, %v2636
    %v2759 = vadd.f32 %v1485, %v2640
    %v2760 = vadd.f32 %v1487, %v2644
    %v2761 = vadd.f32 %v1263, %v2632
    %v2762 = vadd.f32 %v1265, %v2636
    %v2763 = vadd.f32 %v1489, %v2640
    %v2764 = vadd.f32 %v1491, %v2644
    %v2765 = vadd.f32 %v1269, %v2648
    %v2766 = vadd.f32 %v1271, %v2652
    %v2767 = vadd.f32 %v1495, %v2656
    %v2768 = vadd.f32 %v1497, %v2660
    %v2769 = vadd.f32 %v1273, %v2648
    %v2770 = vadd.f32 %v1275, %v2652
    %v2771 = vadd.f32 %v1499, %v2656
    %v2772 = vadd.f32 %v1501, %v2660
    %v2773 = vadd.f32 %v1279, %v2664
    %v2774 = vadd.f32 %v1281, %v2668
    %v2775 = vadd.f32 %v1505, %v2672
    %v2776 = vadd.f32 %v1507, %v2676
    %v2777 = vadd.f32 %v1283, %v2664
    %v2778 = vadd.f32 %v1285, %v2668
    %v2779 = vadd.f32 %v1509, %v2672
    %v2780 = vadd.f32 %v1511, %v2676
    %v2781 = vadd.f32 %v1289, %v2680
    %v2782 = vadd.f32 %v1291, %v2684
    %v2783 = vadd.f32 %v1515, %v2688
    %v2784 = vadd.f32 %v1517, %v2692
    %v2785 = vadd.f32 %v1293, %v2680
    %v2786 = vadd.f32 %v1295, %v2684
    %v2787 = vadd.f32 %v1519, %v2688
    %v2788 = vadd.f32 %v1521, %v2692
    %v2789 = vpack.c.bf16 %v2729, %v2725
    %v2790 = vpack.c.bf16 %v2730, %v2726
    %v2791 = vpack.c.bf16 %v2731, %v2727
    %v2792 = vpack.c.bf16 %v2732, %v2728
    %v2793 = vpack.c.bf16 %v2737, %v2733
    %v2794 = vpack.c.bf16 %v2738, %v2734
    %v2795 = vpack.c.bf16 %v2739, %v2735
    %v2796 = vpack.c.bf16 %v2740, %v2736
    %v2797 = vpack.c.bf16 %v2745, %v2741
    %v2798 = vpack.c.bf16 %v2746, %v2742
    %v2799 = vpack.c.bf16 %v2747, %v2743
    %v2800 = vpack.c.bf16 %v2748, %v2744
    %v2801 = vpack.c.bf16 %v2753, %v2749
    %v2802 = vpack.c.bf16 %v2754, %v2750
    %v2803 = vpack.c.bf16 %v2755, %v2751
    %v2804 = vpack.c.bf16 %v2756, %v2752
    %v2805 = vpack.c.bf16 %v2761, %v2757
    %v2806 = vpack.c.bf16 %v2762, %v2758
    %v2807 = vpack.c.bf16 %v2763, %v2759
    %v2808 = vpack.c.bf16 %v2764, %v2760
    %v2809 = vpack.c.bf16 %v2769, %v2765
    %v2810 = vpack.c.bf16 %v2770, %v2766
    %v2811 = vpack.c.bf16 %v2771, %v2767
    %v2812 = vpack.c.bf16 %v2772, %v2768
    %v2813 = vpack.c.bf16 %v2777, %v2773
    %v2814 = vpack.c.bf16 %v2778, %v2774
    %v2815 = vpack.c.bf16 %v2779, %v2775
    %v2816 = vpack.c.bf16 %v2780, %v2776
    %v2817 = vpack.c.bf16 %v2785, %v2781
    %v2818 = vpack.c.bf16 %v2786, %v2782
    %v2819 = vpack.c.bf16 %v2787, %v2783
    %v2820 = vpack.c.bf16 %v2788, %v2784
    %v2821 = vtanh.bf16.pop %v2789
    %v2822 = vtanh.bf16.pop %v2790
    %v2823 = vtanh.bf16.pop %v2791
    %v2824 = vtanh.bf16.pop %v2792
    %v2825 = vtanh.bf16.pop %v2793
    %v2826 = vtanh.bf16.pop %v2794
    %v2827 = vtanh.bf16.pop %v2795
    %v2828 = vtanh.bf16.pop %v2796
    %v2829 = vtanh.bf16.pop %v2797
    %v2830 = vtanh.bf16.pop %v2798
    %v2831 = vtanh.bf16.pop %v2799
    %v2832 = vtanh.bf16.pop %v2800
    %v2833 = vtanh.bf16.pop %v2801
    %v2834 = vtanh.bf16.pop %v2802
    %v2835 = vtanh.bf16.pop %v2803
    %v2836 = vtanh.bf16.pop %v2804
    %v2837 = vtanh.bf16.pop %v2805
    %v2838 = vtanh.bf16.pop %v2806
    %v2839 = vtanh.bf16.pop %v2807
    %v2840 = vtanh.bf16.pop %v2808
    %v2841 = vtanh.bf16.pop %v2809
    %v2842 = vtanh.bf16.pop %v2810
    %v2843 = vtanh.bf16.pop %v2811
    %v2844 = vtanh.bf16.pop %v2812
    %v2845 = vtanh.bf16.pop %v2813
    %v2846 = vtanh.bf16.pop %v2814
    %v2847 = vtanh.bf16.pop %v2815
    %v2848 = vtanh.bf16.pop %v2816
    %v2849 = vtanh.bf16.pop %v2817
    %v2850 = vtanh.bf16.pop %v2818
    %v2851 = vtanh.bf16.pop %v2819
    %v2852 = vtanh.bf16.pop %v2820
    %v2853 = vld [vmem:[%s7] sm:$0xf]
    %v2855 = vlaneseq
    %v2856 = vshrl.u32 %v2855, 7
    %v2857 = vsub.s32 0, %v2856
    %v2858 = vrot.slane %v2853, %v2857
    %v2859 = vlaneseq
    %v2860 = vshrl.u32 %v2859, 7
    %v2861 = vsub.s32 1, %v2860
    %v2862 = vrot.slane %v2853, %v2861
    %v2863 = vlaneseq
    %v2864 = vshrl.u32 %v2863, 7
    %v2865 = vsub.s32 2, %v2864
    %v2866 = vrot.slane %v2853, %v2865
    %v2867 = vlaneseq
    %v2868 = vshrl.u32 %v2867, 7
    %v2869 = vsub.s32 3, %v2868
    %v2870 = vrot.slane %v2853, %v2869
    %v2875 = vpack.c.bf16 %v2858, %v2858
    %v2876 = vpack.c.bf16 %v2862, %v2862
    %v2877 = vpack.c.bf16 %v2866, %v2866
    %v2878 = vpack.c.bf16 %v2870, %v2870
    %v2880 = vpack.i.b16 %v2875, %v2875
    %v2882 = vlaneseq
    %v2883 = vshrl.u32 %v2882, 7
    %v2884 = vsub.s32 0, %v2883
    %v2885 = vrot.slane %v2880, %v2884
    %v2887 = vpack.i.b16 %v2876, %v2876
    %v2889 = vlaneseq
    %v2890 = vshrl.u32 %v2889, 7
    %v2891 = vsub.s32 0, %v2890
    %v2892 = vrot.slane %v2887, %v2891
    %v2894 = vpack.i.b16 %v2877, %v2877
    %v2896 = vlaneseq
    %v2897 = vshrl.u32 %v2896, 7
    %v2898 = vsub.s32 0, %v2897
    %v2899 = vrot.slane %v2894, %v2898
    %v2901 = vpack.i.b16 %v2878, %v2878
    %v2903 = vlaneseq
    %v2904 = vshrl.u32 %v2903, 7
    %v2905 = vsub.s32 0, %v2904
    %v2906 = vrot.slane %v2901, %v2905
    %v2907 = vmul.bf16 %v2821, %v2885
    %v2908 = vmul.bf16 %v2822, %v2892
    %v2909 = vmul.bf16 %v2823, %v2899
    %v2910 = vmul.bf16 %v2824, %v2906
    %v2911 = vmul.bf16 %v2825, %v2885
    %v2912 = vmul.bf16 %v2826, %v2892
    %v2913 = vmul.bf16 %v2827, %v2899
    %v2914 = vmul.bf16 %v2828, %v2906
    %v2915 = vmul.bf16 %v2829, %v2885
    %v2916 = vmul.bf16 %v2830, %v2892
    %v2917 = vmul.bf16 %v2831, %v2899
    %v2918 = vmul.bf16 %v2832, %v2906
    %v2919 = vmul.bf16 %v2833, %v2885
    %v2920 = vmul.bf16 %v2834, %v2892
    %v2921 = vmul.bf16 %v2835, %v2899
    %v2922 = vmul.bf16 %v2836, %v2906
    %v2923 = vmul.bf16 %v2837, %v2885
    %v2924 = vmul.bf16 %v2838, %v2892
    %v2925 = vmul.bf16 %v2839, %v2899
    %v2926 = vmul.bf16 %v2840, %v2906
    %v2927 = vmul.bf16 %v2841, %v2885
    %v2928 = vmul.bf16 %v2842, %v2892
    %v2929 = vmul.bf16 %v2843, %v2899
    %v2930 = vmul.bf16 %v2844, %v2906
    %v2931 = vmul.bf16 %v2845, %v2885
    %v2932 = vmul.bf16 %v2846, %v2892
    %v2933 = vmul.bf16 %v2847, %v2899
    %v2934 = vmul.bf16 %v2848, %v2906
    %v2935 = vmul.bf16 %v2849, %v2885
    %v2936 = vmul.bf16 %v2850, %v2892
    %v2937 = vmul.bf16 %v2851, %v2899
    %v2938 = vmul.bf16 %v2852, %v2906
    %v2939 = vunpack.c.l.bf16 %v2907
    %v2940 = vunpack.c.l.bf16 %v2908
    %v2941 = vunpack.c.l.bf16 %v2909
    %v2942 = vunpack.c.l.bf16 %v2910
    %v2943 = vunpack.c.h.bf16 %v2907
    %v2944 = vunpack.c.h.bf16 %v2908
    %v2945 = vunpack.c.h.bf16 %v2909
    %v2946 = vunpack.c.h.bf16 %v2910
    %v2947 = vunpack.c.l.bf16 %v2911
    %v2948 = vunpack.c.l.bf16 %v2912
    %v2949 = vunpack.c.l.bf16 %v2913
    %v2950 = vunpack.c.l.bf16 %v2914
    %v2951 = vunpack.c.h.bf16 %v2911
    %v2952 = vunpack.c.h.bf16 %v2912
    %v2953 = vunpack.c.h.bf16 %v2913
    %v2954 = vunpack.c.h.bf16 %v2914
    %v2955 = vunpack.c.l.bf16 %v2915
    %v2956 = vunpack.c.l.bf16 %v2916
    %v2957 = vunpack.c.l.bf16 %v2917
    %v2958 = vunpack.c.l.bf16 %v2918
    %v2959 = vunpack.c.h.bf16 %v2915
    %v2960 = vunpack.c.h.bf16 %v2916
    %v2961 = vunpack.c.h.bf16 %v2917
    %v2962 = vunpack.c.h.bf16 %v2918
    %v2963 = vunpack.c.l.bf16 %v2919
    %v2964 = vunpack.c.l.bf16 %v2920
    %v2965 = vunpack.c.l.bf16 %v2921
    %v2966 = vunpack.c.l.bf16 %v2922
    %v2967 = vunpack.c.h.bf16 %v2919
    %v2968 = vunpack.c.h.bf16 %v2920
    %v2969 = vunpack.c.h.bf16 %v2921
    %v2970 = vunpack.c.h.bf16 %v2922
    %v2971 = vunpack.c.l.bf16 %v2923
    %v2972 = vunpack.c.l.bf16 %v2924
    %v2973 = vunpack.c.l.bf16 %v2925
    %v2974 = vunpack.c.l.bf16 %v2926
    %v2975 = vunpack.c.h.bf16 %v2923
    %v2976 = vunpack.c.h.bf16 %v2924
    %v2977 = vunpack.c.h.bf16 %v2925
    %v2978 = vunpack.c.h.bf16 %v2926
    %v2979 = vunpack.c.l.bf16 %v2927
    %v2980 = vunpack.c.l.bf16 %v2928
    %v2981 = vunpack.c.l.bf16 %v2929
    %v2982 = vunpack.c.l.bf16 %v2930
    %v2983 = vunpack.c.h.bf16 %v2927
    %v2984 = vunpack.c.h.bf16 %v2928
    %v2985 = vunpack.c.h.bf16 %v2929
    %v2986 = vunpack.c.h.bf16 %v2930
    %v2987 = vunpack.c.l.bf16 %v2931
    %v2988 = vunpack.c.l.bf16 %v2932
    %v2989 = vunpack.c.l.bf16 %v2933
    %v2990 = vunpack.c.l.bf16 %v2934
    %v2991 = vunpack.c.h.bf16 %v2931
    %v2992 = vunpack.c.h.bf16 %v2932
    %v2993 = vunpack.c.h.bf16 %v2933
    %v2994 = vunpack.c.h.bf16 %v2934
    %v2995 = vunpack.c.l.bf16 %v2935
    %v2996 = vunpack.c.l.bf16 %v2936
    %v2997 = vunpack.c.l.bf16 %v2937
    %v2998 = vunpack.c.l.bf16 %v2938
    %v2999 = vunpack.c.h.bf16 %v2935
    %v3000 = vunpack.c.h.bf16 %v2936
    %v3001 = vunpack.c.h.bf16 %v2937
    %v3002 = vunpack.c.h.bf16 %v2938
    %v3003 = vadd.f32 %v2939, %v2940
    %v3004 = vadd.f32 %v3003, %v2941
    %v3005 = vadd.f32 %v3004, %v2942
    %3006 = vadd.xlane.f32.xlu0 %v3005
    %v3007 = vpop.xlane.xlu0 %3006
    %v3008 = vadd.f32 %v2943, %v2944
    %v3009 = vadd.f32 %v3008, %v2945
    %v3010 = vadd.f32 %v3009, %v2946
    %3011 = vadd.xlane.f32.xlu0 %v3010
    %v3012 = vpop.xlane.xlu0 %3011
    %v3013 = vadd.f32 %v2947, %v2948
    %v3014 = vadd.f32 %v3013, %v2949
    %v3015 = vadd.f32 %v3014, %v2950
    %3016 = vadd.xlane.f32.xlu0 %v3015
    %v3017 = vpop.xlane.xlu0 %3016
    %v3018 = vadd.f32 %v2951, %v2952
    %v3019 = vadd.f32 %v3018, %v2953
    %v3020 = vadd.f32 %v3019, %v2954
    %3021 = vadd.xlane.f32.xlu0 %v3020
    %v3022 = vpop.xlane.xlu0 %3021
    %v3023 = vadd.f32 %v2955, %v2956
    %v3024 = vadd.f32 %v3023, %v2957
    %v3025 = vadd.f32 %v3024, %v2958
    %3026 = vadd.xlane.f32.xlu0 %v3025
    %v3027 = vpop.xlane.xlu0 %3026
    %v3028 = vadd.f32 %v2959, %v2960
    %v3029 = vadd.f32 %v3028, %v2961
    %v3030 = vadd.f32 %v3029, %v2962
    %3031 = vadd.xlane.f32.xlu0 %v3030
    %v3032 = vpop.xlane.xlu0 %3031
    %v3033 = vadd.f32 %v2963, %v2964
    %v3034 = vadd.f32 %v3033, %v2965
    %v3035 = vadd.f32 %v3034, %v2966
    %3036 = vadd.xlane.f32.xlu0 %v3035
    %v3037 = vpop.xlane.xlu0 %3036
    %v3038 = vadd.f32 %v2967, %v2968
    %v3039 = vadd.f32 %v3038, %v2969
    %v3040 = vadd.f32 %v3039, %v2970
    %3041 = vadd.xlane.f32.xlu0 %v3040
    %v3042 = vpop.xlane.xlu0 %3041
    %v3043 = vadd.f32 %v2971, %v2972
    %v3044 = vadd.f32 %v3043, %v2973
    %v3045 = vadd.f32 %v3044, %v2974
    %3046 = vadd.xlane.f32.xlu0 %v3045
    %v3047 = vpop.xlane.xlu0 %3046
    %v3048 = vadd.f32 %v2975, %v2976
    %v3049 = vadd.f32 %v3048, %v2977
    %v3050 = vadd.f32 %v3049, %v2978
    %3051 = vadd.xlane.f32.xlu0 %v3050
    %v3052 = vpop.xlane.xlu0 %3051
    %v3053 = vadd.f32 %v2979, %v2980
    %v3054 = vadd.f32 %v3053, %v2981
    %v3055 = vadd.f32 %v3054, %v2982
    %3056 = vadd.xlane.f32.xlu0 %v3055
    %v3057 = vpop.xlane.xlu0 %3056
    %v3058 = vadd.f32 %v2983, %v2984
    %v3059 = vadd.f32 %v3058, %v2985
    %v3060 = vadd.f32 %v3059, %v2986
    %3061 = vadd.xlane.f32.xlu0 %v3060
    %v3062 = vpop.xlane.xlu0 %3061
    %v3063 = vadd.f32 %v2987, %v2988
    %v3064 = vadd.f32 %v3063, %v2989
    %v3065 = vadd.f32 %v3064, %v2990
    %3066 = vadd.xlane.f32.xlu0 %v3065
    %v3067 = vpop.xlane.xlu0 %3066
    %v3068 = vadd.f32 %v2991, %v2992
    %v3069 = vadd.f32 %v3068, %v2993
    %v3070 = vadd.f32 %v3069, %v2994
    %3071 = vadd.xlane.f32.xlu0 %v3070
    %v3072 = vpop.xlane.xlu0 %3071
    %v3073 = vadd.f32 %v2995, %v2996
    %v3074 = vadd.f32 %v3073, %v2997
    %v3075 = vadd.f32 %v3074, %v2998
    %3076 = vadd.xlane.f32.xlu0 %v3075
    %v3077 = vpop.xlane.xlu0 %3076
    %v3078 = vadd.f32 %v2999, %v3000
    %v3079 = vadd.f32 %v3078, %v3001
    %v3080 = vadd.f32 %v3079, %v3002
    %3081 = vadd.xlane.f32.xlu0 %v3080
    %v3082 = vpop.xlane.xlu0 %3081
    %v3083 = vld [vmem:[#allocation2] sm:$0x1]
    %s3084 = vtos %v3083
    %v3085 = vstv %s3084
    %v3086 = vadd.f32 %v3007, %v3085
    %v3087 = vadd.f32 %v3012, %v3085
    %v3088 = vadd.f32 %v3017, %v3085
    %v3089 = vadd.f32 %v3022, %v3085
    %v3090 = vadd.f32 %v3027, %v3085
    %v3091 = vadd.f32 %v3032, %v3085
    %v3092 = vadd.f32 %v3037, %v3085
    %v3093 = vadd.f32 %v3042, %v3085
    %v3094 = vadd.f32 %v3047, %v3085
    %v3095 = vadd.f32 %v3052, %v3085
    %v3096 = vadd.f32 %v3057, %v3085
    %v3097 = vadd.f32 %v3062, %v3085
    %v3098 = vadd.f32 %v3067, %v3085
    %v3099 = vadd.f32 %v3072, %v3085
    %v3100 = vadd.f32 %v3077, %v3085
    %v3101 = vadd.f32 %v3082, %v3085
    %v3118 = vlaneseq
    %v3119 = vand.u32 %v3118, 127
    %v3120 = vlaneseq
    %v3121 = vshrl.u32 %v3120, 7
    %v3122 = vsub.s32 %v3119, %v3121
    %v3123 = vrot.slane %v3086, %v3122
    %v3124 = vadd.s32 %v3119, 4294967288
    %v3125 = vlaneseq
    %v3126 = vshrl.u32 %v3125, 7
    %v3127 = vsub.s32 %v3124, %v3126
    %v3128 = vrot.slane %v3087, %v3127
    %vm3129 = vcmask 130112
    %v3130 = vsel %vm3129, %v3128, %v3123
    %v3131 = vlaneseq
    %v3132 = vshrl.u32 %v3131, 7
    %v3133 = vsub.s32 %v3119, %v3132
    %v3134 = vrot.slane %v3088, %v3133
    %v3135 = vlaneseq
    %v3136 = vshrl.u32 %v3135, 7
    %v3137 = vsub.s32 %v3124, %v3136
    %v3138 = vrot.slane %v3089, %v3137
    %v3139 = vsel %vm3129, %v3138, %v3134
    %v3140 = vlaneseq
    %v3141 = vshrl.u32 %v3140, 7
    %v3142 = vsub.s32 %v3119, %v3141
    %v3143 = vrot.slane %v3090, %v3142
    %v3144 = vlaneseq
    %v3145 = vshrl.u32 %v3144, 7
    %v3146 = vsub.s32 %v3124, %v3145
    %v3147 = vrot.slane %v3091, %v3146
    %v3148 = vsel %vm3129, %v3147, %v3143
    %v3149 = vlaneseq
    %v3150 = vshrl.u32 %v3149, 7
    %v3151 = vsub.s32 %v3119, %v3150
    %v3152 = vrot.slane %v3092, %v3151
    %v3153 = vlaneseq
    %v3154 = vshrl.u32 %v3153, 7
    %v3155 = vsub.s32 %v3124, %v3154
    %v3156 = vrot.slane %v3093, %v3155
    %v3157 = vsel %vm3129, %v3156, %v3152
    %v3158 = vlaneseq
    %v3159 = vshrl.u32 %v3158, 7
    %v3160 = vsub.s32 %v3119, %v3159
    %v3161 = vrot.slane %v3094, %v3160
    %v3162 = vlaneseq
    %v3163 = vshrl.u32 %v3162, 7
    %v3164 = vsub.s32 %v3124, %v3163
    %v3165 = vrot.slane %v3095, %v3164
    %v3166 = vsel %vm3129, %v3165, %v3161
    %v3167 = vlaneseq
    %v3168 = vshrl.u32 %v3167, 7
    %v3169 = vsub.s32 %v3119, %v3168
    %v3170 = vrot.slane %v3096, %v3169
    %v3171 = vlaneseq
    %v3172 = vshrl.u32 %v3171, 7
    %v3173 = vsub.s32 %v3124, %v3172
    %v3174 = vrot.slane %v3097, %v3173
    %v3175 = vsel %vm3129, %v3174, %v3170
    %v3176 = vlaneseq
    %v3177 = vshrl.u32 %v3176, 7
    %v3178 = vsub.s32 %v3119, %v3177
    %v3179 = vrot.slane %v3098, %v3178
    %v3180 = vlaneseq
    %v3181 = vshrl.u32 %v3180, 7
    %v3182 = vsub.s32 %v3124, %v3181
    %v3183 = vrot.slane %v3099, %v3182
    %v3184 = vsel %vm3129, %v3183, %v3179
    %v3185 = vlaneseq
    %v3186 = vshrl.u32 %v3185, 7
    %v3187 = vsub.s32 %v3119, %v3186
    %v3188 = vrot.slane %v3100, %v3187
    %v3189 = vlaneseq
    %v3190 = vshrl.u32 %v3189, 7
    %v3191 = vsub.s32 %v3124, %v3190
    %v3192 = vrot.slane %v3101, %v3191
    %v3193 = vsel %vm3129, %v3192, %v3188
    %vm3194 = vcmask 1041409
    %v3195 = vsel %vm3194, %v3139, %v3130
    %vm3196 = vcmask 1042434
    %v3197 = vsel %vm3196, %v3148, %v3195
    %vm3198 = vcmask 1043459
    %v3199 = vsel %vm3198, %v3157, %v3197
    %vm3200 = vcmask 1044484
    %v3201 = vsel %vm3200, %v3166, %v3199
    %vm3202 = vcmask 1045509
    %v3203 = vsel %vm3202, %v3175, %v3201
    %vm3204 = vcmask 1046534
    %v3205 = vsel %vm3204, %v3184, %v3203
    %vm3206 = vcmask 1047559
    %v3207 = vsel %vm3206, %v3193, %v3205
    %vm3209 = vcmask 130048
    %v3210 = vsel %vm3209, %v3207, -inf
    %3211 = vmax.xlane.f32.xlu0 %v3210
    %v3212 = vpop.xlane.xlu0 %3211
    %v3214 = vlaneseq
    %v3215 = vshrl.u32 %v3214, 7
    %v3216 = vsub.s32 0, %v3215
    %v3217 = vrot.slane %v3212, %v3216
    %v3218 = vlaneseq
    %v3219 = vshrl.u32 %v3218, 7
    %v3220 = vsub.s32 1, %v3219
    %v3221 = vrot.slane %v3212, %v3220
    %v3222 = vlaneseq
    %v3223 = vshrl.u32 %v3222, 7
    %v3224 = vsub.s32 2, %v3223
    %v3225 = vrot.slane %v3212, %v3224
    %v3226 = vlaneseq
    %v3227 = vshrl.u32 %v3226, 7
    %v3228 = vsub.s32 3, %v3227
    %v3229 = vrot.slane %v3212, %v3228
    %v3230 = vlaneseq
    %v3231 = vshrl.u32 %v3230, 7
    %v3232 = vsub.s32 4, %v3231
    %v3233 = vrot.slane %v3212, %v3232
    %v3234 = vlaneseq
    %v3235 = vshrl.u32 %v3234, 7
    %v3236 = vsub.s32 5, %v3235
    %v3237 = vrot.slane %v3212, %v3236
    %v3238 = vlaneseq
    %v3239 = vshrl.u32 %v3238, 7
    %v3240 = vsub.s32 6, %v3239
    %v3241 = vrot.slane %v3212, %v3240
    %v3242 = vlaneseq
    %v3243 = vshrl.u32 %v3242, 7
    %v3244 = vsub.s32 7, %v3243
    %v3245 = vrot.slane %v3212, %v3244
    %v3254 = vsub.f32 %v3086, %v3217
    %v3255 = vsub.f32 %v3087, %v3217
    %v3256 = vsub.f32 %v3088, %v3221
    %v3257 = vsub.f32 %v3089, %v3221
    %v3258 = vsub.f32 %v3090, %v3225
    %v3259 = vsub.f32 %v3091, %v3225
    %v3260 = vsub.f32 %v3092, %v3229
    %v3261 = vsub.f32 %v3093, %v3229
    %v3262 = vsub.f32 %v3094, %v3233
    %v3263 = vsub.f32 %v3095, %v3233
    %v3264 = vsub.f32 %v3096, %v3237
    %v3265 = vsub.f32 %v3097, %v3237
    %v3266 = vsub.f32 %v3098, %v3241
    %v3267 = vsub.f32 %v3099, %v3241
    %v3268 = vsub.f32 %v3100, %v3245
    %v3269 = vsub.f32 %v3101, %v3245
    %v3270 = vmul.f32 %v3254, 1.442695
    %v3271 = vpow.pop %v3270
    %v3272 = vmul.f32 %v3255, 1.442695
    %v3273 = vpow.pop %v3272
    %v3274 = vmul.f32 %v3256, 1.442695
    %v3275 = vpow.pop %v3274
    %v3276 = vmul.f32 %v3257, 1.442695
    %v3277 = vpow.pop %v3276
    %v3278 = vmul.f32 %v3258, 1.442695
    %v3279 = vpow.pop %v3278
    %v3280 = vmul.f32 %v3259, 1.442695
    %v3281 = vpow.pop %v3280
    %v3282 = vmul.f32 %v3260, 1.442695
    %v3283 = vpow.pop %v3282
    %v3284 = vmul.f32 %v3261, 1.442695
    %v3285 = vpow.pop %v3284
    %v3286 = vmul.f32 %v3262, 1.442695
    %v3287 = vpow.pop %v3286
    %v3288 = vmul.f32 %v3263, 1.442695
    %v3289 = vpow.pop %v3288
    %v3290 = vmul.f32 %v3264, 1.442695
    %v3291 = vpow.pop %v3290
    %v3292 = vmul.f32 %v3265, 1.442695
    %v3293 = vpow.pop %v3292
    %v3294 = vmul.f32 %v3266, 1.442695
    %v3295 = vpow.pop %v3294
    %v3296 = vmul.f32 %v3267, 1.442695
    %v3297 = vpow.pop %v3296
    %v3298 = vmul.f32 %v3268, 1.442695
    %v3299 = vpow.pop %v3298
    %v3300 = vmul.f32 %v3269, 1.442695
    %v3301 = vpow.pop %v3300
    %3318 = vset.pattern.permute.xlu0 0
    %3319 = vperm.xlu0 %3318, %v3271
    %v3320 = vpop.permute.xlu0 %3319
    %3321 = vset.pattern.permute.xlu0 0
    %3322 = vperm.xlu0 %3321, %v3273
    %v3323 = vpop.permute.xlu0 %3322
    %3324 = vset.pattern.permute.xlu0 0
    %3325 = vperm.xlu0 %3324, %v3275
    %v3326 = vpop.permute.xlu0 %3325
    %3327 = vset.pattern.permute.xlu0 0
    %3328 = vperm.xlu0 %3327, %v3277
    %v3329 = vpop.permute.xlu0 %3328
    %3330 = vset.pattern.permute.xlu0 0
    %3331 = vperm.xlu0 %3330, %v3279
    %v3332 = vpop.permute.xlu0 %3331
    %3333 = vset.pattern.permute.xlu0 0
    %3334 = vperm.xlu0 %3333, %v3281
    %v3335 = vpop.permute.xlu0 %3334
    %3336 = vset.pattern.permute.xlu0 0
    %3337 = vperm.xlu0 %3336, %v3283
    %v3338 = vpop.permute.xlu0 %3337
    %3339 = vset.pattern.permute.xlu0 0
    %3340 = vperm.xlu0 %3339, %v3285
    %v3341 = vpop.permute.xlu0 %3340
    %3342 = vset.pattern.permute.xlu0 0
    %3343 = vperm.xlu0 %3342, %v3287
    %v3344 = vpop.permute.xlu0 %3343
    %3345 = vset.pattern.permute.xlu0 0
    %3346 = vperm.xlu0 %3345, %v3289
    %v3347 = vpop.permute.xlu0 %3346
    %3348 = vset.pattern.permute.xlu0 0
    %3349 = vperm.xlu0 %3348, %v3291
    %v3350 = vpop.permute.xlu0 %3349
    %3351 = vset.pattern.permute.xlu0 0
    %3352 = vperm.xlu0 %3351, %v3293
    %v3353 = vpop.permute.xlu0 %3352
    %3354 = vset.pattern.permute.xlu0 0
    %3355 = vperm.xlu0 %3354, %v3295
    %v3356 = vpop.permute.xlu0 %3355
    %3357 = vset.pattern.permute.xlu0 0
    %3358 = vperm.xlu0 %3357, %v3297
    %v3359 = vpop.permute.xlu0 %3358
    %3360 = vset.pattern.permute.xlu0 0
    %3361 = vperm.xlu0 %3360, %v3299
    %v3362 = vpop.permute.xlu0 %3361
    %3363 = vset.pattern.permute.xlu0 0
    %3364 = vperm.xlu0 %3363, %v3301
    %v3365 = vpop.permute.xlu0 %3364
    %v3366 = vlaneseq
    %v3367 = vshrl.u32 %v3366, 7
    %v3368 = vsub.s32 %v3119, %v3367
    %v3369 = vrot.slane %v3320, %v3368
    %v3370 = vlaneseq
    %v3371 = vshrl.u32 %v3370, 7
    %v3372 = vsub.s32 %v3124, %v3371
    %v3373 = vrot.slane %v3323, %v3372
    %v3374 = vsel %vm3129, %v3373, %v3369
    %v3375 = vlaneseq
    %v3376 = vshrl.u32 %v3375, 7
    %v3377 = vsub.s32 %v3119, %v3376
    %v3378 = vrot.slane %v3326, %v3377
    %v3379 = vlaneseq
    %v3380 = vshrl.u32 %v3379, 7
    %v3381 = vsub.s32 %v3124, %v3380
    %v3382 = vrot.slane %v3329, %v3381
    %v3383 = vsel %vm3129, %v3382, %v3378
    %v3384 = vlaneseq
    %v3385 = vshrl.u32 %v3384, 7
    %v3386 = vsub.s32 %v3119, %v3385
    %v3387 = vrot.slane %v3332, %v3386
    %v3388 = vlaneseq
    %v3389 = vshrl.u32 %v3388, 7
    %v3390 = vsub.s32 %v3124, %v3389
    %v3391 = vrot.slane %v3335, %v3390
    %v3392 = vsel %vm3129, %v3391, %v3387
    %v3393 = vlaneseq
    %v3394 = vshrl.u32 %v3393, 7
    %v3395 = vsub.s32 %v3119, %v3394
    %v3396 = vrot.slane %v3338, %v3395
    %v3397 = vlaneseq
    %v3398 = vshrl.u32 %v3397, 7
    %v3399 = vsub.s32 %v3124, %v3398
    %v3400 = vrot.slane %v3341, %v3399
    %v3401 = vsel %vm3129, %v3400, %v3396
    %v3402 = vlaneseq
    %v3403 = vshrl.u32 %v3402, 7
    %v3404 = vsub.s32 %v3119, %v3403
    %v3405 = vrot.slane %v3344, %v3404
    %v3406 = vlaneseq
    %v3407 = vshrl.u32 %v3406, 7
    %v3408 = vsub.s32 %v3124, %v3407
    %v3409 = vrot.slane %v3347, %v3408
    %v3410 = vsel %vm3129, %v3409, %v3405
    %v3411 = vlaneseq
    %v3412 = vshrl.u32 %v3411, 7
    %v3413 = vsub.s32 %v3119, %v3412
    %v3414 = vrot.slane %v3350, %v3413
    %v3415 = vlaneseq
    %v3416 = vshrl.u32 %v3415, 7
    %v3417 = vsub.s32 %v3124, %v3416
    %v3418 = vrot.slane %v3353, %v3417
    %v3419 = vsel %vm3129, %v3418, %v3414
    %v3420 = vlaneseq
    %v3421 = vshrl.u32 %v3420, 7
    %v3422 = vsub.s32 %v3119, %v3421
    %v3423 = vrot.slane %v3356, %v3422
    %v3424 = vlaneseq
    %v3425 = vshrl.u32 %v3424, 7
    %v3426 = vsub.s32 %v3124, %v3425
    %v3427 = vrot.slane %v3359, %v3426
    %v3428 = vsel %vm3129, %v3427, %v3423
    %v3429 = vlaneseq
    %v3430 = vshrl.u32 %v3429, 7
    %v3431 = vsub.s32 %v3119, %v3430
    %v3432 = vrot.slane %v3362, %v3431
    %v3433 = vlaneseq
    %v3434 = vshrl.u32 %v3433, 7
    %v3435 = vsub.s32 %v3124, %v3434
    %v3436 = vrot.slane %v3365, %v3435
    %v3437 = vsel %vm3129, %v3436, %v3432
    %v3438 = vsel %vm3194, %v3383, %v3374
    %v3439 = vsel %vm3196, %v3392, %v3438
    %v3440 = vsel %vm3198, %v3401, %v3439
    %v3441 = vsel %vm3200, %v3410, %v3440
    %v3442 = vsel %vm3202, %v3419, %v3441
    %v3443 = vsel %vm3204, %v3428, %v3442
    %v3444 = vsel %vm3206, %v3437, %v3443
    %v3446 = vsel %vm3209, %v3444, 0.0
    %3447 = vadd.xlane.f32.xlu0 %v3446
    %v3448 = vpop.xlane.xlu0 %3447
    %v3449 = vrcp.pop %v3448
    %v3451 = vlaneseq
    %v3452 = vshrl.u32 %v3451, 7
    %v3453 = vsub.s32 0, %v3452
    %v3454 = vrot.slane %v3449, %v3453
    %v3455 = vlaneseq
    %v3456 = vshrl.u32 %v3455, 7
    %v3457 = vsub.s32 1, %v3456
    %v3458 = vrot.slane %v3449, %v3457
    %v3459 = vlaneseq
    %v3460 = vshrl.u32 %v3459, 7
    %v3461 = vsub.s32 2, %v3460
    %v3462 = vrot.slane %v3449, %v3461
    %v3463 = vlaneseq
    %v3464 = vshrl.u32 %v3463, 7
    %v3465 = vsub.s32 3, %v3464
    %v3466 = vrot.slane %v3449, %v3465
    %v3467 = vlaneseq
    %v3468 = vshrl.u32 %v3467, 7
    %v3469 = vsub.s32 4, %v3468
    %v3470 = vrot.slane %v3449, %v3469
    %v3471 = vlaneseq
    %v3472 = vshrl.u32 %v3471, 7
    %v3473 = vsub.s32 5, %v3472
    %v3474 = vrot.slane %v3449, %v3473
    %v3475 = vlaneseq
    %v3476 = vshrl.u32 %v3475, 7
    %v3477 = vsub.s32 6, %v3476
    %v3478 = vrot.slane %v3449, %v3477
    %v3479 = vlaneseq
    %v3480 = vshrl.u32 %v3479, 7
    %v3481 = vsub.s32 7, %v3480
    %v3482 = vrot.slane %v3449, %v3481
    %v3491 = vmul.f32 %v3271, %v3454
    %v3492 = vmul.f32 %v3273, %v3454
    %v3493 = vmul.f32 %v3275, %v3458
    %v3494 = vmul.f32 %v3277, %v3458
    %v3495 = vmul.f32 %v3279, %v3462
    %v3496 = vmul.f32 %v3281, %v3462
    %v3497 = vmul.f32 %v3283, %v3466
    %v3498 = vmul.f32 %v3285, %v3466
    %v3499 = vmul.f32 %v3287, %v3470
    %v3500 = vmul.f32 %v3289, %v3470
    %v3501 = vmul.f32 %v3291, %v3474
    %v3502 = vmul.f32 %v3293, %v3474
    %v3503 = vmul.f32 %v3295, %v3478
    %v3504 = vmul.f32 %v3297, %v3478
    %v3505 = vmul.f32 %v3299, %v3482
    %v3506 = vmul.f32 %v3301, %v3482
    %v3507 = vld [vmem:[#allocation5] sm:$0xf]
    %v3508 = vld [vmem:[#allocation5 + $0x4] sm:$0xf]
    %v3509 = vld [vmem:[#allocation5 + $0x8] sm:$0xf]
    %v3510 = vld [vmem:[#allocation5 + $0xc] sm:$0xf]
    %v3511 = vld [vmem:[#allocation5 + $0x10] sm:$0xf]
    %v3512 = vld [vmem:[#allocation5 + $0x14] sm:$0xf]
    %v3513 = vld [vmem:[#allocation5 + $0x18] sm:$0xf]
    %v3514 = vld [vmem:[#allocation5 + $0x1c] sm:$0xf]
    %v3515 = vld [vmem:[#allocation5 + $0x20] sm:$0xf]
    %v3516 = vld [vmem:[#allocation5 + $0x24] sm:$0xf]
    %v3517 = vld [vmem:[#allocation5 + $0x28] sm:$0xf]
    %v3518 = vld [vmem:[#allocation5 + $0x2c] sm:$0xf]
    %v3519 = vld [vmem:[#allocation5 + $0x30] sm:$0xf]
    %v3520 = vld [vmem:[#allocation5 + $0x34] sm:$0xf]
    %v3521 = vld [vmem:[#allocation5 + $0x38] sm:$0xf]
    %v3522 = vld [vmem:[#allocation5 + $0x3c] sm:$0xf]
    %v3523 = vunpack.c.l.bf16 %v3507
    %v3524 = vunpack.c.l.bf16 %v3508
    %v3525 = vunpack.c.l.bf16 %v3509
    %v3526 = vunpack.c.l.bf16 %v3510
    %v3527 = vunpack.c.l.bf16 %v3511
    %v3528 = vunpack.c.l.bf16 %v3512
    %v3529 = vunpack.c.l.bf16 %v3513
    %v3530 = vunpack.c.l.bf16 %v3514
    %v3531 = vunpack.c.l.bf16 %v3515
    %v3532 = vunpack.c.l.bf16 %v3516
    %v3533 = vunpack.c.l.bf16 %v3517
    %v3534 = vunpack.c.l.bf16 %v3518
    %v3535 = vunpack.c.l.bf16 %v3519
    %v3536 = vunpack.c.l.bf16 %v3520
    %v3537 = vunpack.c.l.bf16 %v3521
    %v3538 = vunpack.c.l.bf16 %v3522
    %3540 = vset.pattern.permute.xlu0 0
    %3541 = vperm.xlu0 %3540, %v3491
    %v3542 = vpop.permute.xlu0 %3541
    %3545 = vset.pattern.permute.xlu0 0
    %3546 = vperm.xlu0 %3545, %v3492
    %v3547 = vpop.permute.xlu0 %3546
    %3550 = vset.pattern.permute.xlu0 0
    %3551 = vperm.xlu0 %3550, %v3493
    %v3552 = vpop.permute.xlu0 %3551
    %3555 = vset.pattern.permute.xlu0 0
    %3556 = vperm.xlu0 %3555, %v3494
    %v3557 = vpop.permute.xlu0 %3556
    %3560 = vset.pattern.permute.xlu0 0
    %3561 = vperm.xlu0 %3560, %v3495
    %v3562 = vpop.permute.xlu0 %3561
    %3565 = vset.pattern.permute.xlu0 0
    %3566 = vperm.xlu0 %3565, %v3496
    %v3567 = vpop.permute.xlu0 %3566
    %3570 = vset.pattern.permute.xlu0 0
    %3571 = vperm.xlu0 %3570, %v3497
    %v3572 = vpop.permute.xlu0 %3571
    %3575 = vset.pattern.permute.xlu0 0
    %3576 = vperm.xlu0 %3575, %v3498
    %v3577 = vpop.permute.xlu0 %3576
    %3580 = vset.pattern.permute.xlu0 0
    %3581 = vperm.xlu0 %3580, %v3499
    %v3582 = vpop.permute.xlu0 %3581
    %3585 = vset.pattern.permute.xlu0 0
    %3586 = vperm.xlu0 %3585, %v3500
    %v3587 = vpop.permute.xlu0 %3586
    %3590 = vset.pattern.permute.xlu0 0
    %3591 = vperm.xlu0 %3590, %v3501
    %v3592 = vpop.permute.xlu0 %3591
    %3595 = vset.pattern.permute.xlu0 0
    %3596 = vperm.xlu0 %3595, %v3502
    %v3597 = vpop.permute.xlu0 %3596
    %3600 = vset.pattern.permute.xlu0 0
    %3601 = vperm.xlu0 %3600, %v3503
    %v3602 = vpop.permute.xlu0 %3601
    %3605 = vset.pattern.permute.xlu0 0
    %3606 = vperm.xlu0 %3605, %v3504
    %v3607 = vpop.permute.xlu0 %3606
    %3610 = vset.pattern.permute.xlu0 0
    %3611 = vperm.xlu0 %3610, %v3505
    %v3612 = vpop.permute.xlu0 %3611
    %3615 = vset.pattern.permute.xlu0 0
    %3616 = vperm.xlu0 %3615, %v3506
    %v3617 = vpop.permute.xlu0 %3616
    %v3619 = vmul.f32 %v3542, %v3523
    %v3620 = vmul.f32 %v3547, %v3524
    %v3621 = vmul.f32 %v3552, %v3525
    %v3622 = vmul.f32 %v3557, %v3526
    %v3623 = vmul.f32 %v3562, %v3527
    %v3624 = vmul.f32 %v3567, %v3528
    %v3625 = vmul.f32 %v3572, %v3529
    %v3626 = vmul.f32 %v3577, %v3530
    %v3627 = vmul.f32 %v3582, %v3531
    %v3628 = vmul.f32 %v3587, %v3532
    %v3629 = vmul.f32 %v3592, %v3533
    %v3630 = vmul.f32 %v3597, %v3534
    %v3631 = vmul.f32 %v3602, %v3535
    %v3632 = vmul.f32 %v3607, %v3536
    %v3633 = vmul.f32 %v3612, %v3537
    %v3634 = vmul.f32 %v3617, %v3538
    %v3635 = vadd.f32 %v3619, %v3620
    %v3636 = vrot.slane %v3635, 4
    %v3637 = vadd.f32 %v3635, %v3636
    %v3638 = vrot.slane %v3637, 2
    %v3639 = vadd.f32 %v3637, %v3638
    %v3640 = vrot.slane %v3639, 1
    %v3641 = vadd.f32 %v3639, %v3640
    %v3642 = vadd.f32 %v3621, %v3622
    %v3643 = vrot.slane %v3642, 4
    %v3644 = vadd.f32 %v3642, %v3643
    %v3645 = vrot.slane %v3644, 2
    %v3646 = vadd.f32 %v3644, %v3645
    %v3647 = vrot.slane %v3646, 1
    %v3648 = vadd.f32 %v3646, %v3647
    %v3649 = vadd.f32 %v3623, %v3624
    %v3650 = vrot.slane %v3649, 4
    %v3651 = vadd.f32 %v3649, %v3650
    %v3652 = vrot.slane %v3651, 2
    %v3653 = vadd.f32 %v3651, %v3652
    %v3654 = vrot.slane %v3653, 1
    %v3655 = vadd.f32 %v3653, %v3654
    %v3656 = vadd.f32 %v3625, %v3626
    %v3657 = vrot.slane %v3656, 4
    %v3658 = vadd.f32 %v3656, %v3657
    %v3659 = vrot.slane %v3658, 2
    %v3660 = vadd.f32 %v3658, %v3659
    %v3661 = vrot.slane %v3660, 1
    %v3662 = vadd.f32 %v3660, %v3661
    %v3663 = vadd.f32 %v3627, %v3628
    %v3664 = vrot.slane %v3663, 4
    %v3665 = vadd.f32 %v3663, %v3664
    %v3666 = vrot.slane %v3665, 2
    %v3667 = vadd.f32 %v3665, %v3666
    %v3668 = vrot.slane %v3667, 1
    %v3669 = vadd.f32 %v3667, %v3668
    %v3670 = vadd.f32 %v3629, %v3630
    %v3671 = vrot.slane %v3670, 4
    %v3672 = vadd.f32 %v3670, %v3671
    %v3673 = vrot.slane %v3672, 2
    %v3674 = vadd.f32 %v3672, %v3673
    %v3675 = vrot.slane %v3674, 1
    %v3676 = vadd.f32 %v3674, %v3675
    %v3677 = vadd.f32 %v3631, %v3632
    %v3678 = vrot.slane %v3677, 4
    %v3679 = vadd.f32 %v3677, %v3678
    %v3680 = vrot.slane %v3679, 2
    %v3681 = vadd.f32 %v3679, %v3680
    %v3682 = vrot.slane %v3681, 1
    %v3683 = vadd.f32 %v3681, %v3682
    %v3684 = vadd.f32 %v3633, %v3634
    %v3685 = vrot.slane %v3684, 4
    %v3686 = vadd.f32 %v3684, %v3685
    %v3687 = vrot.slane %v3686, 2
    %v3688 = vadd.f32 %v3686, %v3687
    %v3689 = vrot.slane %v3688, 1
    %v3690 = vadd.f32 %v3688, %v3689
    %v3699 = vsel %vm3194, %v3648, %v3641
    %v3700 = vsel %vm3196, %v3655, %v3699
    %v3701 = vsel %vm3198, %v3662, %v3700
    %v3702 = vsel %vm3200, %v3669, %v3701
    %v3703 = vsel %vm3202, %v3676, %v3702
    %v3704 = vsel %vm3204, %v3683, %v3703
    %v3705 = vsel %vm3206, %v3690, %v3704
    %3707 = vst [vmem:[%s9] sm:$0xff] %v3705
    // Predicated region
    $region54: #{_step.1} parent=1 // pred_check
      _
    $region55: #{_step.1} parent=1 // pred_check_branch
      %3709 = sbr.rel (0) target = $region57
    $region56: #{_step.1} parent=1 // pred_region
      _
    $region57: #{_step.1} parent=1 // pred_fallthru
      _
    // Predicated region
    $region58: #{_step.1} parent=1 // pred_check
      _
    $region59: #{_step.1} parent=1 // pred_check_branch
      %3711 = sbr.rel (0) target = $region61
    $region60: #{_step.1} parent=1 // pred_region
      _
    $region61: #{_step.1} parent=1 // pred_fallthru
      _
    %3712 = vsyncpa [#allocation4], 1
    %3713 = vsyncpa [#allocation6], 1
    %3714 = vsyncpa [#allocation9], 1

</llo_original>
